<compile_context>
chip_gen: v7x
topology: tpu7x:2x2x1
jax: 0.10.0
libtpu: 0.0.40
codegen_flags: <defaults>
</compile_context>

<pallas_src>
import functools
import math

import jax
import jax.numpy as jnp
from jax.experimental import pallas as pl
from jax.experimental.pallas import tpu as pltpu


# ----------------------------- Pallas kernel ----------------------------------

def _layernorm(x, g, b, eps=1e-5):
    # LayerNorm over last dim, biased variance (matches torch.nn.LayerNorm).
    mu = jnp.mean(x, axis=-1, keepdims=True)
    xc = x - mu
    var = jnp.mean(xc * xc, axis=-1, keepdims=True)
    return xc * jax.lax.rsqrt(var + eps) * g + b


def fused_transformer_kernel(src_ref, emb_ref,
                             wqkv_ref, wo_ref, w1_ref, w2_ref,
                             vec_ref, wd_ref, bd_ref,
                             o_ref, *, n_layers, n_heads, B, S):
    """Entire TransformerModel forward in one kernel invocation (no grid).

    src_ref : (B*S, 1) int32 token ids, row order b*S + s.
    wqkv_ref: (L, 3, H, H)  pre-transposed so y = x @ W + b.
    wo_ref  : (L, H, H),  w1_ref: (L, H, F),  w2_ref: (L, F, H)   (F == H here)
    vec_ref : (L, 10, H) rows = [bq, bk, bv, bo, b1, b2, g1, be1, g2, be2]
    wd_ref  : (H, V),  bd_ref: (1, V)
    """
    V, H = emb_ref.shape
    BS = B * S
    dh = H // n_heads
    scale = 1.0 / math.sqrt(dh)

    # ---- embedding gather: one-hot @ table (MXU; fine at toy V, see TODO above) ----
    ids = jax.lax.broadcasted_iota(jnp.int32, (BS, V), 1)
    onehot = (ids == src_ref[...]).astype(jnp.float32)                     # (BS, V)
    x = jnp.dot(onehot, emb_ref[...], preferred_element_type=jnp.float32)  # (BS, H)

    def to_head_major(t):
        # (BS, H) -> (B, S, H) [major split] -> nh lane slices -> concat on the major
        # axis -> (n_heads*B, S, dh), batch index = h*B + b.  No sublane<->major
        # transpose needed; only supported reshape/slice/major-concat ops.
        t3 = t.reshape(B, S, H)
        return jnp.concatenate(
            [t3[:, :, h * dh:(h + 1) * dh] for h in range(n_heads)], axis=0)

    # ---- n_layers post-norm TransformerEncoderLayer (eval mode), weights resident ----
    for l in range(n_layers):                                   # static unroll (L tiny)
        vecs = vec_ref[l]                                       # (10, H)
        bq, bk, bv = vecs[0:1, :], vecs[1:2, :], vecs[2:3, :]
        bo, b1, b2 = vecs[3:4, :], vecs[4:5, :], vecs[5:6, :]
        g1, be1 = vecs[6:7, :], vecs[7:8, :]
        g2, be2 = vecs[8:9, :], vecs[9:10, :]

        w_l = wqkv_ref[l]                                       # (3, H, H)
        q = jnp.dot(x, w_l[0], preferred_element_type=jnp.float32) + bq   # (BS, H)
        k = jnp.dot(x, w_l[1], preferred_element_type=jnp.float32) + bk
        v = jnp.dot(x, w_l[2], preferred_element_type=jnp.float32) + bv

        qh = to_head_major(q)                                   # (nh*B, S, dh)
        kh = to_head_major(k)
        vh = to_head_major(v)

        # one batched scores matmul / softmax / P@V per layer
        s = jnp.einsum('bqd,bkd->bqk', qh, kh,
                       preferred_element_type=jnp.float32) * scale        # (nh*B, S, S)
        s = s - jnp.max(s, axis=-1, keepdims=True)
        e = jnp.exp(s)
        p = e * pl.reciprocal(jnp.sum(e, axis=-1, keepdims=True), approx=True)
        ctx_hm = jnp.einsum('bqk,bkd->bqd', p, vh,
                            preferred_element_type=jnp.float32)           # (nh*B, S, dh)

        # back to (BS, H): per-head major slices (free) + one lane concat + major merge
        ctx = jnp.concatenate(
            [ctx_hm[h * B:(h + 1) * B] for h in range(n_heads)], axis=-1  # (B, S, H)
        ).reshape(BS, H)

        attn = jnp.dot(ctx, wo_ref[l], preferred_element_type=jnp.float32) + bo
        h1 = _layernorm(x + attn, g1, be1)

        ff = jnp.dot(h1, w1_ref[l], preferred_element_type=jnp.float32) + b1
        ff = jnp.maximum(ff, 0.0)                               # ReLU
        ff = jnp.dot(ff, w2_ref[l], preferred_element_type=jnp.float32) + b2
        x = _layernorm(h1 + ff, g2, be2)

    # ---- output[-1]: last sequence position of each batch element (single slice) ----
    x_last = x.reshape(B, S, H)[:, S - 1, :]                    # (B, H)

    # ---- decoder Linear + LogSoftmax ----
    logits = jnp.dot(x_last, wd_ref[...],
                     preferred_element_type=jnp.float32) + bd_ref[...]
    m = jnp.max(logits, axis=-1, keepdims=True)
    lse = m + jnp.log(jnp.sum(jnp.exp(logits - m), axis=-1, keepdims=True))
    o_ref[...] = logits - lse


# ------------------------------ wrapper ----------------------------------------

def transformer_forward(src, params, n_heads):
    """src: (S, B) int32 token ids -> (B, n_topics) float32 log-probs."""
    S, B = src.shape
    emb = params["embedding"]
    V, H = emb.shape
    L = params["wqkv"].shape[0]

    # row order b*S + s so per-batch rows are contiguous inside the kernel
    src_rows = jnp.transpose(src, (1, 0)).reshape(B * S, 1).astype(jnp.int32)

    args = [src_rows, emb,
            params["wqkv"], params["wo"], params["w1"], params["w2"],
            params["vecs"], params["wd"], params["bd"]]

    def vmem():
        return pl.BlockSpec(memory_space=pltpu.MemorySpace.VMEM)

    return pl.pallas_call(
        functools.partial(fused_transformer_kernel,
                          n_layers=L, n_heads=n_heads, B=B, S=S),
        out_shape=jax.ShapeDtypeStruct((B, V), jnp.float32),
        in_specs=[vmem() for _ in args],
        out_specs=vmem(),
    )(*args)


# ------------------------------ param init -------------------------------------

def init_params(key, n_topics, hidden_size, n_layers):
    H = hidden_size
    F = hidden_size  # dim_feedforward == hidden_size per the module
    assert F == H, "vec slab packing assumes dim_feedforward == hidden_size"

    def nrm(k, shape, scale=0.05):
        return (scale * jax.random.normal(k, shape)).astype(jnp.float32)

    keys = jax.random.split(key, 6)

    # vec slab rows: [bq, bk, bv, bo, b1, b2, g1, be1, g2, be2]
    vecs = jnp.zeros((n_layers, 10, H), jnp.float32)
    vecs = vecs.at[:, 6, :].set(1.0).at[:, 8, :].set(1.0)   # LayerNorm gains = 1

    params = {
        "embedding": nrm(keys[0], (n_topics, H), 1.0),
        # all weights pre-transposed (y = x @ W + b); layers stacked on axis 0
        "wqkv": nrm(keys[1], (n_layers, 3, H, H)),
        "wo":   nrm(keys[2], (n_layers, H, H)),
        "w1":   nrm(keys[3], (n_layers, H, F)),
        "w2":   nrm(keys[4], (n_layers, F, H)),
        "vecs": vecs,
        "wd":   nrm(keys[5], (H, n_topics)),
        "bd":   jnp.zeros((1, n_topics), jnp.float32),
    }
    return params


# --------------------------------- main -----------------------------------------

if __name__ == "__main__":
    n_topics, hidden_size, n_layers, n_heads = 16, 32, 2, 4
    S, B = 8, 2

    key = jax.random.PRNGKey(0)
    k_param, k_src = jax.random.split(key)
    params = init_params(k_param, n_topics, hidden_size, n_layers)

    src = jax.random.randint(k_src, (S, B), 0, n_topics, dtype=jnp.int32)

    out = transformer_forward(src, params, n_heads)     # (B, n_topics) log-probs
    out = jax.block_until_ready(out)

    assert out.shape == (B, n_topics)
    # sanity: rows of log-softmax must exponentiate-sum to ~1
    assert bool(jnp.all(jnp.abs(jnp.sum(jnp.exp(out), axis=-1) - 1.0) < 1e-4))
    print("KERNEL_OK")
</pallas_src>

<mosaic_0001>
module attributes {stable_mosaic.version = 11 : i64} {
  func.func @fused_transformer_kernel(%arg0: memref<16x1xi32, #tpu.memory_space<vmem>>, %arg1: memref<16x32xf32, #tpu.memory_space<vmem>>, %arg2: memref<2x3x32x32xf32, #tpu.memory_space<vmem>>, %arg3: memref<2x32x32xf32, #tpu.memory_space<vmem>>, %arg4: memref<2x32x32xf32, #tpu.memory_space<vmem>>, %arg5: memref<2x32x32xf32, #tpu.memory_space<vmem>>, %arg6: memref<2x10x32xf32, #tpu.memory_space<vmem>>, %arg7: memref<32x16xf32, #tpu.memory_space<vmem>>, %arg8: memref<1x16xf32, #tpu.memory_space<vmem>>, %arg9: memref<2x16xf32, #tpu.memory_space<vmem>>) attributes {dimension_semantics = [], scalar_prefetch = 0 : i64, scratch_operands = 0 : i64, tpu.core_type = #tpu.core_type<tc>} {
    %0 = tpu.iota {dimensions = array<i32: 1>} : vector<16x16xi32>
    %c0 = arith.constant 0 : index
    %c0_0 = arith.constant 0 : index
    %1 = vector.load %arg0[%c0, %c0_0] : memref<16x1xi32, #tpu.memory_space<vmem>>, vector<16x1xi32>
    %2 = vector.broadcast %1 : vector<16x1xi32> to vector<16x16xi32>
    %3 = arith.cmpi eq, %0, %2 : vector<16x16xi32>
    %4 = arith.extui %3 : vector<16x16xi1> to vector<16x16xi32>
    %5 = arith.sitofp %4 : vector<16x16xi32> to vector<16x16xf32>
    %c0_1 = arith.constant 0 : index
    %c0_2 = arith.constant 0 : index
    %6 = vector.load %arg1[%c0_1, %c0_2] : memref<16x32xf32, #tpu.memory_space<vmem>>, vector<16x32xf32>
    %cst = arith.constant dense<0.000000e+00> : vector<16x32xf32>
    %7 = tpu.matmul %5, %6, %cst {dimension_numbers = #tpu.dot_dimension_numbers<[1], [0], [0], [1], [0, 0, 1, 1], [], []>} : vector<16x16xf32>, vector<16x32xf32>, vector<16x32xf32> -> vector<16x32xf32>
    %c0_3 = arith.constant 0 : index
    %c0_4 = arith.constant 0 : index
    %c0_5 = arith.constant 0 : index
    %8 = vector.load %arg6[%c0_3, %c0_4, %c0_5] : memref<2x10x32xf32, #tpu.memory_space<vmem>>, vector<1x10x32xf32>
    %9 = vector.shape_cast %8 : vector<1x10x32xf32> to vector<10x32xf32>
    %10 = vector.extract_strided_slice %9 {offsets = [0, 0], sizes = [1, 32], strides = [1, 1]} : vector<10x32xf32> to vector<1x32xf32>
    %11 = vector.extract_strided_slice %9 {offsets = [1, 0], sizes = [1, 32], strides = [1, 1]} : vector<10x32xf32> to vector<1x32xf32>
    %12 = vector.extract_strided_slice %9 {offsets = [2, 0], sizes = [1, 32], strides = [1, 1]} : vector<10x32xf32> to vector<1x32xf32>
    %13 = vector.extract_strided_slice %9 {offsets = [3, 0], sizes = [1, 32], strides = [1, 1]} : vector<10x32xf32> to vector<1x32xf32>
    %14 = vector.extract_strided_slice %9 {offsets = [4, 0], sizes = [1, 32], strides = [1, 1]} : vector<10x32xf32> to vector<1x32xf32>
    %15 = vector.extract_strided_slice %9 {offsets = [5, 0], sizes = [1, 32], strides = [1, 1]} : vector<10x32xf32> to vector<1x32xf32>
    %16 = vector.extract_strided_slice %9 {offsets = [6, 0], sizes = [1, 32], strides = [1, 1]} : vector<10x32xf32> to vector<1x32xf32>
    %17 = vector.extract_strided_slice %9 {offsets = [7, 0], sizes = [1, 32], strides = [1, 1]} : vector<10x32xf32> to vector<1x32xf32>
    %18 = vector.extract_strided_slice %9 {offsets = [8, 0], sizes = [1, 32], strides = [1, 1]} : vector<10x32xf32> to vector<1x32xf32>
    %19 = vector.extract_strided_slice %9 {offsets = [9, 0], sizes = [1, 32], strides = [1, 1]} : vector<10x32xf32> to vector<1x32xf32>
    %c0_6 = arith.constant 0 : index
    %c0_7 = arith.constant 0 : index
    %c0_8 = arith.constant 0 : index
    %c0_9 = arith.constant 0 : index
    %20 = vector.load %arg2[%c0_6, %c0_7, %c0_8, %c0_9] : memref<2x3x32x32xf32, #tpu.memory_space<vmem>>, vector<1x3x32x32xf32>
    %21 = vector.shape_cast %20 : vector<1x3x32x32xf32> to vector<3x32x32xf32>
    %22 = vector.extract_strided_slice %21 {offsets = [0, 0, 0], sizes = [1, 32, 32], strides = [1, 1, 1]} : vector<3x32x32xf32> to vector<1x32x32xf32>
    %23 = vector.shape_cast %22 : vector<1x32x32xf32> to vector<32x32xf32>
    %cst_10 = arith.constant dense<0.000000e+00> : vector<16x32xf32>
    %24 = tpu.matmul %7, %23, %cst_10 {dimension_numbers = #tpu.dot_dimension_numbers<[1], [0], [0], [1], [0, 0, 1, 1], [], []>} : vector<16x32xf32>, vector<32x32xf32>, vector<16x32xf32> -> vector<16x32xf32>
    %25 = vector.broadcast %10 : vector<1x32xf32> to vector<16x32xf32>
    %26 = arith.addf %24, %25 : vector<16x32xf32>
    %27 = vector.extract_strided_slice %21 {offsets = [1, 0, 0], sizes = [1, 32, 32], strides = [1, 1, 1]} : vector<3x32x32xf32> to vector<1x32x32xf32>
    %28 = vector.shape_cast %27 : vector<1x32x32xf32> to vector<32x32xf32>
    %cst_11 = arith.constant dense<0.000000e+00> : vector<16x32xf32>
    %29 = tpu.matmul %7, %28, %cst_11 {dimension_numbers = #tpu.dot_dimension_numbers<[1], [0], [0], [1], [0, 0, 1, 1], [], []>} : vector<16x32xf32>, vector<32x32xf32>, vector<16x32xf32> -> vector<16x32xf32>
    %30 = vector.broadcast %11 : vector<1x32xf32> to vector<16x32xf32>
    %31 = arith.addf %29, %30 : vector<16x32xf32>
    %32 = vector.extract_strided_slice %21 {offsets = [2, 0, 0], sizes = [1, 32, 32], strides = [1, 1, 1]} : vector<3x32x32xf32> to vector<1x32x32xf32>
    %33 = vector.shape_cast %32 : vector<1x32x32xf32> to vector<32x32xf32>
    %cst_12 = arith.constant dense<0.000000e+00> : vector<16x32xf32>
    %34 = tpu.matmul %7, %33, %cst_12 {dimension_numbers = #tpu.dot_dimension_numbers<[1], [0], [0], [1], [0, 0, 1, 1], [], []>} : vector<16x32xf32>, vector<32x32xf32>, vector<16x32xf32> -> vector<16x32xf32>
    %35 = vector.broadcast %12 : vector<1x32xf32> to vector<16x32xf32>
    %36 = arith.addf %34, %35 : vector<16x32xf32>
    %37 = vector.shape_cast %26 : vector<16x32xf32> to vector<2x8x32xf32>
    %38 = vector.extract_strided_slice %37 {offsets = [0, 0, 0], sizes = [2, 8, 8], strides = [1, 1, 1]} : vector<2x8x32xf32> to vector<2x8x8xf32>
    %39 = vector.extract_strided_slice %37 {offsets = [0, 0, 8], sizes = [2, 8, 8], strides = [1, 1, 1]} : vector<2x8x32xf32> to vector<2x8x8xf32>
    %40 = vector.extract_strided_slice %37 {offsets = [0, 0, 16], sizes = [2, 8, 8], strides = [1, 1, 1]} : vector<2x8x32xf32> to vector<2x8x8xf32>
    %41 = vector.extract_strided_slice %37 {offsets = [0, 0, 24], sizes = [2, 8, 8], strides = [1, 1, 1]} : vector<2x8x32xf32> to vector<2x8x8xf32>
    %42 = tpu.concatenate %38, %39, %40, %41 in 0 : vector<2x8x8xf32>, vector<2x8x8xf32>, vector<2x8x8xf32>, vector<2x8x8xf32> -> vector<8x8x8xf32>
    %43 = vector.shape_cast %31 : vector<16x32xf32> to vector<2x8x32xf32>
    %44 = vector.extract_strided_slice %43 {offsets = [0, 0, 0], sizes = [2, 8, 8], strides = [1, 1, 1]} : vector<2x8x32xf32> to vector<2x8x8xf32>
    %45 = vector.extract_strided_slice %43 {offsets = [0, 0, 8], sizes = [2, 8, 8], strides = [1, 1, 1]} : vector<2x8x32xf32> to vector<2x8x8xf32>
    %46 = vector.extract_strided_slice %43 {offsets = [0, 0, 16], sizes = [2, 8, 8], strides = [1, 1, 1]} : vector<2x8x32xf32> to vector<2x8x8xf32>
    %47 = vector.extract_strided_slice %43 {offsets = [0, 0, 24], sizes = [2, 8, 8], strides = [1, 1, 1]} : vector<2x8x32xf32> to vector<2x8x8xf32>
    %48 = tpu.concatenate %44, %45, %46, %47 in 0 : vector<2x8x8xf32>, vector<2x8x8xf32>, vector<2x8x8xf32>, vector<2x8x8xf32> -> vector<8x8x8xf32>
    %49 = vector.shape_cast %36 : vector<16x32xf32> to vector<2x8x32xf32>
    %50 = vector.extract_strided_slice %49 {offsets = [0, 0, 0], sizes = [2, 8, 8], strides = [1, 1, 1]} : vector<2x8x32xf32> to vector<2x8x8xf32>
    %51 = vector.extract_strided_slice %49 {offsets = [0, 0, 8], sizes = [2, 8, 8], strides = [1, 1, 1]} : vector<2x8x32xf32> to vector<2x8x8xf32>
    %52 = vector.extract_strided_slice %49 {offsets = [0, 0, 16], sizes = [2, 8, 8], strides = [1, 1, 1]} : vector<2x8x32xf32> to vector<2x8x8xf32>
    %53 = vector.extract_strided_slice %49 {offsets = [0, 0, 24], sizes = [2, 8, 8], strides = [1, 1, 1]} : vector<2x8x32xf32> to vector<2x8x8xf32>
    %54 = tpu.concatenate %50, %51, %52, %53 in 0 : vector<2x8x8xf32>, vector<2x8x8xf32>, vector<2x8x8xf32>, vector<2x8x8xf32> -> vector<8x8x8xf32>
    "tpu.trace_start"() <{level = 10 : i32, message = "bqd,bkd->bqk"}> : () -> ()
    %cst_13 = arith.constant dense<0.000000e+00> : vector<8x8x8xf32>
    %55 = tpu.matmul %42, %48, %cst_13 {dimension_numbers = #tpu.dot_dimension_numbers<[2], [2], [1], [1], [0, 0, 0, 1, 1, 1], [0], [0]>} : vector<8x8x8xf32>, vector<8x8x8xf32>, vector<8x8x8xf32> -> vector<8x8x8xf32>
    "tpu.trace_stop"() : () -> ()
    %cst_14 = arith.constant 0.353553385 : f32
    %56 = vector.broadcast %cst_14 : f32 to vector<8x8x8xf32>
    %57 = arith.mulf %55, %56 : vector<8x8x8xf32>
    %cst_15 = arith.constant dense<0xFF800000> : vector<8x8xf32>
    %58 = vector.multi_reduction <maximumf>, %57, %cst_15 [2] : vector<8x8x8xf32> to vector<8x8xf32>
    %59 = vector.shape_cast %58 : vector<8x8xf32> to vector<8x8x1xf32>
    %60 = vector.broadcast %59 : vector<8x8x1xf32> to vector<8x8x8xf32>
    %61 = arith.subf %57, %60 : vector<8x8x8xf32>
    %62 = math.exp %61 : vector<8x8x8xf32>
    %cst_16 = arith.constant dense<0.000000e+00> : vector<8x8xf32>
    %63 = vector.multi_reduction <add>, %62, %cst_16 [2] : vector<8x8x8xf32> to vector<8x8xf32>
    %64 = vector.shape_cast %63 : vector<8x8xf32> to vector<8x8x1xf32>
    %65 = tpu.reciprocal %64 {approx = true} : vector<8x8x1xf32> -> vector<8x8x1xf32>
    %66 = vector.broadcast %65 : vector<8x8x1xf32> to vector<8x8x8xf32>
    %67 = arith.mulf %62, %66 : vector<8x8x8xf32>
    "tpu.trace_start"() <{level = 10 : i32, message = "bqk,bkd->bqd"}> : () -> ()
    %cst_17 = arith.constant dense<0.000000e+00> : vector<8x8x8xf32>
    %68 = tpu.matmul %67, %54, %cst_17 {dimension_numbers = #tpu.dot_dimension_numbers<[2], [1], [1], [2], [0, 0, 0, 1, 1, 2], [0], [0]>} : vector<8x8x8xf32>, vector<8x8x8xf32>, vector<8x8x8xf32> -> vector<8x8x8xf32>
    "tpu.trace_stop"() : () -> ()
    %69 = vector.extract_strided_slice %68 {offsets = [0, 0, 0], sizes = [2, 8, 8], strides = [1, 1, 1]} : vector<8x8x8xf32> to vector<2x8x8xf32>
    %70 = vector.extract_strided_slice %68 {offsets = [2, 0, 0], sizes = [2, 8, 8], strides = [1, 1, 1]} : vector<8x8x8xf32> to vector<2x8x8xf32>
    %71 = vector.extract_strided_slice %68 {offsets = [4, 0, 0], sizes = [2, 8, 8], strides = [1, 1, 1]} : vector<8x8x8xf32> to vector<2x8x8xf32>
    %72 = vector.extract_strided_slice %68 {offsets = [6, 0, 0], sizes = [2, 8, 8], strides = [1, 1, 1]} : vector<8x8x8xf32> to vector<2x8x8xf32>
    %73 = tpu.concatenate %69, %70, %71, %72 in 2 : vector<2x8x8xf32>, vector<2x8x8xf32>, vector<2x8x8xf32>, vector<2x8x8xf32> -> vector<2x8x32xf32>
    %74 = vector.shape_cast %73 : vector<2x8x32xf32> to vector<16x32xf32>
    %c0_18 = arith.constant 0 : index
    %c0_19 = arith.constant 0 : index
    %c0_20 = arith.constant 0 : index
    %75 = vector.load %arg3[%c0_18, %c0_19, %c0_20] : memref<2x32x32xf32, #tpu.memory_space<vmem>>, vector<1x32x32xf32>
    %76 = vector.shape_cast %75 : vector<1x32x32xf32> to vector<32x32xf32>
    %cst_21 = arith.constant dense<0.000000e+00> : vector<16x32xf32>
    %77 = tpu.matmul %74, %76, %cst_21 {dimension_numbers = #tpu.dot_dimension_numbers<[1], [0], [0], [1], [0, 0, 1, 1], [], []>} : vector<16x32xf32>, vector<32x32xf32>, vector<16x32xf32> -> vector<16x32xf32>
    %78 = vector.broadcast %13 : vector<1x32xf32> to vector<16x32xf32>
    %79 = arith.addf %77, %78 : vector<16x32xf32>
    %80 = arith.addf %7, %79 : vector<16x32xf32>
    %cst_22 = arith.constant dense<0.000000e+00> : vector<16xf32>
    %81 = vector.multi_reduction <add>, %80, %cst_22 [1] : vector<16x32xf32> to vector<16xf32>
    %82 = vector.shape_cast %81 : vector<16xf32> to vector<16x1xf32>
    %cst_23 = arith.constant 3.200000e+01 : f32
    %83 = vector.broadcast %cst_23 : f32 to vector<16x1xf32>
    %84 = arith.divf %82, %83 : vector<16x1xf32>
    %85 = vector.broadcast %84 : vector<16x1xf32> to vector<16x32xf32>
    %86 = arith.subf %80, %85 : vector<16x32xf32>
    %87 = arith.mulf %86, %86 : vector<16x32xf32>
    %cst_24 = arith.constant dense<0.000000e+00> : vector<16xf32>
    %88 = vector.multi_reduction <add>, %87, %cst_24 [1] : vector<16x32xf32> to vector<16xf32>
    %89 = vector.shape_cast %88 : vector<16xf32> to vector<16x1xf32>
    %cst_25 = arith.constant 3.200000e+01 : f32
    %90 = vector.broadcast %cst_25 : f32 to vector<16x1xf32>
    %91 = arith.divf %89, %90 : vector<16x1xf32>
    %cst_26 = arith.constant 9.99999974E-6 : f32
    %92 = vector.broadcast %cst_26 : f32 to vector<16x1xf32>
    %93 = arith.addf %91, %92 : vector<16x1xf32>
    %94 = math.rsqrt %93 : vector<16x1xf32>
    %95 = vector.broadcast %94 : vector<16x1xf32> to vector<16x32xf32>
    %96 = arith.mulf %86, %95 : vector<16x32xf32>
    %97 = vector.broadcast %16 : vector<1x32xf32> to vector<16x32xf32>
    %98 = arith.mulf %96, %97 : vector<16x32xf32>
    %99 = vector.broadcast %17 : vector<1x32xf32> to vector<16x32xf32>
    %100 = arith.addf %98, %99 : vector<16x32xf32>
    %c0_27 = arith.constant 0 : index
    %c0_28 = arith.constant 0 : index
    %c0_29 = arith.constant 0 : index
    %101 = vector.load %arg4[%c0_27, %c0_28, %c0_29] : memref<2x32x32xf32, #tpu.memory_space<vmem>>, vector<1x32x32xf32>
    %102 = vector.shape_cast %101 : vector<1x32x32xf32> to vector<32x32xf32>
    %cst_30 = arith.constant dense<0.000000e+00> : vector<16x32xf32>
    %103 = tpu.matmul %100, %102, %cst_30 {dimension_numbers = #tpu.dot_dimension_numbers<[1], [0], [0], [1], [0, 0, 1, 1], [], []>} : vector<16x32xf32>, vector<32x32xf32>, vector<16x32xf32> -> vector<16x32xf32>
    %104 = vector.broadcast %14 : vector<1x32xf32> to vector<16x32xf32>
    %105 = arith.addf %103, %104 : vector<16x32xf32>
    %cst_31 = arith.constant 0.000000e+00 : f32
    %106 = vector.broadcast %cst_31 : f32 to vector<16x32xf32>
    %107 = arith.maximumf %105, %106 : vector<16x32xf32>
    %c0_32 = arith.constant 0 : index
    %c0_33 = arith.constant 0 : index
    %c0_34 = arith.constant 0 : index
    %108 = vector.load %arg5[%c0_32, %c0_33, %c0_34] : memref<2x32x32xf32, #tpu.memory_space<vmem>>, vector<1x32x32xf32>
    %109 = vector.shape_cast %108 : vector<1x32x32xf32> to vector<32x32xf32>
    %cst_35 = arith.constant dense<0.000000e+00> : vector<16x32xf32>
    %110 = tpu.matmul %107, %109, %cst_35 {dimension_numbers = #tpu.dot_dimension_numbers<[1], [0], [0], [1], [0, 0, 1, 1], [], []>} : vector<16x32xf32>, vector<32x32xf32>, vector<16x32xf32> -> vector<16x32xf32>
    %111 = vector.broadcast %15 : vector<1x32xf32> to vector<16x32xf32>
    %112 = arith.addf %110, %111 : vector<16x32xf32>
    %113 = arith.addf %100, %112 : vector<16x32xf32>
    %cst_36 = arith.constant dense<0.000000e+00> : vector<16xf32>
    %114 = vector.multi_reduction <add>, %113, %cst_36 [1] : vector<16x32xf32> to vector<16xf32>
    %115 = vector.shape_cast %114 : vector<16xf32> to vector<16x1xf32>
    %cst_37 = arith.constant 3.200000e+01 : f32
    %116 = vector.broadcast %cst_37 : f32 to vector<16x1xf32>
    %117 = arith.divf %115, %116 : vector<16x1xf32>
    %118 = vector.broadcast %117 : vector<16x1xf32> to vector<16x32xf32>
    %119 = arith.subf %113, %118 : vector<16x32xf32>
    %120 = arith.mulf %119, %119 : vector<16x32xf32>
    %cst_38 = arith.constant dense<0.000000e+00> : vector<16xf32>
    %121 = vector.multi_reduction <add>, %120, %cst_38 [1] : vector<16x32xf32> to vector<16xf32>
    %122 = vector.shape_cast %121 : vector<16xf32> to vector<16x1xf32>
    %cst_39 = arith.constant 3.200000e+01 : f32
    %123 = vector.broadcast %cst_39 : f32 to vector<16x1xf32>
    %124 = arith.divf %122, %123 : vector<16x1xf32>
    %cst_40 = arith.constant 9.99999974E-6 : f32
    %125 = vector.broadcast %cst_40 : f32 to vector<16x1xf32>
    %126 = arith.addf %124, %125 : vector<16x1xf32>
    %127 = math.rsqrt %126 : vector<16x1xf32>
    %128 = vector.broadcast %127 : vector<16x1xf32> to vector<16x32xf32>
    %129 = arith.mulf %119, %128 : vector<16x32xf32>
    %130 = vector.broadcast %18 : vector<1x32xf32> to vector<16x32xf32>
    %131 = arith.mulf %129, %130 : vector<16x32xf32>
    %132 = vector.broadcast %19 : vector<1x32xf32> to vector<16x32xf32>
    %133 = arith.addf %131, %132 : vector<16x32xf32>
    %c1 = arith.constant 1 : index
    %c0_41 = arith.constant 0 : index
    %c0_42 = arith.constant 0 : index
    %134 = vector.load %arg6[%c1, %c0_41, %c0_42] : memref<2x10x32xf32, #tpu.memory_space<vmem>>, vector<1x10x32xf32>
    %135 = vector.shape_cast %134 : vector<1x10x32xf32> to vector<10x32xf32>
    %136 = vector.extract_strided_slice %135 {offsets = [0, 0], sizes = [1, 32], strides = [1, 1]} : vector<10x32xf32> to vector<1x32xf32>
    %137 = vector.extract_strided_slice %135 {offsets = [1, 0], sizes = [1, 32], strides = [1, 1]} : vector<10x32xf32> to vector<1x32xf32>
    %138 = vector.extract_strided_slice %135 {offsets = [2, 0], sizes = [1, 32], strides = [1, 1]} : vector<10x32xf32> to vector<1x32xf32>
    %139 = vector.extract_strided_slice %135 {offsets = [3, 0], sizes = [1, 32], strides = [1, 1]} : vector<10x32xf32> to vector<1x32xf32>
    %140 = vector.extract_strided_slice %135 {offsets = [4, 0], sizes = [1, 32], strides = [1, 1]} : vector<10x32xf32> to vector<1x32xf32>
    %141 = vector.extract_strided_slice %135 {offsets = [5, 0], sizes = [1, 32], strides = [1, 1]} : vector<10x32xf32> to vector<1x32xf32>
    %142 = vector.extract_strided_slice %135 {offsets = [6, 0], sizes = [1, 32], strides = [1, 1]} : vector<10x32xf32> to vector<1x32xf32>
    %143 = vector.extract_strided_slice %135 {offsets = [7, 0], sizes = [1, 32], strides = [1, 1]} : vector<10x32xf32> to vector<1x32xf32>
    %144 = vector.extract_strided_slice %135 {offsets = [8, 0], sizes = [1, 32], strides = [1, 1]} : vector<10x32xf32> to vector<1x32xf32>
    %145 = vector.extract_strided_slice %135 {offsets = [9, 0], sizes = [1, 32], strides = [1, 1]} : vector<10x32xf32> to vector<1x32xf32>
    %c1_43 = arith.constant 1 : index
    %c0_44 = arith.constant 0 : index
    %c0_45 = arith.constant 0 : index
    %c0_46 = arith.constant 0 : index
    %146 = vector.load %arg2[%c1_43, %c0_44, %c0_45, %c0_46] : memref<2x3x32x32xf32, #tpu.memory_space<vmem>>, vector<1x3x32x32xf32>
    %147 = vector.shape_cast %146 : vector<1x3x32x32xf32> to vector<3x32x32xf32>
    %148 = vector.extract_strided_slice %147 {offsets = [0, 0, 0], sizes = [1, 32, 32], strides = [1, 1, 1]} : vector<3x32x32xf32> to vector<1x32x32xf32>
    %149 = vector.shape_cast %148 : vector<1x32x32xf32> to vector<32x32xf32>
    %cst_47 = arith.constant dense<0.000000e+00> : vector<16x32xf32>
    %150 = tpu.matmul %133, %149, %cst_47 {dimension_numbers = #tpu.dot_dimension_numbers<[1], [0], [0], [1], [0, 0, 1, 1], [], []>} : vector<16x32xf32>, vector<32x32xf32>, vector<16x32xf32> -> vector<16x32xf32>
    %151 = vector.broadcast %136 : vector<1x32xf32> to vector<16x32xf32>
    %152 = arith.addf %150, %151 : vector<16x32xf32>
    %153 = vector.extract_strided_slice %147 {offsets = [1, 0, 0], sizes = [1, 32, 32], strides = [1, 1, 1]} : vector<3x32x32xf32> to vector<1x32x32xf32>
    %154 = vector.shape_cast %153 : vector<1x32x32xf32> to vector<32x32xf32>
    %cst_48 = arith.constant dense<0.000000e+00> : vector<16x32xf32>
    %155 = tpu.matmul %133, %154, %cst_48 {dimension_numbers = #tpu.dot_dimension_numbers<[1], [0], [0], [1], [0, 0, 1, 1], [], []>} : vector<16x32xf32>, vector<32x32xf32>, vector<16x32xf32> -> vector<16x32xf32>
    %156 = vector.broadcast %137 : vector<1x32xf32> to vector<16x32xf32>
    %157 = arith.addf %155, %156 : vector<16x32xf32>
    %158 = vector.extract_strided_slice %147 {offsets = [2, 0, 0], sizes = [1, 32, 32], strides = [1, 1, 1]} : vector<3x32x32xf32> to vector<1x32x32xf32>
    %159 = vector.shape_cast %158 : vector<1x32x32xf32> to vector<32x32xf32>
    %cst_49 = arith.constant dense<0.000000e+00> : vector<16x32xf32>
    %160 = tpu.matmul %133, %159, %cst_49 {dimension_numbers = #tpu.dot_dimension_numbers<[1], [0], [0], [1], [0, 0, 1, 1], [], []>} : vector<16x32xf32>, vector<32x32xf32>, vector<16x32xf32> -> vector<16x32xf32>
    %161 = vector.broadcast %138 : vector<1x32xf32> to vector<16x32xf32>
    %162 = arith.addf %160, %161 : vector<16x32xf32>
    %163 = vector.shape_cast %152 : vector<16x32xf32> to vector<2x8x32xf32>
    %164 = vector.extract_strided_slice %163 {offsets = [0, 0, 0], sizes = [2, 8, 8], strides = [1, 1, 1]} : vector<2x8x32xf32> to vector<2x8x8xf32>
    %165 = vector.extract_strided_slice %163 {offsets = [0, 0, 8], sizes = [2, 8, 8], strides = [1, 1, 1]} : vector<2x8x32xf32> to vector<2x8x8xf32>
    %166 = vector.extract_strided_slice %163 {offsets = [0, 0, 16], sizes = [2, 8, 8], strides = [1, 1, 1]} : vector<2x8x32xf32> to vector<2x8x8xf32>
    %167 = vector.extract_strided_slice %163 {offsets = [0, 0, 24], sizes = [2, 8, 8], strides = [1, 1, 1]} : vector<2x8x32xf32> to vector<2x8x8xf32>
    %168 = tpu.concatenate %164, %165, %166, %167 in 0 : vector<2x8x8xf32>, vector<2x8x8xf32>, vector<2x8x8xf32>, vector<2x8x8xf32> -> vector<8x8x8xf32>
    %169 = vector.shape_cast %157 : vector<16x32xf32> to vector<2x8x32xf32>
    %170 = vector.extract_strided_slice %169 {offsets = [0, 0, 0], sizes = [2, 8, 8], strides = [1, 1, 1]} : vector<2x8x32xf32> to vector<2x8x8xf32>
    %171 = vector.extract_strided_slice %169 {offsets = [0, 0, 8], sizes = [2, 8, 8], strides = [1, 1, 1]} : vector<2x8x32xf32> to vector<2x8x8xf32>
    %172 = vector.extract_strided_slice %169 {offsets = [0, 0, 16], sizes = [2, 8, 8], strides = [1, 1, 1]} : vector<2x8x32xf32> to vector<2x8x8xf32>
    %173 = vector.extract_strided_slice %169 {offsets = [0, 0, 24], sizes = [2, 8, 8], strides = [1, 1, 1]} : vector<2x8x32xf32> to vector<2x8x8xf32>
    %174 = tpu.concatenate %170, %171, %172, %173 in 0 : vector<2x8x8xf32>, vector<2x8x8xf32>, vector<2x8x8xf32>, vector<2x8x8xf32> -> vector<8x8x8xf32>
    %175 = vector.shape_cast %162 : vector<16x32xf32> to vector<2x8x32xf32>
    %176 = vector.extract_strided_slice %175 {offsets = [0, 0, 0], sizes = [2, 8, 8], strides = [1, 1, 1]} : vector<2x8x32xf32> to vector<2x8x8xf32>
    %177 = vector.extract_strided_slice %175 {offsets = [0, 0, 8], sizes = [2, 8, 8], strides = [1, 1, 1]} : vector<2x8x32xf32> to vector<2x8x8xf32>
    %178 = vector.extract_strided_slice %175 {offsets = [0, 0, 16], sizes = [2, 8, 8], strides = [1, 1, 1]} : vector<2x8x32xf32> to vector<2x8x8xf32>
    %179 = vector.extract_strided_slice %175 {offsets = [0, 0, 24], sizes = [2, 8, 8], strides = [1, 1, 1]} : vector<2x8x32xf32> to vector<2x8x8xf32>
    %180 = tpu.concatenate %176, %177, %178, %179 in 0 : vector<2x8x8xf32>, vector<2x8x8xf32>, vector<2x8x8xf32>, vector<2x8x8xf32> -> vector<8x8x8xf32>
    "tpu.trace_start"() <{level = 10 : i32, message = "bqd,bkd->bqk"}> : () -> ()
    %cst_50 = arith.constant dense<0.000000e+00> : vector<8x8x8xf32>
    %181 = tpu.matmul %168, %174, %cst_50 {dimension_numbers = #tpu.dot_dimension_numbers<[2], [2], [1], [1], [0, 0, 0, 1, 1, 1], [0], [0]>} : vector<8x8x8xf32>, vector<8x8x8xf32>, vector<8x8x8xf32> -> vector<8x8x8xf32>
    "tpu.trace_stop"() : () -> ()
    %cst_51 = arith.constant 0.353553385 : f32
    %182 = vector.broadcast %cst_51 : f32 to vector<8x8x8xf32>
    %183 = arith.mulf %181, %182 : vector<8x8x8xf32>
    %cst_52 = arith.constant dense<0xFF800000> : vector<8x8xf32>
    %184 = vector.multi_reduction <maximumf>, %183, %cst_52 [2] : vector<8x8x8xf32> to vector<8x8xf32>
    %185 = vector.shape_cast %184 : vector<8x8xf32> to vector<8x8x1xf32>
    %186 = vector.broadcast %185 : vector<8x8x1xf32> to vector<8x8x8xf32>
    %187 = arith.subf %183, %186 : vector<8x8x8xf32>
    %188 = math.exp %187 : vector<8x8x8xf32>
    %cst_53 = arith.constant dense<0.000000e+00> : vector<8x8xf32>
    %189 = vector.multi_reduction <add>, %188, %cst_53 [2] : vector<8x8x8xf32> to vector<8x8xf32>
    %190 = vector.shape_cast %189 : vector<8x8xf32> to vector<8x8x1xf32>
    %191 = tpu.reciprocal %190 {approx = true} : vector<8x8x1xf32> -> vector<8x8x1xf32>
    %192 = vector.broadcast %191 : vector<8x8x1xf32> to vector<8x8x8xf32>
    %193 = arith.mulf %188, %192 : vector<8x8x8xf32>
    "tpu.trace_start"() <{level = 10 : i32, message = "bqk,bkd->bqd"}> : () -> ()
    %cst_54 = arith.constant dense<0.000000e+00> : vector<8x8x8xf32>
    %194 = tpu.matmul %193, %180, %cst_54 {dimension_numbers = #tpu.dot_dimension_numbers<[2], [1], [1], [2], [0, 0, 0, 1, 1, 2], [0], [0]>} : vector<8x8x8xf32>, vector<8x8x8xf32>, vector<8x8x8xf32> -> vector<8x8x8xf32>
    "tpu.trace_stop"() : () -> ()
    %195 = vector.extract_strided_slice %194 {offsets = [0, 0, 0], sizes = [2, 8, 8], strides = [1, 1, 1]} : vector<8x8x8xf32> to vector<2x8x8xf32>
    %196 = vector.extract_strided_slice %194 {offsets = [2, 0, 0], sizes = [2, 8, 8], strides = [1, 1, 1]} : vector<8x8x8xf32> to vector<2x8x8xf32>
    %197 = vector.extract_strided_slice %194 {offsets = [4, 0, 0], sizes = [2, 8, 8], strides = [1, 1, 1]} : vector<8x8x8xf32> to vector<2x8x8xf32>
    %198 = vector.extract_strided_slice %194 {offsets = [6, 0, 0], sizes = [2, 8, 8], strides = [1, 1, 1]} : vector<8x8x8xf32> to vector<2x8x8xf32>
    %199 = tpu.concatenate %195, %196, %197, %198 in 2 : vector<2x8x8xf32>, vector<2x8x8xf32>, vector<2x8x8xf32>, vector<2x8x8xf32> -> vector<2x8x32xf32>
    %200 = vector.shape_cast %199 : vector<2x8x32xf32> to vector<16x32xf32>
    %c1_55 = arith.constant 1 : index
    %c0_56 = arith.constant 0 : index
    %c0_57 = arith.constant 0 : index
    %201 = vector.load %arg3[%c1_55, %c0_56, %c0_57] : memref<2x32x32xf32, #tpu.memory_space<vmem>>, vector<1x32x32xf32>
    %202 = vector.shape_cast %201 : vector<1x32x32xf32> to vector<32x32xf32>
    %cst_58 = arith.constant dense<0.000000e+00> : vector<16x32xf32>
    %203 = tpu.matmul %200, %202, %cst_58 {dimension_numbers = #tpu.dot_dimension_numbers<[1], [0], [0], [1], [0, 0, 1, 1], [], []>} : vector<16x32xf32>, vector<32x32xf32>, vector<16x32xf32> -> vector<16x32xf32>
    %204 = vector.broadcast %139 : vector<1x32xf32> to vector<16x32xf32>
    %205 = arith.addf %203, %204 : vector<16x32xf32>
    %206 = arith.addf %133, %205 : vector<16x32xf32>
    %cst_59 = arith.constant dense<0.000000e+00> : vector<16xf32>
    %207 = vector.multi_reduction <add>, %206, %cst_59 [1] : vector<16x32xf32> to vector<16xf32>
    %208 = vector.shape_cast %207 : vector<16xf32> to vector<16x1xf32>
    %cst_60 = arith.constant 3.200000e+01 : f32
    %209 = vector.broadcast %cst_60 : f32 to vector<16x1xf32>
    %210 = arith.divf %208, %209 : vector<16x1xf32>
    %211 = vector.broadcast %210 : vector<16x1xf32> to vector<16x32xf32>
    %212 = arith.subf %206, %211 : vector<16x32xf32>
    %213 = arith.mulf %212, %212 : vector<16x32xf32>
    %cst_61 = arith.constant dense<0.000000e+00> : vector<16xf32>
    %214 = vector.multi_reduction <add>, %213, %cst_61 [1] : vector<16x32xf32> to vector<16xf32>
    %215 = vector.shape_cast %214 : vector<16xf32> to vector<16x1xf32>
    %cst_62 = arith.constant 3.200000e+01 : f32
    %216 = vector.broadcast %cst_62 : f32 to vector<16x1xf32>
    %217 = arith.divf %215, %216 : vector<16x1xf32>
    %cst_63 = arith.constant 9.99999974E-6 : f32
    %218 = vector.broadcast %cst_63 : f32 to vector<16x1xf32>
    %219 = arith.addf %217, %218 : vector<16x1xf32>
    %220 = math.rsqrt %219 : vector<16x1xf32>
    %221 = vector.broadcast %220 : vector<16x1xf32> to vector<16x32xf32>
    %222 = arith.mulf %212, %221 : vector<16x32xf32>
    %223 = vector.broadcast %142 : vector<1x32xf32> to vector<16x32xf32>
    %224 = arith.mulf %222, %223 : vector<16x32xf32>
    %225 = vector.broadcast %143 : vector<1x32xf32> to vector<16x32xf32>
    %226 = arith.addf %224, %225 : vector<16x32xf32>
    %c1_64 = arith.constant 1 : index
    %c0_65 = arith.constant 0 : index
    %c0_66 = arith.constant 0 : index
    %227 = vector.load %arg4[%c1_64, %c0_65, %c0_66] : memref<2x32x32xf32, #tpu.memory_space<vmem>>, vector<1x32x32xf32>
    %228 = vector.shape_cast %227 : vector<1x32x32xf32> to vector<32x32xf32>
    %cst_67 = arith.constant dense<0.000000e+00> : vector<16x32xf32>
    %229 = tpu.matmul %226, %228, %cst_67 {dimension_numbers = #tpu.dot_dimension_numbers<[1], [0], [0], [1], [0, 0, 1, 1], [], []>} : vector<16x32xf32>, vector<32x32xf32>, vector<16x32xf32> -> vector<16x32xf32>
    %230 = vector.broadcast %140 : vector<1x32xf32> to vector<16x32xf32>
    %231 = arith.addf %229, %230 : vector<16x32xf32>
    %cst_68 = arith.constant 0.000000e+00 : f32
    %232 = vector.broadcast %cst_68 : f32 to vector<16x32xf32>
    %233 = arith.maximumf %231, %232 : vector<16x32xf32>
    %c1_69 = arith.constant 1 : index
    %c0_70 = arith.constant 0 : index
    %c0_71 = arith.constant 0 : index
    %234 = vector.load %arg5[%c1_69, %c0_70, %c0_71] : memref<2x32x32xf32, #tpu.memory_space<vmem>>, vector<1x32x32xf32>
    %235 = vector.shape_cast %234 : vector<1x32x32xf32> to vector<32x32xf32>
    %cst_72 = arith.constant dense<0.000000e+00> : vector<16x32xf32>
    %236 = tpu.matmul %233, %235, %cst_72 {dimension_numbers = #tpu.dot_dimension_numbers<[1], [0], [0], [1], [0, 0, 1, 1], [], []>} : vector<16x32xf32>, vector<32x32xf32>, vector<16x32xf32> -> vector<16x32xf32>
    %237 = vector.broadcast %141 : vector<1x32xf32> to vector<16x32xf32>
    %238 = arith.addf %236, %237 : vector<16x32xf32>
    %239 = arith.addf %226, %238 : vector<16x32xf32>
    %cst_73 = arith.constant dense<0.000000e+00> : vector<16xf32>
    %240 = vector.multi_reduction <add>, %239, %cst_73 [1] : vector<16x32xf32> to vector<16xf32>
    %241 = vector.shape_cast %240 : vector<16xf32> to vector<16x1xf32>
    %cst_74 = arith.constant 3.200000e+01 : f32
    %242 = vector.broadcast %cst_74 : f32 to vector<16x1xf32>
    %243 = arith.divf %241, %242 : vector<16x1xf32>
    %244 = vector.broadcast %243 : vector<16x1xf32> to vector<16x32xf32>
    %245 = arith.subf %239, %244 : vector<16x32xf32>
    %246 = arith.mulf %245, %245 : vector<16x32xf32>
    %cst_75 = arith.constant dense<0.000000e+00> : vector<16xf32>
    %247 = vector.multi_reduction <add>, %246, %cst_75 [1] : vector<16x32xf32> to vector<16xf32>
    %248 = vector.shape_cast %247 : vector<16xf32> to vector<16x1xf32>
    %cst_76 = arith.constant 3.200000e+01 : f32
    %249 = vector.broadcast %cst_76 : f32 to vector<16x1xf32>
    %250 = arith.divf %248, %249 : vector<16x1xf32>
    %cst_77 = arith.constant 9.99999974E-6 : f32
    %251 = vector.broadcast %cst_77 : f32 to vector<16x1xf32>
    %252 = arith.addf %250, %251 : vector<16x1xf32>
    %253 = math.rsqrt %252 : vector<16x1xf32>
    %254 = vector.broadcast %253 : vector<16x1xf32> to vector<16x32xf32>
    %255 = arith.mulf %245, %254 : vector<16x32xf32>
    %256 = vector.broadcast %144 : vector<1x32xf32> to vector<16x32xf32>
    %257 = arith.mulf %255, %256 : vector<16x32xf32>
    %258 = vector.broadcast %145 : vector<1x32xf32> to vector<16x32xf32>
    %259 = arith.addf %257, %258 : vector<16x32xf32>
    %260 = vector.shape_cast %259 : vector<16x32xf32> to vector<2x8x32xf32>
    %261 = vector.extract_strided_slice %260 {offsets = [0, 7, 0], sizes = [2, 1, 32], strides = [1, 1, 1]} : vector<2x8x32xf32> to vector<2x1x32xf32>
    %262 = vector.shape_cast %261 : vector<2x1x32xf32> to vector<2x32xf32>
    %c0_78 = arith.constant 0 : index
    %c0_79 = arith.constant 0 : index
    %263 = vector.load %arg7[%c0_78, %c0_79] : memref<32x16xf32, #tpu.memory_space<vmem>>, vector<32x16xf32>
    %cst_80 = arith.constant dense<0.000000e+00> : vector<2x16xf32>
    %264 = tpu.matmul %262, %263, %cst_80 {dimension_numbers = #tpu.dot_dimension_numbers<[1], [0], [0], [1], [0, 0, 1, 1], [], []>} : vector<2x32xf32>, vector<32x16xf32>, vector<2x16xf32> -> vector<2x16xf32>
    %c0_81 = arith.constant 0 : index
    %c0_82 = arith.constant 0 : index
    %265 = vector.load %arg8[%c0_81, %c0_82] : memref<1x16xf32, #tpu.memory_space<vmem>>, vector<1x16xf32>
    %266 = vector.broadcast %265 : vector<1x16xf32> to vector<2x16xf32>
    %267 = arith.addf %264, %266 : vector<2x16xf32>
    %cst_83 = arith.constant dense<0xFF800000> : vector<2xf32>
    %268 = vector.multi_reduction <maximumf>, %267, %cst_83 [1] : vector<2x16xf32> to vector<2xf32>
    %269 = vector.shape_cast %268 : vector<2xf32> to vector<2x1xf32>
    %270 = vector.broadcast %269 : vector<2x1xf32> to vector<2x16xf32>
    %271 = arith.subf %267, %270 : vector<2x16xf32>
    %272 = math.exp %271 : vector<2x16xf32>
    %cst_84 = arith.constant dense<0.000000e+00> : vector<2xf32>
    %273 = vector.multi_reduction <add>, %272, %cst_84 [1] : vector<2x16xf32> to vector<2xf32>
    %274 = vector.shape_cast %273 : vector<2xf32> to vector<2x1xf32>
    %275 = math.log %274 : vector<2x1xf32>
    %276 = arith.addf %269, %275 : vector<2x1xf32>
    %277 = vector.broadcast %276 : vector<2x1xf32> to vector<2x16xf32>
    %278 = arith.subf %267, %277 : vector<2x16xf32>
    %c0_85 = arith.constant 0 : index
    %c0_86 = arith.constant 0 : index
    %279 = vector.load %arg9[%c0_85, %c0_86] : memref<2x16xf32, #tpu.memory_space<vmem>>, vector<2x16xf32>
    tpu.vector_store %arg9[%c0_85, %c0_86], %278 {strides = array<i32>} : memref<2x16xf32, #tpu.memory_space<vmem>>, vector<2x16xf32>,
    return
  }
}

</mosaic_0001>

<llo_original>
// kernel: tpu_custom_call.1
$region0: #{tpu_custom_call.1}
  #allocation0 [shape = 'u32[]', space=smem, size = 0x4, offset = 0x4, fixed_abs, tag = 'smem constant byte address 0x4 - core index']
  #allocation1 [shape = 'u32[144,128]{1,0:T(1,128)}', space=vmem, size = 0x12000, scoped, tag = 'internal scratch']
  %s0 = inlined_call_operand.vmem [shape: s32[16,1], index: 0, kind: input, shape index: {}]
  %s1 = inlined_call_operand.hbm [shape: f32[16,32], index: 1, kind: input, shape index: {}]
  %s2 = inlined_call_operand.hbm [shape: f32[2,3,32,32], index: 2, kind: input, shape index: {}]
  %s3 = inlined_call_operand.vmem [shape: f32[2,32,32], index: 3, kind: input, shape index: {}]
  %s4 = inlined_call_operand.vmem [shape: f32[2,32,32], index: 4, kind: input, shape index: {}]
  %s5 = inlined_call_operand.hbm [shape: f32[2,32,32], index: 5, kind: input, shape index: {}]
  %s6 = inlined_call_operand.vmem [shape: f32[2,10,32], index: 6, kind: input, shape index: {}]
  %s7 = inlined_call_operand.vmem [shape: f32[32,16], index: 7, kind: input, shape index: {}]
  %s8 = inlined_call_operand.vmem [shape: f32[1,16], index: 8, kind: input, shape index: {}]
  %s9 = inlined_call_operand.hbm [shape: f32[2,16], index: 9, kind: output, shape index: {}]
  %s10 = sld [smem:[#allocation0]]
  $region58: #{tpu_custom_call.1} parent=0
    _
  %s12 = ssub.s32 1, %s10
  %s13 = scalar_select 0, %s12, %s10
  $region1: #{tpu_custom_call.1} parent=0
    #allocation2 [shape = 'u8[8192]{0}', space=vmem, size = 0x2000, scoped, tag = 'input window, operand 1, single buffered']
    #allocation3 [shape = 's32[1]{0}', space=sflag, size = 0x4, scoped, tag = 'scoped memory for tpu_custom_call.1']
    #allocation4 [shape = 's32[1]{0}', space=sflag, size = 0x4, scoped, tag = 'scoped memory for tpu_custom_call.1']
    #allocation5 [shape = 'u8[98304]{0}', space=vmem, size = 0x18000, scoped, tag = 'input window, operand 2, single buffered']
    #allocation6 [shape = 's32[1]{0}', space=sflag, size = 0x4, scoped, tag = 'scoped memory for tpu_custom_call.1']
    #allocation7 [shape = 'u8[32768]{0}', space=vmem, size = 0x8000, scoped, tag = 'input window, operand 5, single buffered']
    #allocation8 [shape = 'u8[1024]{0}', space=vmem, size = 0x400, scoped, tag = 'output window, operand 0, single buffered']
    %14 = vsyncpa [#allocation3], 0
    %15 = vsyncpa [#allocation6], 0
    %16 = vsyncpa [#allocation4], 0
    // Predicated region
    $region2: #{tpu_custom_call.1} parent=1 // pred_check
      _
    $region3: #{tpu_custom_call.1} parent=1 // pred_check_branch
      %18 = sbr.rel (0) target = $region5
    $region4: #{tpu_custom_call.1} parent=1 // pred_region
      _
    $region5: #{tpu_custom_call.1} parent=1 // pred_fallthru
      _
    // Predicated region
    $region6: #{tpu_custom_call.1} parent=1 // pred_check
      _
    $region7: #{tpu_custom_call.1} parent=1 // pred_check_branch
      %20 = sbr.rel (0) target = $region9
    $region8: #{tpu_custom_call.1} parent=1 // pred_region
      %s22 = ssub.s32 256, 256
      %23 = vsyncadd [#allocation3], %s22
      %s24 = sshll.u32 [#allocation2], 4
      %s25 = int_to_ptr.vmem [resolvable:$true] %s24
      %30 = dma.hbm_to_vmem [thread:$0]  %s1, 256, %s25, [#allocation3], 128, 128, 8
    $region9: #{tpu_custom_call.1} parent=1 // pred_fallthru
      _
    // Predicated region
    $region10: #{tpu_custom_call.1} parent=1 // pred_check
      _
    $region11: #{tpu_custom_call.1} parent=1 // pred_check_branch
      %32 = sbr.rel (0) target = $region13
    $region12: #{tpu_custom_call.1} parent=1 // pred_region
      %s34 = ssub.s32 3072, 3072
      %35 = vsyncadd [#allocation6], %s34
      %s36 = sshll.u32 [#allocation5], 4
      %s37 = int_to_ptr.vmem [resolvable:$true] %s36
      %42 = dma.hbm_to_vmem [thread:$0]  %s2, 3072, %s37, [#allocation6], 128, 128, 8
    $region13: #{tpu_custom_call.1} parent=1 // pred_fallthru
      _
    // Predicated region
    $region14: #{tpu_custom_call.1} parent=1 // pred_check
      _
    $region15: #{tpu_custom_call.1} parent=1 // pred_check_branch
      %44 = sbr.rel (0) target = $region17
    $region16: #{tpu_custom_call.1} parent=1 // pred_region
      _
    $region17: #{tpu_custom_call.1} parent=1 // pred_fallthru
      _
    // Predicated region
    $region18: #{tpu_custom_call.1} parent=1 // pred_check
      _
    $region19: #{tpu_custom_call.1} parent=1 // pred_check_branch
      %46 = sbr.rel (0) target = $region21
    $region20: #{tpu_custom_call.1} parent=1 // pred_region
      _
    $region21: #{tpu_custom_call.1} parent=1 // pred_fallthru
      _
    // Predicated region
    $region22: #{tpu_custom_call.1} parent=1 // pred_check
      _
    $region23: #{tpu_custom_call.1} parent=1 // pred_check_branch
      %48 = sbr.rel (0) target = $region25
    $region24: #{tpu_custom_call.1} parent=1 // pred_region
      %s50 = ssub.s32 1024, 1024
      %51 = vsyncadd [#allocation6], %s50
      %s52 = sshll.u32 [#allocation7], 4
      %s53 = int_to_ptr.vmem [resolvable:$true] %s52
      %58 = dma.hbm_to_vmem [thread:$0]  %s5, 1024, %s53, [#allocation6], 128, 128, 8
    $region25: #{tpu_custom_call.1} parent=1 // pred_fallthru
      _
    // Predicated region
    $region26: #{tpu_custom_call.1} parent=1 // pred_check
      _
    $region27: #{tpu_custom_call.1} parent=1 // pred_check_branch
      %60 = sbr.rel (0) target = $region29
    $region28: #{tpu_custom_call.1} parent=1 // pred_region
      _
    $region29: #{tpu_custom_call.1} parent=1 // pred_fallthru
      _
    // Predicated region
    $region30: #{tpu_custom_call.1} parent=1 // pred_check
      _
    $region31: #{tpu_custom_call.1} parent=1 // pred_check_branch
      %62 = sbr.rel (0) target = $region33
    $region32: #{tpu_custom_call.1} parent=1 // pred_region
      _
    $region33: #{tpu_custom_call.1} parent=1 // pred_fallthru
      _
    // Predicated region
    $region34: #{tpu_custom_call.1} parent=1 // pred_check
      _
    $region35: #{tpu_custom_call.1} parent=1 // pred_check_branch
      %64 = sbr.rel (0) target = $region37
    $region36: #{tpu_custom_call.1} parent=1 // pred_region
      _
    $region37: #{tpu_custom_call.1} parent=1 // pred_fallthru
      _
    // Predicated region
    $region38: #{tpu_custom_call.1} parent=1 // pred_check
      _
    $region39: #{tpu_custom_call.1} parent=1 // pred_check_branch
      %66 = sbr.rel (0) target = $region41
    $region40: #{tpu_custom_call.1} parent=1 // pred_region
      %67 = dma.done [#allocation3], 256
    $region41: #{tpu_custom_call.1} parent=1 // pred_fallthru
      _
    // Predicated region
    $region42: #{tpu_custom_call.1} parent=1 // pred_check
      _
    $region43: #{tpu_custom_call.1} parent=1 // pred_check_branch
      %69 = sbr.rel (0) target = $region45
    $region44: #{tpu_custom_call.1} parent=1 // pred_region
      %70 = dma.done [#allocation6], 3072
    $region45: #{tpu_custom_call.1} parent=1 // pred_fallthru
      _
    // Predicated region
    $region46: #{tpu_custom_call.1} parent=1 // pred_check
      _
    $region47: #{tpu_custom_call.1} parent=1 // pred_check_branch
      %72 = sbr.rel (0) target = $region49
    $region48: #{tpu_custom_call.1} parent=1 // pred_region
      %73 = dma.done [#allocation6], 1024
    $region49: #{tpu_custom_call.1} parent=1 // pred_fallthru
      _
    %v74 = vlaneseq
    %v75 = vand.u32 %v74, 127
    %v76 = vld [vmem:[%s0] sm:$0xff]
    %v77 = vld [vmem:[%s0 + $0x8] sm:$0xff]
    %78 = vset.pattern.permute.xlu0 0
    %79 = vperm.xlu0 %78, %v76
    %v80 = vpop.permute.xlu0 %79
    %81 = vset.pattern.permute.xlu0 0
    %82 = vperm.xlu0 %81, %v77
    %v83 = vpop.permute.xlu0 %82
    %vm84 = vcmp.eq.s32.totalorder %v75, %v80
    %vm85 = vcmp.eq.s32.totalorder %v75, %v83
    %v86 = vsel %vm84, 1, 0
    %v87 = vsel %vm85, 1, 0
    %v88 = vcvt.s32.f32 %v86
    %v89 = vcvt.s32.f32 %v87
    %v90 = vld [vmem:[#allocation2] sm:$0xff]
    %v91 = vld [vmem:[#allocation2 + $0x8] sm:$0xff]
    %vm92 = vcmask 130048
    %v94 = vsel %vm92, %v88, 0
    %v97 = vsel %vm92, %v89, 0
    %99 = vmatprep.subr.mxu0 0.0
    %100 = vmatpush1.msra.mxu0 %v90
    %101 = vmatprep.subr.mxu0 0.0
    %102 = vmatpush1.msra.mxu0 %v91
    %103 = vmatprep.subr.mxu0 0.0
    %104 = vmatpush1.msra.mxu0 0.0
    %105 = vmatprep.subr.mxu0 0.0
    %106 = vmatpush1.msra.mxu0 0.0
    %107 = vmatprep.subr.mxu0 0.0
    %108 = vmatpush1.msra.mxu0 0.0
    %109 = vmatprep.subr.mxu0 0.0
    %110 = vmatpush1.msra.mxu0 0.0
    %111 = vmatprep.subr.mxu0 0.0
    %112 = vmatpush1.msra.mxu0 0.0
    %113 = vmatprep.subr.mxu0 0.0
    %114 = vmatpush1.msra.mxu0 0.0
    %115 = vmatprep.subr.mxu0 0.0
    %116 = vmatpush1.msra.mxu0 0.0
    %117 = vmatprep.subr.mxu0 0.0
    %118 = vmatpush1.msra.mxu0 0.0
    %119 = vmatprep.subr.mxu0 0.0
    %120 = vmatpush1.msra.mxu0 0.0
    %121 = vmatprep.subr.mxu0 0.0
    %122 = vmatpush1.msra.mxu0 0.0
    %123 = vmatprep.subr.mxu0 0.0
    %124 = vmatpush1.msra.mxu0 0.0
    %125 = vmatprep.subr.mxu0 0.0
    %126 = vmatpush1.msra.mxu0 0.0
    %127 = vmatprep.subr.mxu0 0.0
    %128 = vmatpush1.msra.mxu0 0.0
    %129 = vmatprep.subr.mxu0 0.0
    %130 = vmatpush1.msra.mxu0 0.0
    %131 = vmatprep.subr.mxu0 0.0
    %132 = vmatpush1.msra.mxu0 0.0
    %133 = vmatprep.subr.mxu0 0.0
    %134 = vmatpush1.msra.mxu0 0.0
    %135 = vmatprep.subr.mxu0 0.0
    %136 = vmatpush1.msra.mxu0 0.0
    %137 = vmatprep.subr.mxu0 0.0
    %138 = vmatpush1.msra.mxu0 0.0
    %139 = vmatprep.subr.mxu0 0.0
    %140 = vmatpush1.msra.mxu0 0.0
    %141 = vmatprep.subr.mxu0 0.0
    %142 = vmatpush1.msra.mxu0 0.0
    %143 = vmatprep.subr.mxu0 0.0
    %144 = vmatpush1.msra.mxu0 0.0
    %145 = vmatprep.subr.mxu0 0.0
    %146 = vmatpush1.msra.mxu0 0.0
    %147 = vmatprep.subr.mxu0 0.0
    %148 = vmatpush1.msra.mxu0 0.0
    %149 = vmatprep.subr.mxu0 0.0
    %150 = vmatpush1.msra.mxu0 0.0
    %151 = vmatprep.subr.mxu0 0.0
    %152 = vmatpush1.msra.mxu0 0.0
    %153 = vmatprep.subr.mxu0 0.0
    %154 = vmatpush1.msra.mxu0 0.0
    %155 = vmatprep.subr.mxu0 0.0
    %156 = vmatpush1.msra.mxu0 0.0
    %157 = vmatprep.subr.mxu0 0.0
    %158 = vmatpush1.msra.mxu0 0.0
    %159 = vmatprep.subr.mxu0 0.0
    %160 = vmatpush1.msra.mxu0 0.0
    %161 = vmatprep.subr.mxu0 0.0
    %162 = vmatpush1.msra.mxu0 0.0
    %163 = vmatprep.mubr.f32.mxu0 0.0
    %164 = vmatmul.mubr.f32.gmra.mrb[0].mxu0 %v94
    %v165 = vpop.f32.mrb[0].mxu0
    %v166 = vadd.f32 0.0, %v165
    %v167 = vpop.f32.mrb[0].mxu0
    %168 = vmatprep.mubr.f32.mxu0 0.0
    %169 = vmatmul.mubr.f32.gmra.mrb[0].mxu0 %v97
    %v170 = vpop.f32.mrb[0].mxu0
    %v171 = vadd.f32 0.0, %v170
    %v172 = vpop.f32.mrb[0].mxu0
    %173 = vdwg.mxu0
    %v174 = vld [vmem:[%s6] sm:$0xff]
    %v175 = vld [vmem:[%s6 + $0x8] sm:$0x3]
    %v176 = vld [vmem:[#allocation5] sm:$0xff]
    %v177 = vld [vmem:[#allocation5 + $0x8] sm:$0xff]
    %v178 = vld [vmem:[#allocation5 + $0x10] sm:$0xff]
    %v179 = vld [vmem:[#allocation5 + $0x18] sm:$0xff]
    %v180 = vld [vmem:[#allocation5 + $0x20] sm:$0xff]
    %v181 = vld [vmem:[#allocation5 + $0x28] sm:$0xff]
    %v182 = vld [vmem:[#allocation5 + $0x30] sm:$0xff]
    %v183 = vld [vmem:[#allocation5 + $0x38] sm:$0xff]
    %v184 = vld [vmem:[#allocation5 + $0x40] sm:$0xff]
    %v185 = vld [vmem:[#allocation5 + $0x48] sm:$0xff]
    %v186 = vld [vmem:[#allocation5 + $0x50] sm:$0xff]
    %v187 = vld [vmem:[#allocation5 + $0x58] sm:$0xff]
    %v188 = vlaneseq
    %v189 = vshrl.u32 %v188, 7
    %v190 = vsub.s32 0, %v189
    %v191 = vrot.slane %v174, %v190
    %vm192 = vcmask 261120
    %v194 = vsel %vm192, %v166, 0
    %v197 = vsel %vm192, %v171, 0
    %199 = vmatprep.subr.mxu0 0.0
    %200 = vmatpush1.msra.mxu0 %v176
    %201 = vmatprep.subr.mxu0 0.0
    %202 = vmatpush1.msra.mxu0 %v177
    %203 = vmatprep.subr.mxu0 0.0
    %204 = vmatpush1.msra.mxu0 %v178
    %205 = vmatprep.subr.mxu0 0.0
    %206 = vmatpush1.msra.mxu0 %v179
    %207 = vmatprep.subr.mxu0 0.0
    %208 = vmatpush1.msra.mxu0 0.0
    %209 = vmatprep.subr.mxu0 0.0
    %210 = vmatpush1.msra.mxu0 0.0
    %211 = vmatprep.subr.mxu0 0.0
    %212 = vmatpush1.msra.mxu0 0.0
    %213 = vmatprep.subr.mxu0 0.0
    %214 = vmatpush1.msra.mxu0 0.0
    %215 = vmatprep.subr.mxu0 0.0
    %216 = vmatpush1.msra.mxu0 0.0
    %217 = vmatprep.subr.mxu0 0.0
    %218 = vmatpush1.msra.mxu0 0.0
    %219 = vmatprep.subr.mxu0 0.0
    %220 = vmatpush1.msra.mxu0 0.0
    %221 = vmatprep.subr.mxu0 0.0
    %222 = vmatpush1.msra.mxu0 0.0
    %223 = vmatprep.subr.mxu0 0.0
    %224 = vmatpush1.msra.mxu0 0.0
    %225 = vmatprep.subr.mxu0 0.0
    %226 = vmatpush1.msra.mxu0 0.0
    %227 = vmatprep.subr.mxu0 0.0
    %228 = vmatpush1.msra.mxu0 0.0
    %229 = vmatprep.subr.mxu0 0.0
    %230 = vmatpush1.msra.mxu0 0.0
    %231 = vmatprep.subr.mxu0 0.0
    %232 = vmatpush1.msra.mxu0 0.0
    %233 = vmatprep.subr.mxu0 0.0
    %234 = vmatpush1.msra.mxu0 0.0
    %235 = vmatprep.subr.mxu0 0.0
    %236 = vmatpush1.msra.mxu0 0.0
    %237 = vmatprep.subr.mxu0 0.0
    %238 = vmatpush1.msra.mxu0 0.0
    %239 = vmatprep.subr.mxu0 0.0
    %240 = vmatpush1.msra.mxu0 0.0
    %241 = vmatprep.subr.mxu0 0.0
    %242 = vmatpush1.msra.mxu0 0.0
    %243 = vmatprep.subr.mxu0 0.0
    %244 = vmatpush1.msra.mxu0 0.0
    %245 = vmatprep.subr.mxu0 0.0
    %246 = vmatpush1.msra.mxu0 0.0
    %247 = vmatprep.subr.mxu0 0.0
    %248 = vmatpush1.msra.mxu0 0.0
    %249 = vmatprep.subr.mxu0 0.0
    %250 = vmatpush1.msra.mxu0 0.0
    %251 = vmatprep.subr.mxu0 0.0
    %252 = vmatpush1.msra.mxu0 0.0
    %253 = vmatprep.subr.mxu0 0.0
    %254 = vmatpush1.msra.mxu0 0.0
    %255 = vmatprep.subr.mxu0 0.0
    %256 = vmatpush1.msra.mxu0 0.0
    %257 = vmatprep.subr.mxu0 0.0
    %258 = vmatpush1.msra.mxu0 0.0
    %259 = vmatprep.subr.mxu0 0.0
    %260 = vmatpush1.msra.mxu0 0.0
    %261 = vmatprep.subr.mxu0 0.0
    %262 = vmatpush1.msra.mxu0 0.0
    %263 = vmatprep.mubr.f32.mxu0 0.0
    %264 = vmatmul.mubr.f32.gmra.mrb[0].mxu0 %v194
    %v265 = vpop.f32.mrb[0].mxu0
    %v266 = vadd.f32 %v191, %v265
    %v267 = vpop.f32.mrb[0].mxu0
    %268 = vmatprep.mubr.f32.mxu0 0.0
    %269 = vmatmul.mubr.f32.gmra.mrb[0].mxu0 %v197
    %v270 = vpop.f32.mrb[0].mxu0
    %v271 = vadd.f32 %v191, %v270
    %v272 = vpop.f32.mrb[0].mxu0
    %273 = vdwg.mxu0
    %v274 = vlaneseq
    %v275 = vshrl.u32 %v274, 7
    %v276 = vsub.s32 1, %v275
    %v277 = vrot.slane %v174, %v276
    %278 = vmatprep.subr.mxu0 0.0
    %279 = vmatpush1.msra.mxu0 %v180
    %280 = vmatprep.subr.mxu0 0.0
    %281 = vmatpush1.msra.mxu0 %v181
    %282 = vmatprep.subr.mxu0 0.0
    %283 = vmatpush1.msra.mxu0 %v182
    %284 = vmatprep.subr.mxu0 0.0
    %285 = vmatpush1.msra.mxu0 %v183
    %286 = vmatprep.subr.mxu0 0.0
    %287 = vmatpush1.msra.mxu0 0.0
    %288 = vmatprep.subr.mxu0 0.0
    %289 = vmatpush1.msra.mxu0 0.0
    %290 = vmatprep.subr.mxu0 0.0
    %291 = vmatpush1.msra.mxu0 0.0
    %292 = vmatprep.subr.mxu0 0.0
    %293 = vmatpush1.msra.mxu0 0.0
    %294 = vmatprep.subr.mxu0 0.0
    %295 = vmatpush1.msra.mxu0 0.0
    %296 = vmatprep.subr.mxu0 0.0
    %297 = vmatpush1.msra.mxu0 0.0
    %298 = vmatprep.subr.mxu0 0.0
    %299 = vmatpush1.msra.mxu0 0.0
    %300 = vmatprep.subr.mxu0 0.0
    %301 = vmatpush1.msra.mxu0 0.0
    %302 = vmatprep.subr.mxu0 0.0
    %303 = vmatpush1.msra.mxu0 0.0
    %304 = vmatprep.subr.mxu0 0.0
    %305 = vmatpush1.msra.mxu0 0.0
    %306 = vmatprep.subr.mxu0 0.0
    %307 = vmatpush1.msra.mxu0 0.0
    %308 = vmatprep.subr.mxu0 0.0
    %309 = vmatpush1.msra.mxu0 0.0
    %310 = vmatprep.subr.mxu0 0.0
    %311 = vmatpush1.msra.mxu0 0.0
    %312 = vmatprep.subr.mxu0 0.0
    %313 = vmatpush1.msra.mxu0 0.0
    %314 = vmatprep.subr.mxu0 0.0
    %315 = vmatpush1.msra.mxu0 0.0
    %316 = vmatprep.subr.mxu0 0.0
    %317 = vmatpush1.msra.mxu0 0.0
    %318 = vmatprep.subr.mxu0 0.0
    %319 = vmatpush1.msra.mxu0 0.0
    %320 = vmatprep.subr.mxu0 0.0
    %321 = vmatpush1.msra.mxu0 0.0
    %322 = vmatprep.subr.mxu0 0.0
    %323 = vmatpush1.msra.mxu0 0.0
    %324 = vmatprep.subr.mxu0 0.0
    %325 = vmatpush1.msra.mxu0 0.0
    %326 = vmatprep.subr.mxu0 0.0
    %327 = vmatpush1.msra.mxu0 0.0
    %328 = vmatprep.subr.mxu0 0.0
    %329 = vmatpush1.msra.mxu0 0.0
    %330 = vmatprep.subr.mxu0 0.0
    %331 = vmatpush1.msra.mxu0 0.0
    %332 = vmatprep.subr.mxu0 0.0
    %333 = vmatpush1.msra.mxu0 0.0
    %334 = vmatprep.subr.mxu0 0.0
    %335 = vmatpush1.msra.mxu0 0.0
    %336 = vmatprep.subr.mxu0 0.0
    %337 = vmatpush1.msra.mxu0 0.0
    %338 = vmatprep.subr.mxu0 0.0
    %339 = vmatpush1.msra.mxu0 0.0
    %340 = vmatprep.subr.mxu0 0.0
    %341 = vmatpush1.msra.mxu0 0.0
    %342 = vmatprep.mubr.f32.mxu0 0.0
    %343 = vmatmul.mubr.f32.gmra.mrb[0].mxu0 %v194
    %v344 = vpop.f32.mrb[0].mxu0
    %v345 = vadd.f32 %v277, %v344
    %v346 = vpop.f32.mrb[0].mxu0
    %347 = vmatprep.mubr.f32.mxu0 0.0
    %348 = vmatmul.mubr.f32.gmra.mrb[0].mxu0 %v197
    %v349 = vpop.f32.mrb[0].mxu0
    %v350 = vadd.f32 %v277, %v349
    %v351 = vpop.f32.mrb[0].mxu0
    %352 = vdwg.mxu0
    %v353 = vlaneseq
    %v354 = vshrl.u32 %v353, 7
    %v355 = vsub.s32 2, %v354
    %v356 = vrot.slane %v174, %v355
    %357 = vmatprep.subr.mxu0 0.0
    %358 = vmatpush1.msra.mxu0 %v184
    %359 = vmatprep.subr.mxu0 0.0
    %360 = vmatpush1.msra.mxu0 %v185
    %361 = vmatprep.subr.mxu0 0.0
    %362 = vmatpush1.msra.mxu0 %v186
    %363 = vmatprep.subr.mxu0 0.0
    %364 = vmatpush1.msra.mxu0 %v187
    %365 = vmatprep.subr.mxu0 0.0
    %366 = vmatpush1.msra.mxu0 0.0
    %367 = vmatprep.subr.mxu0 0.0
    %368 = vmatpush1.msra.mxu0 0.0
    %369 = vmatprep.subr.mxu0 0.0
    %370 = vmatpush1.msra.mxu0 0.0
    %371 = vmatprep.subr.mxu0 0.0
    %372 = vmatpush1.msra.mxu0 0.0
    %373 = vmatprep.subr.mxu0 0.0
    %374 = vmatpush1.msra.mxu0 0.0
    %375 = vmatprep.subr.mxu0 0.0
    %376 = vmatpush1.msra.mxu0 0.0
    %377 = vmatprep.subr.mxu0 0.0
    %378 = vmatpush1.msra.mxu0 0.0
    %379 = vmatprep.subr.mxu0 0.0
    %380 = vmatpush1.msra.mxu0 0.0
    %381 = vmatprep.subr.mxu0 0.0
    %382 = vmatpush1.msra.mxu0 0.0
    %383 = vmatprep.subr.mxu0 0.0
    %384 = vmatpush1.msra.mxu0 0.0
    %385 = vmatprep.subr.mxu0 0.0
    %386 = vmatpush1.msra.mxu0 0.0
    %387 = vmatprep.subr.mxu0 0.0
    %388 = vmatpush1.msra.mxu0 0.0
    %389 = vmatprep.subr.mxu0 0.0
    %390 = vmatpush1.msra.mxu0 0.0
    %391 = vmatprep.subr.mxu0 0.0
    %392 = vmatpush1.msra.mxu0 0.0
    %393 = vmatprep.subr.mxu0 0.0
    %394 = vmatpush1.msra.mxu0 0.0
    %395 = vmatprep.subr.mxu0 0.0
    %396 = vmatpush1.msra.mxu0 0.0
    %397 = vmatprep.subr.mxu0 0.0
    %398 = vmatpush1.msra.mxu0 0.0
    %399 = vmatprep.subr.mxu0 0.0
    %400 = vmatpush1.msra.mxu0 0.0
    %401 = vmatprep.subr.mxu0 0.0
    %402 = vmatpush1.msra.mxu0 0.0
    %403 = vmatprep.subr.mxu0 0.0
    %404 = vmatpush1.msra.mxu0 0.0
    %405 = vmatprep.subr.mxu0 0.0
    %406 = vmatpush1.msra.mxu0 0.0
    %407 = vmatprep.subr.mxu0 0.0
    %408 = vmatpush1.msra.mxu0 0.0
    %409 = vmatprep.subr.mxu0 0.0
    %410 = vmatpush1.msra.mxu0 0.0
    %411 = vmatprep.subr.mxu0 0.0
    %412 = vmatpush1.msra.mxu0 0.0
    %413 = vmatprep.subr.mxu0 0.0
    %414 = vmatpush1.msra.mxu0 0.0
    %415 = vmatprep.subr.mxu0 0.0
    %416 = vmatpush1.msra.mxu0 0.0
    %417 = vmatprep.subr.mxu0 0.0
    %418 = vmatpush1.msra.mxu0 0.0
    %419 = vmatprep.subr.mxu0 0.0
    %420 = vmatpush1.msra.mxu0 0.0
    %421 = vmatprep.mubr.f32.mxu0 0.0
    %422 = vmatmul.mubr.f32.gmra.mrb[0].mxu0 %v194
    %v423 = vpop.f32.mrb[0].mxu0
    %v424 = vadd.f32 %v356, %v423
    %v425 = vpop.f32.mrb[0].mxu0
    %426 = vmatprep.mubr.f32.mxu0 0.0
    %427 = vmatmul.mubr.f32.gmra.mrb[0].mxu0 %v197
    %v428 = vpop.f32.mrb[0].mxu0
    %v429 = vadd.f32 %v356, %v428
    %v430 = vpop.f32.mrb[0].mxu0
    %431 = vdwg.mxu0
    %434 = vrot.lane.b32.xlu0 %v266, 120
    %v435 = vpop.permute.xlu0 %434
    %436 = vrot.lane.b32.xlu0 %v271, 120
    %v437 = vpop.permute.xlu0 %436
    %438 = vrot.lane.b32.xlu0 %v266, 112
    %v439 = vpop.permute.xlu0 %438
    %440 = vrot.lane.b32.xlu0 %v271, 112
    %v441 = vpop.permute.xlu0 %440
    %442 = vrot.lane.b32.xlu0 %v266, 104
    %v443 = vpop.permute.xlu0 %442
    %444 = vrot.lane.b32.xlu0 %v271, 104
    %v445 = vpop.permute.xlu0 %444
    %448 = vrot.lane.b32.xlu0 %v345, 120
    %v449 = vpop.permute.xlu0 %448
    %450 = vrot.lane.b32.xlu0 %v350, 120
    %v451 = vpop.permute.xlu0 %450
    %452 = vrot.lane.b32.xlu0 %v345, 112
    %v453 = vpop.permute.xlu0 %452
    %454 = vrot.lane.b32.xlu0 %v350, 112
    %v455 = vpop.permute.xlu0 %454
    %456 = vrot.lane.b32.xlu0 %v345, 104
    %v457 = vpop.permute.xlu0 %456
    %458 = vrot.lane.b32.xlu0 %v350, 104
    %v459 = vpop.permute.xlu0 %458
    %462 = vrot.lane.b32.xlu0 %v424, 120
    %v463 = vpop.permute.xlu0 %462
    %464 = vrot.lane.b32.xlu0 %v429, 120
    %v465 = vpop.permute.xlu0 %464
    %468 = vrot.lane.b32.xlu0 %v424, 112
    %v469 = vpop.permute.xlu0 %468
    %470 = vrot.lane.b32.xlu0 %v429, 112
    %v471 = vpop.permute.xlu0 %470
    %474 = vrot.lane.b32.xlu0 %v424, 104
    %v475 = vpop.permute.xlu0 %474
    %476 = vrot.lane.b32.xlu0 %v429, 104
    %v477 = vpop.permute.xlu0 %476
    %vm480 = vcmask 64512
    %v481 = vsel %vm480, %v266, 0
    %v483 = vsel %vm480, %v345, 0
    %485 = vmatprep.subr.mxu0 0.0
    %486 = vmatpush1.xpose.msra.mxu0 %v483
    %487 = vmatprep.subr.mxu0 0.0
    %488 = vmatpush1.xpose.msra.mxu0 0.0
    %489 = vmatprep.subr.mxu0 0.0
    %490 = vmatpush1.xpose.msra.mxu0 0.0
    %491 = vmatprep.subr.mxu0 0.0
    %492 = vmatpush1.xpose.msra.mxu0 0.0
    %493 = vmatprep.subr.mxu0 0.0
    %494 = vmatpush1.xpose.msra.mxu0 0.0
    %495 = vmatprep.subr.mxu0 0.0
    %496 = vmatpush1.xpose.msra.mxu0 0.0
    %497 = vmatprep.subr.mxu0 0.0
    %498 = vmatpush1.xpose.msra.mxu0 0.0
    %499 = vmatprep.subr.mxu0 0.0
    %500 = vmatpush1.xpose.msra.mxu0 0.0
    %501 = vmatprep.subr.mxu0 0.0
    %502 = vmatpush1.xpose.msra.mxu0 0.0
    %503 = vmatprep.subr.mxu0 0.0
    %504 = vmatpush1.xpose.msra.mxu0 0.0
    %505 = vmatprep.subr.mxu0 0.0
    %506 = vmatpush1.xpose.msra.mxu0 0.0
    %507 = vmatprep.subr.mxu0 0.0
    %508 = vmatpush1.xpose.msra.mxu0 0.0
    %509 = vmatprep.subr.mxu0 0.0
    %510 = vmatpush1.xpose.msra.mxu0 0.0
    %511 = vmatprep.subr.mxu0 0.0
    %512 = vmatpush1.xpose.msra.mxu0 0.0
    %513 = vmatprep.subr.mxu0 0.0
    %514 = vmatpush1.xpose.msra.mxu0 0.0
    %515 = vmatprep.subr.mxu0 0.0
    %516 = vmatpush1.xpose.msra.mxu0 0.0
    %517 = vmatprep.subr.mxu0 0.0
    %518 = vmatpush1.xpose.msra.mxu0 0.0
    %519 = vmatprep.subr.mxu0 0.0
    %520 = vmatpush1.xpose.msra.mxu0 0.0
    %521 = vmatprep.subr.mxu0 0.0
    %522 = vmatpush1.xpose.msra.mxu0 0.0
    %523 = vmatprep.subr.mxu0 0.0
    %524 = vmatpush1.xpose.msra.mxu0 0.0
    %525 = vmatprep.subr.mxu0 0.0
    %526 = vmatpush1.xpose.msra.mxu0 0.0
    %527 = vmatprep.subr.mxu0 0.0
    %528 = vmatpush1.xpose.msra.mxu0 0.0
    %529 = vmatprep.subr.mxu0 0.0
    %530 = vmatpush1.xpose.msra.mxu0 0.0
    %531 = vmatprep.subr.mxu0 0.0
    %532 = vmatpush1.xpose.msra.mxu0 0.0
    %533 = vmatprep.subr.mxu0 0.0
    %534 = vmatpush1.xpose.msra.mxu0 0.0
    %535 = vmatprep.subr.mxu0 0.0
    %536 = vmatpush1.xpose.msra.mxu0 0.0
    %537 = vmatprep.subr.mxu0 0.0
    %538 = vmatpush1.xpose.msra.mxu0 0.0
    %539 = vmatprep.subr.mxu0 0.0
    %540 = vmatpush1.xpose.msra.mxu0 0.0
    %541 = vmatprep.subr.mxu0 0.0
    %542 = vmatpush1.xpose.msra.mxu0 0.0
    %543 = vmatprep.subr.mxu0 0.0
    %544 = vmatpush1.xpose.msra.mxu0 0.0
    %545 = vmatprep.subr.mxu0 0.0
    %546 = vmatpush1.xpose.msra.mxu0 0.0
    %547 = vmatprep.subr.mxu0 0.0
    %548 = vmatpush1.xpose.msra.mxu0 0.0
    %549 = vmatprep.mubr.f32.mxu0 0.0
    %550 = vmatmul.mubr.f32.gmra.mrb[0].mxu0 %v481
    %v551 = vpop.f32.mrb[0].mxu0
    %v552 = vadd.f32 0.0, %v551
    %v553 = vpop.f32.mrb[0].mxu0
    %554 = vdwg.mxu0
    %v555 = vsel %vm480, %v271, 0
    %v557 = vsel %vm480, %v350, 0
    %559 = vmatprep.subr.mxu0 0.0
    %560 = vmatpush1.xpose.msra.mxu0 %v557
    %561 = vmatprep.subr.mxu0 0.0
    %562 = vmatpush1.xpose.msra.mxu0 0.0
    %563 = vmatprep.subr.mxu0 0.0
    %564 = vmatpush1.xpose.msra.mxu0 0.0
    %565 = vmatprep.subr.mxu0 0.0
    %566 = vmatpush1.xpose.msra.mxu0 0.0
    %567 = vmatprep.subr.mxu0 0.0
    %568 = vmatpush1.xpose.msra.mxu0 0.0
    %569 = vmatprep.subr.mxu0 0.0
    %570 = vmatpush1.xpose.msra.mxu0 0.0
    %571 = vmatprep.subr.mxu0 0.0
    %572 = vmatpush1.xpose.msra.mxu0 0.0
    %573 = vmatprep.subr.mxu0 0.0
    %574 = vmatpush1.xpose.msra.mxu0 0.0
    %575 = vmatprep.subr.mxu0 0.0
    %576 = vmatpush1.xpose.msra.mxu0 0.0
    %577 = vmatprep.subr.mxu0 0.0
    %578 = vmatpush1.xpose.msra.mxu0 0.0
    %579 = vmatprep.subr.mxu0 0.0
    %580 = vmatpush1.xpose.msra.mxu0 0.0
    %581 = vmatprep.subr.mxu0 0.0
    %582 = vmatpush1.xpose.msra.mxu0 0.0
    %583 = vmatprep.subr.mxu0 0.0
    %584 = vmatpush1.xpose.msra.mxu0 0.0
    %585 = vmatprep.subr.mxu0 0.0
    %586 = vmatpush1.xpose.msra.mxu0 0.0
    %587 = vmatprep.subr.mxu0 0.0
    %588 = vmatpush1.xpose.msra.mxu0 0.0
    %589 = vmatprep.subr.mxu0 0.0
    %590 = vmatpush1.xpose.msra.mxu0 0.0
    %591 = vmatprep.subr.mxu0 0.0
    %592 = vmatpush1.xpose.msra.mxu0 0.0
    %593 = vmatprep.subr.mxu0 0.0
    %594 = vmatpush1.xpose.msra.mxu0 0.0
    %595 = vmatprep.subr.mxu0 0.0
    %596 = vmatpush1.xpose.msra.mxu0 0.0
    %597 = vmatprep.subr.mxu0 0.0
    %598 = vmatpush1.xpose.msra.mxu0 0.0
    %599 = vmatprep.subr.mxu0 0.0
    %600 = vmatpush1.xpose.msra.mxu0 0.0
    %601 = vmatprep.subr.mxu0 0.0
    %602 = vmatpush1.xpose.msra.mxu0 0.0
    %603 = vmatprep.subr.mxu0 0.0
    %604 = vmatpush1.xpose.msra.mxu0 0.0
    %605 = vmatprep.subr.mxu0 0.0
    %606 = vmatpush1.xpose.msra.mxu0 0.0
    %607 = vmatprep.subr.mxu0 0.0
    %608 = vmatpush1.xpose.msra.mxu0 0.0
    %609 = vmatprep.subr.mxu0 0.0
    %610 = vmatpush1.xpose.msra.mxu0 0.0
    %611 = vmatprep.subr.mxu0 0.0
    %612 = vmatpush1.xpose.msra.mxu0 0.0
    %613 = vmatprep.subr.mxu0 0.0
    %614 = vmatpush1.xpose.msra.mxu0 0.0
    %615 = vmatprep.subr.mxu0 0.0
    %616 = vmatpush1.xpose.msra.mxu0 0.0
    %617 = vmatprep.subr.mxu0 0.0
    %618 = vmatpush1.xpose.msra.mxu0 0.0
    %619 = vmatprep.subr.mxu0 0.0
    %620 = vmatpush1.xpose.msra.mxu0 0.0
    %621 = vmatprep.subr.mxu0 0.0
    %622 = vmatpush1.xpose.msra.mxu0 0.0
    %623 = vmatprep.mubr.f32.mxu0 0.0
    %624 = vmatmul.mubr.f32.gmra.mrb[0].mxu0 %v555
    %v625 = vpop.f32.mrb[0].mxu0
    %v626 = vadd.f32 0.0, %v625
    %v627 = vpop.f32.mrb[0].mxu0
    %628 = vdwg.mxu0
    %v629 = vsel %vm480, %v435, 0
    %v631 = vsel %vm480, %v449, 0
    %633 = vmatprep.subr.mxu0 0.0
    %634 = vmatpush1.xpose.msra.mxu0 %v631
    %635 = vmatprep.subr.mxu0 0.0
    %636 = vmatpush1.xpose.msra.mxu0 0.0
    %637 = vmatprep.subr.mxu0 0.0
    %638 = vmatpush1.xpose.msra.mxu0 0.0
    %639 = vmatprep.subr.mxu0 0.0
    %640 = vmatpush1.xpose.msra.mxu0 0.0
    %641 = vmatprep.subr.mxu0 0.0
    %642 = vmatpush1.xpose.msra.mxu0 0.0
    %643 = vmatprep.subr.mxu0 0.0
    %644 = vmatpush1.xpose.msra.mxu0 0.0
    %645 = vmatprep.subr.mxu0 0.0
    %646 = vmatpush1.xpose.msra.mxu0 0.0
    %647 = vmatprep.subr.mxu0 0.0
    %648 = vmatpush1.xpose.msra.mxu0 0.0
    %649 = vmatprep.subr.mxu0 0.0
    %650 = vmatpush1.xpose.msra.mxu0 0.0
    %651 = vmatprep.subr.mxu0 0.0
    %652 = vmatpush1.xpose.msra.mxu0 0.0
    %653 = vmatprep.subr.mxu0 0.0
    %654 = vmatpush1.xpose.msra.mxu0 0.0
    %655 = vmatprep.subr.mxu0 0.0
    %656 = vmatpush1.xpose.msra.mxu0 0.0
    %657 = vmatprep.subr.mxu0 0.0
    %658 = vmatpush1.xpose.msra.mxu0 0.0
    %659 = vmatprep.subr.mxu0 0.0
    %660 = vmatpush1.xpose.msra.mxu0 0.0
    %661 = vmatprep.subr.mxu0 0.0
    %662 = vmatpush1.xpose.msra.mxu0 0.0
    %663 = vmatprep.subr.mxu0 0.0
    %664 = vmatpush1.xpose.msra.mxu0 0.0
    %665 = vmatprep.subr.mxu0 0.0
    %666 = vmatpush1.xpose.msra.mxu0 0.0
    %667 = vmatprep.subr.mxu0 0.0
    %668 = vmatpush1.xpose.msra.mxu0 0.0
    %669 = vmatprep.subr.mxu0 0.0
    %670 = vmatpush1.xpose.msra.mxu0 0.0
    %671 = vmatprep.subr.mxu0 0.0
    %672 = vmatpush1.xpose.msra.mxu0 0.0
    %673 = vmatprep.subr.mxu0 0.0
    %674 = vmatpush1.xpose.msra.mxu0 0.0
    %675 = vmatprep.subr.mxu0 0.0
    %676 = vmatpush1.xpose.msra.mxu0 0.0
    %677 = vmatprep.subr.mxu0 0.0
    %678 = vmatpush1.xpose.msra.mxu0 0.0
    %679 = vmatprep.subr.mxu0 0.0
    %680 = vmatpush1.xpose.msra.mxu0 0.0
    %681 = vmatprep.subr.mxu0 0.0
    %682 = vmatpush1.xpose.msra.mxu0 0.0
    %683 = vmatprep.subr.mxu0 0.0
    %684 = vmatpush1.xpose.msra.mxu0 0.0
    %685 = vmatprep.subr.mxu0 0.0
    %686 = vmatpush1.xpose.msra.mxu0 0.0
    %687 = vmatprep.subr.mxu0 0.0
    %688 = vmatpush1.xpose.msra.mxu0 0.0
    %689 = vmatprep.subr.mxu0 0.0
    %690 = vmatpush1.xpose.msra.mxu0 0.0
    %691 = vmatprep.subr.mxu0 0.0
    %692 = vmatpush1.xpose.msra.mxu0 0.0
    %693 = vmatprep.subr.mxu0 0.0
    %694 = vmatpush1.xpose.msra.mxu0 0.0
    %695 = vmatprep.subr.mxu0 0.0
    %696 = vmatpush1.xpose.msra.mxu0 0.0
    %697 = vmatprep.mubr.f32.mxu0 0.0
    %698 = vmatmul.mubr.f32.gmra.mrb[0].mxu0 %v629
    %v699 = vpop.f32.mrb[0].mxu0
    %v700 = vadd.f32 0.0, %v699
    %v701 = vpop.f32.mrb[0].mxu0
    %702 = vdwg.mxu0
    %v703 = vsel %vm480, %v437, 0
    %v705 = vsel %vm480, %v451, 0
    %707 = vmatprep.subr.mxu0 0.0
    %708 = vmatpush1.xpose.msra.mxu0 %v705
    %709 = vmatprep.subr.mxu0 0.0
    %710 = vmatpush1.xpose.msra.mxu0 0.0
    %711 = vmatprep.subr.mxu0 0.0
    %712 = vmatpush1.xpose.msra.mxu0 0.0
    %713 = vmatprep.subr.mxu0 0.0
    %714 = vmatpush1.xpose.msra.mxu0 0.0
    %715 = vmatprep.subr.mxu0 0.0
    %716 = vmatpush1.xpose.msra.mxu0 0.0
    %717 = vmatprep.subr.mxu0 0.0
    %718 = vmatpush1.xpose.msra.mxu0 0.0
    %719 = vmatprep.subr.mxu0 0.0
    %720 = vmatpush1.xpose.msra.mxu0 0.0
    %721 = vmatprep.subr.mxu0 0.0
    %722 = vmatpush1.xpose.msra.mxu0 0.0
    %723 = vmatprep.subr.mxu0 0.0
    %724 = vmatpush1.xpose.msra.mxu0 0.0
    %725 = vmatprep.subr.mxu0 0.0
    %726 = vmatpush1.xpose.msra.mxu0 0.0
    %727 = vmatprep.subr.mxu0 0.0
    %728 = vmatpush1.xpose.msra.mxu0 0.0
    %729 = vmatprep.subr.mxu0 0.0
    %730 = vmatpush1.xpose.msra.mxu0 0.0
    %731 = vmatprep.subr.mxu0 0.0
    %732 = vmatpush1.xpose.msra.mxu0 0.0
    %733 = vmatprep.subr.mxu0 0.0
    %734 = vmatpush1.xpose.msra.mxu0 0.0
    %735 = vmatprep.subr.mxu0 0.0
    %736 = vmatpush1.xpose.msra.mxu0 0.0
    %737 = vmatprep.subr.mxu0 0.0
    %738 = vmatpush1.xpose.msra.mxu0 0.0
    %739 = vmatprep.subr.mxu0 0.0
    %740 = vmatpush1.xpose.msra.mxu0 0.0
    %741 = vmatprep.subr.mxu0 0.0
    %742 = vmatpush1.xpose.msra.mxu0 0.0
    %743 = vmatprep.subr.mxu0 0.0
    %744 = vmatpush1.xpose.msra.mxu0 0.0
    %745 = vmatprep.subr.mxu0 0.0
    %746 = vmatpush1.xpose.msra.mxu0 0.0
    %747 = vmatprep.subr.mxu0 0.0
    %748 = vmatpush1.xpose.msra.mxu0 0.0
    %749 = vmatprep.subr.mxu0 0.0
    %750 = vmatpush1.xpose.msra.mxu0 0.0
    %751 = vmatprep.subr.mxu0 0.0
    %752 = vmatpush1.xpose.msra.mxu0 0.0
    %753 = vmatprep.subr.mxu0 0.0
    %754 = vmatpush1.xpose.msra.mxu0 0.0
    %755 = vmatprep.subr.mxu0 0.0
    %756 = vmatpush1.xpose.msra.mxu0 0.0
    %757 = vmatprep.subr.mxu0 0.0
    %758 = vmatpush1.xpose.msra.mxu0 0.0
    %759 = vmatprep.subr.mxu0 0.0
    %760 = vmatpush1.xpose.msra.mxu0 0.0
    %761 = vmatprep.subr.mxu0 0.0
    %762 = vmatpush1.xpose.msra.mxu0 0.0
    %763 = vmatprep.subr.mxu0 0.0
    %764 = vmatpush1.xpose.msra.mxu0 0.0
    %765 = vmatprep.subr.mxu0 0.0
    %766 = vmatpush1.xpose.msra.mxu0 0.0
    %767 = vmatprep.subr.mxu0 0.0
    %768 = vmatpush1.xpose.msra.mxu0 0.0
    %769 = vmatprep.subr.mxu0 0.0
    %770 = vmatpush1.xpose.msra.mxu0 0.0
    %771 = vmatprep.mubr.f32.mxu0 0.0
    %772 = vmatmul.mubr.f32.gmra.mrb[0].mxu0 %v703
    %v773 = vpop.f32.mrb[0].mxu0
    %v774 = vadd.f32 0.0, %v773
    %v775 = vpop.f32.mrb[0].mxu0
    %776 = vdwg.mxu0
    %v777 = vsel %vm480, %v439, 0
    %v779 = vsel %vm480, %v453, 0
    %781 = vmatprep.subr.mxu0 0.0
    %782 = vmatpush1.xpose.msra.mxu0 %v779
    %783 = vmatprep.subr.mxu0 0.0
    %784 = vmatpush1.xpose.msra.mxu0 0.0
    %785 = vmatprep.subr.mxu0 0.0
    %786 = vmatpush1.xpose.msra.mxu0 0.0
    %787 = vmatprep.subr.mxu0 0.0
    %788 = vmatpush1.xpose.msra.mxu0 0.0
    %789 = vmatprep.subr.mxu0 0.0
    %790 = vmatpush1.xpose.msra.mxu0 0.0
    %791 = vmatprep.subr.mxu0 0.0
    %792 = vmatpush1.xpose.msra.mxu0 0.0
    %793 = vmatprep.subr.mxu0 0.0
    %794 = vmatpush1.xpose.msra.mxu0 0.0
    %795 = vmatprep.subr.mxu0 0.0
    %796 = vmatpush1.xpose.msra.mxu0 0.0
    %797 = vmatprep.subr.mxu0 0.0
    %798 = vmatpush1.xpose.msra.mxu0 0.0
    %799 = vmatprep.subr.mxu0 0.0
    %800 = vmatpush1.xpose.msra.mxu0 0.0
    %801 = vmatprep.subr.mxu0 0.0
    %802 = vmatpush1.xpose.msra.mxu0 0.0
    %803 = vmatprep.subr.mxu0 0.0
    %804 = vmatpush1.xpose.msra.mxu0 0.0
    %805 = vmatprep.subr.mxu0 0.0
    %806 = vmatpush1.xpose.msra.mxu0 0.0
    %807 = vmatprep.subr.mxu0 0.0
    %808 = vmatpush1.xpose.msra.mxu0 0.0
    %809 = vmatprep.subr.mxu0 0.0
    %810 = vmatpush1.xpose.msra.mxu0 0.0
    %811 = vmatprep.subr.mxu0 0.0
    %812 = vmatpush1.xpose.msra.mxu0 0.0
    %813 = vmatprep.subr.mxu0 0.0
    %814 = vmatpush1.xpose.msra.mxu0 0.0
    %815 = vmatprep.subr.mxu0 0.0
    %816 = vmatpush1.xpose.msra.mxu0 0.0
    %817 = vmatprep.subr.mxu0 0.0
    %818 = vmatpush1.xpose.msra.mxu0 0.0
    %819 = vmatprep.subr.mxu0 0.0
    %820 = vmatpush1.xpose.msra.mxu0 0.0
    %821 = vmatprep.subr.mxu0 0.0
    %822 = vmatpush1.xpose.msra.mxu0 0.0
    %823 = vmatprep.subr.mxu0 0.0
    %824 = vmatpush1.xpose.msra.mxu0 0.0
    %825 = vmatprep.subr.mxu0 0.0
    %826 = vmatpush1.xpose.msra.mxu0 0.0
    %827 = vmatprep.subr.mxu0 0.0
    %828 = vmatpush1.xpose.msra.mxu0 0.0
    %829 = vmatprep.subr.mxu0 0.0
    %830 = vmatpush1.xpose.msra.mxu0 0.0
    %831 = vmatprep.subr.mxu0 0.0
    %832 = vmatpush1.xpose.msra.mxu0 0.0
    %833 = vmatprep.subr.mxu0 0.0
    %834 = vmatpush1.xpose.msra.mxu0 0.0
    %835 = vmatprep.subr.mxu0 0.0
    %836 = vmatpush1.xpose.msra.mxu0 0.0
    %837 = vmatprep.subr.mxu0 0.0
    %838 = vmatpush1.xpose.msra.mxu0 0.0
    %839 = vmatprep.subr.mxu0 0.0
    %840 = vmatpush1.xpose.msra.mxu0 0.0
    %841 = vmatprep.subr.mxu0 0.0
    %842 = vmatpush1.xpose.msra.mxu0 0.0
    %843 = vmatprep.subr.mxu0 0.0
    %844 = vmatpush1.xpose.msra.mxu0 0.0
    %845 = vmatprep.mubr.f32.mxu0 0.0
    %846 = vmatmul.mubr.f32.gmra.mrb[0].mxu0 %v777
    %v847 = vpop.f32.mrb[0].mxu0
    %v848 = vadd.f32 0.0, %v847
    %v849 = vpop.f32.mrb[0].mxu0
    %850 = vdwg.mxu0
    %v851 = vsel %vm480, %v441, 0
    %v853 = vsel %vm480, %v455, 0
    %855 = vmatprep.subr.mxu0 0.0
    %856 = vmatpush1.xpose.msra.mxu0 %v853
    %857 = vmatprep.subr.mxu0 0.0
    %858 = vmatpush1.xpose.msra.mxu0 0.0
    %859 = vmatprep.subr.mxu0 0.0
    %860 = vmatpush1.xpose.msra.mxu0 0.0
    %861 = vmatprep.subr.mxu0 0.0
    %862 = vmatpush1.xpose.msra.mxu0 0.0
    %863 = vmatprep.subr.mxu0 0.0
    %864 = vmatpush1.xpose.msra.mxu0 0.0
    %865 = vmatprep.subr.mxu0 0.0
    %866 = vmatpush1.xpose.msra.mxu0 0.0
    %867 = vmatprep.subr.mxu0 0.0
    %868 = vmatpush1.xpose.msra.mxu0 0.0
    %869 = vmatprep.subr.mxu0 0.0
    %870 = vmatpush1.xpose.msra.mxu0 0.0
    %871 = vmatprep.subr.mxu0 0.0
    %872 = vmatpush1.xpose.msra.mxu0 0.0
    %873 = vmatprep.subr.mxu0 0.0
    %874 = vmatpush1.xpose.msra.mxu0 0.0
    %875 = vmatprep.subr.mxu0 0.0
    %876 = vmatpush1.xpose.msra.mxu0 0.0
    %877 = vmatprep.subr.mxu0 0.0
    %878 = vmatpush1.xpose.msra.mxu0 0.0
    %879 = vmatprep.subr.mxu0 0.0
    %880 = vmatpush1.xpose.msra.mxu0 0.0
    %881 = vmatprep.subr.mxu0 0.0
    %882 = vmatpush1.xpose.msra.mxu0 0.0
    %883 = vmatprep.subr.mxu0 0.0
    %884 = vmatpush1.xpose.msra.mxu0 0.0
    %885 = vmatprep.subr.mxu0 0.0
    %886 = vmatpush1.xpose.msra.mxu0 0.0
    %887 = vmatprep.subr.mxu0 0.0
    %888 = vmatpush1.xpose.msra.mxu0 0.0
    %889 = vmatprep.subr.mxu0 0.0
    %890 = vmatpush1.xpose.msra.mxu0 0.0
    %891 = vmatprep.subr.mxu0 0.0
    %892 = vmatpush1.xpose.msra.mxu0 0.0
    %893 = vmatprep.subr.mxu0 0.0
    %894 = vmatpush1.xpose.msra.mxu0 0.0
    %895 = vmatprep.subr.mxu0 0.0
    %896 = vmatpush1.xpose.msra.mxu0 0.0
    %897 = vmatprep.subr.mxu0 0.0
    %898 = vmatpush1.xpose.msra.mxu0 0.0
    %899 = vmatprep.subr.mxu0 0.0
    %900 = vmatpush1.xpose.msra.mxu0 0.0
    %901 = vmatprep.subr.mxu0 0.0
    %902 = vmatpush1.xpose.msra.mxu0 0.0
    %903 = vmatprep.subr.mxu0 0.0
    %904 = vmatpush1.xpose.msra.mxu0 0.0
    %905 = vmatprep.subr.mxu0 0.0
    %906 = vmatpush1.xpose.msra.mxu0 0.0
    %907 = vmatprep.subr.mxu0 0.0
    %908 = vmatpush1.xpose.msra.mxu0 0.0
    %909 = vmatprep.subr.mxu0 0.0
    %910 = vmatpush1.xpose.msra.mxu0 0.0
    %911 = vmatprep.subr.mxu0 0.0
    %912 = vmatpush1.xpose.msra.mxu0 0.0
    %913 = vmatprep.subr.mxu0 0.0
    %914 = vmatpush1.xpose.msra.mxu0 0.0
    %915 = vmatprep.subr.mxu0 0.0
    %916 = vmatpush1.xpose.msra.mxu0 0.0
    %917 = vmatprep.subr.mxu0 0.0
    %918 = vmatpush1.xpose.msra.mxu0 0.0
    %919 = vmatprep.mubr.f32.mxu0 0.0
    %920 = vmatmul.mubr.f32.gmra.mrb[0].mxu0 %v851
    %v921 = vpop.f32.mrb[0].mxu0
    %v922 = vadd.f32 0.0, %v921
    %v923 = vpop.f32.mrb[0].mxu0
    %924 = vdwg.mxu0
    %v925 = vsel %vm480, %v443, 0
    %v927 = vsel %vm480, %v457, 0
    %929 = vmatprep.subr.mxu0 0.0
    %930 = vmatpush1.xpose.msra.mxu0 %v927
    %931 = vmatprep.subr.mxu0 0.0
    %932 = vmatpush1.xpose.msra.mxu0 0.0
    %933 = vmatprep.subr.mxu0 0.0
    %934 = vmatpush1.xpose.msra.mxu0 0.0
    %935 = vmatprep.subr.mxu0 0.0
    %936 = vmatpush1.xpose.msra.mxu0 0.0
    %937 = vmatprep.subr.mxu0 0.0
    %938 = vmatpush1.xpose.msra.mxu0 0.0
    %939 = vmatprep.subr.mxu0 0.0
    %940 = vmatpush1.xpose.msra.mxu0 0.0
    %941 = vmatprep.subr.mxu0 0.0
    %942 = vmatpush1.xpose.msra.mxu0 0.0
    %943 = vmatprep.subr.mxu0 0.0
    %944 = vmatpush1.xpose.msra.mxu0 0.0
    %945 = vmatprep.subr.mxu0 0.0
    %946 = vmatpush1.xpose.msra.mxu0 0.0
    %947 = vmatprep.subr.mxu0 0.0
    %948 = vmatpush1.xpose.msra.mxu0 0.0
    %949 = vmatprep.subr.mxu0 0.0
    %950 = vmatpush1.xpose.msra.mxu0 0.0
    %951 = vmatprep.subr.mxu0 0.0
    %952 = vmatpush1.xpose.msra.mxu0 0.0
    %953 = vmatprep.subr.mxu0 0.0
    %954 = vmatpush1.xpose.msra.mxu0 0.0
    %955 = vmatprep.subr.mxu0 0.0
    %956 = vmatpush1.xpose.msra.mxu0 0.0
    %957 = vmatprep.subr.mxu0 0.0
    %958 = vmatpush1.xpose.msra.mxu0 0.0
    %959 = vmatprep.subr.mxu0 0.0
    %960 = vmatpush1.xpose.msra.mxu0 0.0
    %961 = vmatprep.subr.mxu0 0.0
    %962 = vmatpush1.xpose.msra.mxu0 0.0
    %963 = vmatprep.subr.mxu0 0.0
    %964 = vmatpush1.xpose.msra.mxu0 0.0
    %965 = vmatprep.subr.mxu0 0.0
    %966 = vmatpush1.xpose.msra.mxu0 0.0
    %967 = vmatprep.subr.mxu0 0.0
    %968 = vmatpush1.xpose.msra.mxu0 0.0
    %969 = vmatprep.subr.mxu0 0.0
    %970 = vmatpush1.xpose.msra.mxu0 0.0
    %971 = vmatprep.subr.mxu0 0.0
    %972 = vmatpush1.xpose.msra.mxu0 0.0
    %973 = vmatprep.subr.mxu0 0.0
    %974 = vmatpush1.xpose.msra.mxu0 0.0
    %975 = vmatprep.subr.mxu0 0.0
    %976 = vmatpush1.xpose.msra.mxu0 0.0
    %977 = vmatprep.subr.mxu0 0.0
    %978 = vmatpush1.xpose.msra.mxu0 0.0
    %979 = vmatprep.subr.mxu0 0.0
    %980 = vmatpush1.xpose.msra.mxu0 0.0
    %981 = vmatprep.subr.mxu0 0.0
    %982 = vmatpush1.xpose.msra.mxu0 0.0
    %983 = vmatprep.subr.mxu0 0.0
    %984 = vmatpush1.xpose.msra.mxu0 0.0
    %985 = vmatprep.subr.mxu0 0.0
    %986 = vmatpush1.xpose.msra.mxu0 0.0
    %987 = vmatprep.subr.mxu0 0.0
    %988 = vmatpush1.xpose.msra.mxu0 0.0
    %989 = vmatprep.subr.mxu0 0.0
    %990 = vmatpush1.xpose.msra.mxu0 0.0
    %991 = vmatprep.subr.mxu0 0.0
    %992 = vmatpush1.xpose.msra.mxu0 0.0
    %993 = vmatprep.mubr.f32.mxu0 0.0
    %994 = vmatmul.mubr.f32.gmra.mrb[0].mxu0 %v925
    %v995 = vpop.f32.mrb[0].mxu0
    %v996 = vadd.f32 0.0, %v995
    %v997 = vpop.f32.mrb[0].mxu0
    %998 = vdwg.mxu0
    %v999 = vsel %vm480, %v445, 0
    %v1001 = vsel %vm480, %v459, 0
    %1003 = vmatprep.subr.mxu0 0.0
    %1004 = vmatpush1.xpose.msra.mxu0 %v1001
    %1005 = vmatprep.subr.mxu0 0.0
    %1006 = vmatpush1.xpose.msra.mxu0 0.0
    %1007 = vmatprep.subr.mxu0 0.0
    %1008 = vmatpush1.xpose.msra.mxu0 0.0
    %1009 = vmatprep.subr.mxu0 0.0
    %1010 = vmatpush1.xpose.msra.mxu0 0.0
    %1011 = vmatprep.subr.mxu0 0.0
    %1012 = vmatpush1.xpose.msra.mxu0 0.0
    %1013 = vmatprep.subr.mxu0 0.0
    %1014 = vmatpush1.xpose.msra.mxu0 0.0
    %1015 = vmatprep.subr.mxu0 0.0
    %1016 = vmatpush1.xpose.msra.mxu0 0.0
    %1017 = vmatprep.subr.mxu0 0.0
    %1018 = vmatpush1.xpose.msra.mxu0 0.0
    %1019 = vmatprep.subr.mxu0 0.0
    %1020 = vmatpush1.xpose.msra.mxu0 0.0
    %1021 = vmatprep.subr.mxu0 0.0
    %1022 = vmatpush1.xpose.msra.mxu0 0.0
    %1023 = vmatprep.subr.mxu0 0.0
    %1024 = vmatpush1.xpose.msra.mxu0 0.0
    %1025 = vmatprep.subr.mxu0 0.0
    %1026 = vmatpush1.xpose.msra.mxu0 0.0
    %1027 = vmatprep.subr.mxu0 0.0
    %1028 = vmatpush1.xpose.msra.mxu0 0.0
    %1029 = vmatprep.subr.mxu0 0.0
    %1030 = vmatpush1.xpose.msra.mxu0 0.0
    %1031 = vmatprep.subr.mxu0 0.0
    %1032 = vmatpush1.xpose.msra.mxu0 0.0
    %1033 = vmatprep.subr.mxu0 0.0
    %1034 = vmatpush1.xpose.msra.mxu0 0.0
    %1035 = vmatprep.subr.mxu0 0.0
    %1036 = vmatpush1.xpose.msra.mxu0 0.0
    %1037 = vmatprep.subr.mxu0 0.0
    %1038 = vmatpush1.xpose.msra.mxu0 0.0
    %1039 = vmatprep.subr.mxu0 0.0
    %1040 = vmatpush1.xpose.msra.mxu0 0.0
    %1041 = vmatprep.subr.mxu0 0.0
    %1042 = vmatpush1.xpose.msra.mxu0 0.0
    %1043 = vmatprep.subr.mxu0 0.0
    %1044 = vmatpush1.xpose.msra.mxu0 0.0
    %1045 = vmatprep.subr.mxu0 0.0
    %1046 = vmatpush1.xpose.msra.mxu0 0.0
    %1047 = vmatprep.subr.mxu0 0.0
    %1048 = vmatpush1.xpose.msra.mxu0 0.0
    %1049 = vmatprep.subr.mxu0 0.0
    %1050 = vmatpush1.xpose.msra.mxu0 0.0
    %1051 = vmatprep.subr.mxu0 0.0
    %1052 = vmatpush1.xpose.msra.mxu0 0.0
    %1053 = vmatprep.subr.mxu0 0.0
    %1054 = vmatpush1.xpose.msra.mxu0 0.0
    %1055 = vmatprep.subr.mxu0 0.0
    %1056 = vmatpush1.xpose.msra.mxu0 0.0
    %1057 = vmatprep.subr.mxu0 0.0
    %1058 = vmatpush1.xpose.msra.mxu0 0.0
    %1059 = vmatprep.subr.mxu0 0.0
    %1060 = vmatpush1.xpose.msra.mxu0 0.0
    %1061 = vmatprep.subr.mxu0 0.0
    %1062 = vmatpush1.xpose.msra.mxu0 0.0
    %1063 = vmatprep.subr.mxu0 0.0
    %1064 = vmatpush1.xpose.msra.mxu0 0.0
    %1065 = vmatprep.subr.mxu0 0.0
    %1066 = vmatpush1.xpose.msra.mxu0 0.0
    %1067 = vmatprep.mubr.f32.mxu0 0.0
    %1068 = vmatmul.mubr.f32.gmra.mrb[0].mxu0 %v999
    %v1069 = vpop.f32.mrb[0].mxu0
    %v1070 = vadd.f32 0.0, %v1069
    %v1071 = vpop.f32.mrb[0].mxu0
    %1072 = vdwg.mxu0
    %v1073 = vmul.f32 %v552, 0.35355338
    %v1074 = vmul.f32 %v626, 0.35355338
    %v1075 = vmul.f32 %v700, 0.35355338
    %v1076 = vmul.f32 %v774, 0.35355338
    %v1077 = vmul.f32 %v848, 0.35355338
    %v1078 = vmul.f32 %v922, 0.35355338
    %v1079 = vmul.f32 %v996, 0.35355338
    %v1080 = vmul.f32 %v1070, 0.35355338
    %v1081 = vsel %vm480, %v1073, -inf
    %1082 = vmax.xlane.f32.xlu0 %v1081
    %v1083 = vpop.xlane.xlu0 %1082
    %v1084 = vsel %vm480, %v1074, -inf
    %1085 = vmax.xlane.f32.xlu0 %v1084
    %v1086 = vpop.xlane.xlu0 %1085
    %v1087 = vsel %vm480, %v1075, -inf
    %1088 = vmax.xlane.f32.xlu0 %v1087
    %v1089 = vpop.xlane.xlu0 %1088
    %v1090 = vsel %vm480, %v1076, -inf
    %1091 = vmax.xlane.f32.xlu0 %v1090
    %v1092 = vpop.xlane.xlu0 %1091
    %v1093 = vsel %vm480, %v1077, -inf
    %1094 = vmax.xlane.f32.xlu0 %v1093
    %v1095 = vpop.xlane.xlu0 %1094
    %v1096 = vsel %vm480, %v1078, -inf
    %1097 = vmax.xlane.f32.xlu0 %v1096
    %v1098 = vpop.xlane.xlu0 %1097
    %v1099 = vsel %vm480, %v1079, -inf
    %1100 = vmax.xlane.f32.xlu0 %v1099
    %v1101 = vpop.xlane.xlu0 %1100
    %v1102 = vsel %vm480, %v1080, -inf
    %1103 = vmax.xlane.f32.xlu0 %v1102
    %v1104 = vpop.xlane.xlu0 %1103
    %v1105 = vsub.f32 %v1073, %v1083
    %v1106 = vsub.f32 %v1074, %v1086
    %v1107 = vsub.f32 %v1075, %v1089
    %v1108 = vsub.f32 %v1076, %v1092
    %v1109 = vsub.f32 %v1077, %v1095
    %v1110 = vsub.f32 %v1078, %v1098
    %v1111 = vsub.f32 %v1079, %v1101
    %v1112 = vsub.f32 %v1080, %v1104
    %v1113 = vmul.f32 %v1105, 1.442695
    %v1114 = vpow.pop %v1113
    %v1115 = vmul.f32 %v1106, 1.442695
    %v1116 = vpow.pop %v1115
    %v1117 = vmul.f32 %v1107, 1.442695
    %v1118 = vpow.pop %v1117
    %v1119 = vmul.f32 %v1108, 1.442695
    %v1120 = vpow.pop %v1119
    %v1121 = vmul.f32 %v1109, 1.442695
    %v1122 = vpow.pop %v1121
    %v1123 = vmul.f32 %v1110, 1.442695
    %v1124 = vpow.pop %v1123
    %v1125 = vmul.f32 %v1111, 1.442695
    %v1126 = vpow.pop %v1125
    %v1127 = vmul.f32 %v1112, 1.442695
    %v1128 = vpow.pop %v1127
    %v1129 = vsel %vm480, %v1114, 0.0
    %1130 = vadd.xlane.f32.xlu0 %v1129
    %v1131 = vpop.xlane.xlu0 %1130
    %v1132 = vsel %vm480, %v1116, 0.0
    %1133 = vadd.xlane.f32.xlu0 %v1132
    %v1134 = vpop.xlane.xlu0 %1133
    %v1135 = vsel %vm480, %v1118, 0.0
    %1136 = vadd.xlane.f32.xlu0 %v1135
    %v1137 = vpop.xlane.xlu0 %1136
    %v1138 = vsel %vm480, %v1120, 0.0
    %1139 = vadd.xlane.f32.xlu0 %v1138
    %v1140 = vpop.xlane.xlu0 %1139
    %v1141 = vsel %vm480, %v1122, 0.0
    %1142 = vadd.xlane.f32.xlu0 %v1141
    %v1143 = vpop.xlane.xlu0 %1142
    %v1144 = vsel %vm480, %v1124, 0.0
    %1145 = vadd.xlane.f32.xlu0 %v1144
    %v1146 = vpop.xlane.xlu0 %1145
    %v1147 = vsel %vm480, %v1126, 0.0
    %1148 = vadd.xlane.f32.xlu0 %v1147
    %v1149 = vpop.xlane.xlu0 %1148
    %v1150 = vsel %vm480, %v1128, 0.0
    %1151 = vadd.xlane.f32.xlu0 %v1150
    %v1152 = vpop.xlane.xlu0 %1151
    %v1153 = vrcp.pop %v1131
    %v1154 = vrcp.pop %v1134
    %v1155 = vrcp.pop %v1137
    %v1156 = vrcp.pop %v1140
    %v1157 = vrcp.pop %v1143
    %v1158 = vrcp.pop %v1146
    %v1159 = vrcp.pop %v1149
    %v1160 = vrcp.pop %v1152
    %v1161 = vmul.f32 %v1114, %v1153
    %v1162 = vmul.f32 %v1116, %v1154
    %v1163 = vmul.f32 %v1118, %v1155
    %v1164 = vmul.f32 %v1120, %v1156
    %v1165 = vmul.f32 %v1122, %v1157
    %v1166 = vmul.f32 %v1124, %v1158
    %v1167 = vmul.f32 %v1126, %v1159
    %v1168 = vmul.f32 %v1128, %v1160
    %v1170 = vsel %vm480, %v1161, 0
    %1172 = vmatprep.subr.mxu0 0.0
    %1173 = vmatpush1.msra.mxu0 %v424
    %1174 = vmatprep.subr.mxu0 0.0
    %1175 = vmatpush1.msra.mxu0 0.0
    %1176 = vmatprep.subr.mxu0 0.0
    %1177 = vmatpush1.msra.mxu0 0.0
    %1178 = vmatprep.subr.mxu0 0.0
    %1179 = vmatpush1.msra.mxu0 0.0
    %1180 = vmatprep.subr.mxu0 0.0
    %1181 = vmatpush1.msra.mxu0 0.0
    %1182 = vmatprep.subr.mxu0 0.0
    %1183 = vmatpush1.msra.mxu0 0.0
    %1184 = vmatprep.subr.mxu0 0.0
    %1185 = vmatpush1.msra.mxu0 0.0
    %1186 = vmatprep.subr.mxu0 0.0
    %1187 = vmatpush1.msra.mxu0 0.0
    %1188 = vmatprep.subr.mxu0 0.0
    %1189 = vmatpush1.msra.mxu0 0.0
    %1190 = vmatprep.subr.mxu0 0.0
    %1191 = vmatpush1.msra.mxu0 0.0
    %1192 = vmatprep.subr.mxu0 0.0
    %1193 = vmatpush1.msra.mxu0 0.0
    %1194 = vmatprep.subr.mxu0 0.0
    %1195 = vmatpush1.msra.mxu0 0.0
    %1196 = vmatprep.subr.mxu0 0.0
    %1197 = vmatpush1.msra.mxu0 0.0
    %1198 = vmatprep.subr.mxu0 0.0
    %1199 = vmatpush1.msra.mxu0 0.0
    %1200 = vmatprep.subr.mxu0 0.0
    %1201 = vmatpush1.msra.mxu0 0.0
    %1202 = vmatprep.subr.mxu0 0.0
    %1203 = vmatpush1.msra.mxu0 0.0
    %1204 = vmatprep.subr.mxu0 0.0
    %1205 = vmatpush1.msra.mxu0 0.0
    %1206 = vmatprep.subr.mxu0 0.0
    %1207 = vmatpush1.msra.mxu0 0.0
    %1208 = vmatprep.subr.mxu0 0.0
    %1209 = vmatpush1.msra.mxu0 0.0
    %1210 = vmatprep.subr.mxu0 0.0
    %1211 = vmatpush1.msra.mxu0 0.0
    %1212 = vmatprep.subr.mxu0 0.0
    %1213 = vmatpush1.msra.mxu0 0.0
    %1214 = vmatprep.subr.mxu0 0.0
    %1215 = vmatpush1.msra.mxu0 0.0
    %1216 = vmatprep.subr.mxu0 0.0
    %1217 = vmatpush1.msra.mxu0 0.0
    %1218 = vmatprep.subr.mxu0 0.0
    %1219 = vmatpush1.msra.mxu0 0.0
    %1220 = vmatprep.subr.mxu0 0.0
    %1221 = vmatpush1.msra.mxu0 0.0
    %1222 = vmatprep.subr.mxu0 0.0
    %1223 = vmatpush1.msra.mxu0 0.0
    %1224 = vmatprep.subr.mxu0 0.0
    %1225 = vmatpush1.msra.mxu0 0.0
    %1226 = vmatprep.subr.mxu0 0.0
    %1227 = vmatpush1.msra.mxu0 0.0
    %1228 = vmatprep.subr.mxu0 0.0
    %1229 = vmatpush1.msra.mxu0 0.0
    %1230 = vmatprep.subr.mxu0 0.0
    %1231 = vmatpush1.msra.mxu0 0.0
    %1232 = vmatprep.subr.mxu0 0.0
    %1233 = vmatpush1.msra.mxu0 0.0
    %1234 = vmatprep.subr.mxu0 0.0
    %1235 = vmatpush1.msra.mxu0 0.0
    %1236 = vmatprep.mubr.f32.mxu0 0.0
    %1237 = vmatmul.mubr.f32.gmra.mrb[0].mxu0 %v1170
    %v1238 = vpop.f32.mrb[0].mxu0
    %v1239 = vadd.f32 0.0, %v1238
    %v1240 = vpop.f32.mrb[0].mxu0
    %1241 = vdwg.mxu0
    %v1243 = vsel %vm480, %v1162, 0
    %1245 = vmatprep.subr.mxu0 0.0
    %1246 = vmatpush1.msra.mxu0 %v429
    %1247 = vmatprep.subr.mxu0 0.0
    %1248 = vmatpush1.msra.mxu0 0.0
    %1249 = vmatprep.subr.mxu0 0.0
    %1250 = vmatpush1.msra.mxu0 0.0
    %1251 = vmatprep.subr.mxu0 0.0
    %1252 = vmatpush1.msra.mxu0 0.0
    %1253 = vmatprep.subr.mxu0 0.0
    %1254 = vmatpush1.msra.mxu0 0.0
    %1255 = vmatprep.subr.mxu0 0.0
    %1256 = vmatpush1.msra.mxu0 0.0
    %1257 = vmatprep.subr.mxu0 0.0
    %1258 = vmatpush1.msra.mxu0 0.0
    %1259 = vmatprep.subr.mxu0 0.0
    %1260 = vmatpush1.msra.mxu0 0.0
    %1261 = vmatprep.subr.mxu0 0.0
    %1262 = vmatpush1.msra.mxu0 0.0
    %1263 = vmatprep.subr.mxu0 0.0
    %1264 = vmatpush1.msra.mxu0 0.0
    %1265 = vmatprep.subr.mxu0 0.0
    %1266 = vmatpush1.msra.mxu0 0.0
    %1267 = vmatprep.subr.mxu0 0.0
    %1268 = vmatpush1.msra.mxu0 0.0
    %1269 = vmatprep.subr.mxu0 0.0
    %1270 = vmatpush1.msra.mxu0 0.0
    %1271 = vmatprep.subr.mxu0 0.0
    %1272 = vmatpush1.msra.mxu0 0.0
    %1273 = vmatprep.subr.mxu0 0.0
    %1274 = vmatpush1.msra.mxu0 0.0
    %1275 = vmatprep.subr.mxu0 0.0
    %1276 = vmatpush1.msra.mxu0 0.0
    %1277 = vmatprep.subr.mxu0 0.0
    %1278 = vmatpush1.msra.mxu0 0.0
    %1279 = vmatprep.subr.mxu0 0.0
    %1280 = vmatpush1.msra.mxu0 0.0
    %1281 = vmatprep.subr.mxu0 0.0
    %1282 = vmatpush1.msra.mxu0 0.0
    %1283 = vmatprep.subr.mxu0 0.0
    %1284 = vmatpush1.msra.mxu0 0.0
    %1285 = vmatprep.subr.mxu0 0.0
    %1286 = vmatpush1.msra.mxu0 0.0
    %1287 = vmatprep.subr.mxu0 0.0
    %1288 = vmatpush1.msra.mxu0 0.0
    %1289 = vmatprep.subr.mxu0 0.0
    %1290 = vmatpush1.msra.mxu0 0.0
    %1291 = vmatprep.subr.mxu0 0.0
    %1292 = vmatpush1.msra.mxu0 0.0
    %1293 = vmatprep.subr.mxu0 0.0
    %1294 = vmatpush1.msra.mxu0 0.0
    %1295 = vmatprep.subr.mxu0 0.0
    %1296 = vmatpush1.msra.mxu0 0.0
    %1297 = vmatprep.subr.mxu0 0.0
    %1298 = vmatpush1.msra.mxu0 0.0
    %1299 = vmatprep.subr.mxu0 0.0
    %1300 = vmatpush1.msra.mxu0 0.0
    %1301 = vmatprep.subr.mxu0 0.0
    %1302 = vmatpush1.msra.mxu0 0.0
    %1303 = vmatprep.subr.mxu0 0.0
    %1304 = vmatpush1.msra.mxu0 0.0
    %1305 = vmatprep.subr.mxu0 0.0
    %1306 = vmatpush1.msra.mxu0 0.0
    %1307 = vmatprep.subr.mxu0 0.0
    %1308 = vmatpush1.msra.mxu0 0.0
    %1309 = vmatprep.mubr.f32.mxu0 0.0
    %1310 = vmatmul.mubr.f32.gmra.mrb[0].mxu0 %v1243
    %v1311 = vpop.f32.mrb[0].mxu0
    %v1312 = vadd.f32 0.0, %v1311
    %v1313 = vpop.f32.mrb[0].mxu0
    %1314 = vdwg.mxu0
    %v1316 = vsel %vm480, %v1163, 0
    %1318 = vmatprep.subr.mxu0 0.0
    %1319 = vmatpush1.msra.mxu0 %v463
    %1320 = vmatprep.subr.mxu0 0.0
    %1321 = vmatpush1.msra.mxu0 0.0
    %1322 = vmatprep.subr.mxu0 0.0
    %1323 = vmatpush1.msra.mxu0 0.0
    %1324 = vmatprep.subr.mxu0 0.0
    %1325 = vmatpush1.msra.mxu0 0.0
    %1326 = vmatprep.subr.mxu0 0.0
    %1327 = vmatpush1.msra.mxu0 0.0
    %1328 = vmatprep.subr.mxu0 0.0
    %1329 = vmatpush1.msra.mxu0 0.0
    %1330 = vmatprep.subr.mxu0 0.0
    %1331 = vmatpush1.msra.mxu0 0.0
    %1332 = vmatprep.subr.mxu0 0.0
    %1333 = vmatpush1.msra.mxu0 0.0
    %1334 = vmatprep.subr.mxu0 0.0
    %1335 = vmatpush1.msra.mxu0 0.0
    %1336 = vmatprep.subr.mxu0 0.0
    %1337 = vmatpush1.msra.mxu0 0.0
    %1338 = vmatprep.subr.mxu0 0.0
    %1339 = vmatpush1.msra.mxu0 0.0
    %1340 = vmatprep.subr.mxu0 0.0
    %1341 = vmatpush1.msra.mxu0 0.0
    %1342 = vmatprep.subr.mxu0 0.0
    %1343 = vmatpush1.msra.mxu0 0.0
    %1344 = vmatprep.subr.mxu0 0.0
    %1345 = vmatpush1.msra.mxu0 0.0
    %1346 = vmatprep.subr.mxu0 0.0
    %1347 = vmatpush1.msra.mxu0 0.0
    %1348 = vmatprep.subr.mxu0 0.0
    %1349 = vmatpush1.msra.mxu0 0.0
    %1350 = vmatprep.subr.mxu0 0.0
    %1351 = vmatpush1.msra.mxu0 0.0
    %1352 = vmatprep.subr.mxu0 0.0
    %1353 = vmatpush1.msra.mxu0 0.0
    %1354 = vmatprep.subr.mxu0 0.0
    %1355 = vmatpush1.msra.mxu0 0.0
    %1356 = vmatprep.subr.mxu0 0.0
    %1357 = vmatpush1.msra.mxu0 0.0
    %1358 = vmatprep.subr.mxu0 0.0
    %1359 = vmatpush1.msra.mxu0 0.0
    %1360 = vmatprep.subr.mxu0 0.0
    %1361 = vmatpush1.msra.mxu0 0.0
    %1362 = vmatprep.subr.mxu0 0.0
    %1363 = vmatpush1.msra.mxu0 0.0
    %1364 = vmatprep.subr.mxu0 0.0
    %1365 = vmatpush1.msra.mxu0 0.0
    %1366 = vmatprep.subr.mxu0 0.0
    %1367 = vmatpush1.msra.mxu0 0.0
    %1368 = vmatprep.subr.mxu0 0.0
    %1369 = vmatpush1.msra.mxu0 0.0
    %1370 = vmatprep.subr.mxu0 0.0
    %1371 = vmatpush1.msra.mxu0 0.0
    %1372 = vmatprep.subr.mxu0 0.0
    %1373 = vmatpush1.msra.mxu0 0.0
    %1374 = vmatprep.subr.mxu0 0.0
    %1375 = vmatpush1.msra.mxu0 0.0
    %1376 = vmatprep.subr.mxu0 0.0
    %1377 = vmatpush1.msra.mxu0 0.0
    %1378 = vmatprep.subr.mxu0 0.0
    %1379 = vmatpush1.msra.mxu0 0.0
    %1380 = vmatprep.subr.mxu0 0.0
    %1381 = vmatpush1.msra.mxu0 0.0
    %1382 = vmatprep.mubr.f32.mxu0 0.0
    %1383 = vmatmul.mubr.f32.gmra.mrb[0].mxu0 %v1316
    %v1384 = vpop.f32.mrb[0].mxu0
    %v1385 = vadd.f32 0.0, %v1384
    %v1386 = vpop.f32.mrb[0].mxu0
    %1387 = vdwg.mxu0
    %v1389 = vsel %vm480, %v1164, 0
    %1391 = vmatprep.subr.mxu0 0.0
    %1392 = vmatpush1.msra.mxu0 %v465
    %1393 = vmatprep.subr.mxu0 0.0
    %1394 = vmatpush1.msra.mxu0 0.0
    %1395 = vmatprep.subr.mxu0 0.0
    %1396 = vmatpush1.msra.mxu0 0.0
    %1397 = vmatprep.subr.mxu0 0.0
    %1398 = vmatpush1.msra.mxu0 0.0
    %1399 = vmatprep.subr.mxu0 0.0
    %1400 = vmatpush1.msra.mxu0 0.0
    %1401 = vmatprep.subr.mxu0 0.0
    %1402 = vmatpush1.msra.mxu0 0.0
    %1403 = vmatprep.subr.mxu0 0.0
    %1404 = vmatpush1.msra.mxu0 0.0
    %1405 = vmatprep.subr.mxu0 0.0
    %1406 = vmatpush1.msra.mxu0 0.0
    %1407 = vmatprep.subr.mxu0 0.0
    %1408 = vmatpush1.msra.mxu0 0.0
    %1409 = vmatprep.subr.mxu0 0.0
    %1410 = vmatpush1.msra.mxu0 0.0
    %1411 = vmatprep.subr.mxu0 0.0
    %1412 = vmatpush1.msra.mxu0 0.0
    %1413 = vmatprep.subr.mxu0 0.0
    %1414 = vmatpush1.msra.mxu0 0.0
    %1415 = vmatprep.subr.mxu0 0.0
    %1416 = vmatpush1.msra.mxu0 0.0
    %1417 = vmatprep.subr.mxu0 0.0
    %1418 = vmatpush1.msra.mxu0 0.0
    %1419 = vmatprep.subr.mxu0 0.0
    %1420 = vmatpush1.msra.mxu0 0.0
    %1421 = vmatprep.subr.mxu0 0.0
    %1422 = vmatpush1.msra.mxu0 0.0
    %1423 = vmatprep.subr.mxu0 0.0
    %1424 = vmatpush1.msra.mxu0 0.0
    %1425 = vmatprep.subr.mxu0 0.0
    %1426 = vmatpush1.msra.mxu0 0.0
    %1427 = vmatprep.subr.mxu0 0.0
    %1428 = vmatpush1.msra.mxu0 0.0
    %1429 = vmatprep.subr.mxu0 0.0
    %1430 = vmatpush1.msra.mxu0 0.0
    %1431 = vmatprep.subr.mxu0 0.0
    %1432 = vmatpush1.msra.mxu0 0.0
    %1433 = vmatprep.subr.mxu0 0.0
    %1434 = vmatpush1.msra.mxu0 0.0
    %1435 = vmatprep.subr.mxu0 0.0
    %1436 = vmatpush1.msra.mxu0 0.0
    %1437 = vmatprep.subr.mxu0 0.0
    %1438 = vmatpush1.msra.mxu0 0.0
    %1439 = vmatprep.subr.mxu0 0.0
    %1440 = vmatpush1.msra.mxu0 0.0
    %1441 = vmatprep.subr.mxu0 0.0
    %1442 = vmatpush1.msra.mxu0 0.0
    %1443 = vmatprep.subr.mxu0 0.0
    %1444 = vmatpush1.msra.mxu0 0.0
    %1445 = vmatprep.subr.mxu0 0.0
    %1446 = vmatpush1.msra.mxu0 0.0
    %1447 = vmatprep.subr.mxu0 0.0
    %1448 = vmatpush1.msra.mxu0 0.0
    %1449 = vmatprep.subr.mxu0 0.0
    %1450 = vmatpush1.msra.mxu0 0.0
    %1451 = vmatprep.subr.mxu0 0.0
    %1452 = vmatpush1.msra.mxu0 0.0
    %1453 = vmatprep.subr.mxu0 0.0
    %1454 = vmatpush1.msra.mxu0 0.0
    %1455 = vmatprep.mubr.f32.mxu0 0.0
    %1456 = vmatmul.mubr.f32.gmra.mrb[0].mxu0 %v1389
    %v1457 = vpop.f32.mrb[0].mxu0
    %v1458 = vadd.f32 0.0, %v1457
    %v1459 = vpop.f32.mrb[0].mxu0
    %1460 = vdwg.mxu0
    %v1462 = vsel %vm480, %v1165, 0
    %1464 = vmatprep.subr.mxu0 0.0
    %1465 = vmatpush1.msra.mxu0 %v469
    %1466 = vmatprep.subr.mxu0 0.0
    %1467 = vmatpush1.msra.mxu0 0.0
    %1468 = vmatprep.subr.mxu0 0.0
    %1469 = vmatpush1.msra.mxu0 0.0
    %1470 = vmatprep.subr.mxu0 0.0
    %1471 = vmatpush1.msra.mxu0 0.0
    %1472 = vmatprep.subr.mxu0 0.0
    %1473 = vmatpush1.msra.mxu0 0.0
    %1474 = vmatprep.subr.mxu0 0.0
    %1475 = vmatpush1.msra.mxu0 0.0
    %1476 = vmatprep.subr.mxu0 0.0
    %1477 = vmatpush1.msra.mxu0 0.0
    %1478 = vmatprep.subr.mxu0 0.0
    %1479 = vmatpush1.msra.mxu0 0.0
    %1480 = vmatprep.subr.mxu0 0.0
    %1481 = vmatpush1.msra.mxu0 0.0
    %1482 = vmatprep.subr.mxu0 0.0
    %1483 = vmatpush1.msra.mxu0 0.0
    %1484 = vmatprep.subr.mxu0 0.0
    %1485 = vmatpush1.msra.mxu0 0.0
    %1486 = vmatprep.subr.mxu0 0.0
    %1487 = vmatpush1.msra.mxu0 0.0
    %1488 = vmatprep.subr.mxu0 0.0
    %1489 = vmatpush1.msra.mxu0 0.0
    %1490 = vmatprep.subr.mxu0 0.0
    %1491 = vmatpush1.msra.mxu0 0.0
    %1492 = vmatprep.subr.mxu0 0.0
    %1493 = vmatpush1.msra.mxu0 0.0
    %1494 = vmatprep.subr.mxu0 0.0
    %1495 = vmatpush1.msra.mxu0 0.0
    %1496 = vmatprep.subr.mxu0 0.0
    %1497 = vmatpush1.msra.mxu0 0.0
    %1498 = vmatprep.subr.mxu0 0.0
    %1499 = vmatpush1.msra.mxu0 0.0
    %1500 = vmatprep.subr.mxu0 0.0
    %1501 = vmatpush1.msra.mxu0 0.0
    %1502 = vmatprep.subr.mxu0 0.0
    %1503 = vmatpush1.msra.mxu0 0.0
    %1504 = vmatprep.subr.mxu0 0.0
    %1505 = vmatpush1.msra.mxu0 0.0
    %1506 = vmatprep.subr.mxu0 0.0
    %1507 = vmatpush1.msra.mxu0 0.0
    %1508 = vmatprep.subr.mxu0 0.0
    %1509 = vmatpush1.msra.mxu0 0.0
    %1510 = vmatprep.subr.mxu0 0.0
    %1511 = vmatpush1.msra.mxu0 0.0
    %1512 = vmatprep.subr.mxu0 0.0
    %1513 = vmatpush1.msra.mxu0 0.0
    %1514 = vmatprep.subr.mxu0 0.0
    %1515 = vmatpush1.msra.mxu0 0.0
    %1516 = vmatprep.subr.mxu0 0.0
    %1517 = vmatpush1.msra.mxu0 0.0
    %1518 = vmatprep.subr.mxu0 0.0
    %1519 = vmatpush1.msra.mxu0 0.0
    %1520 = vmatprep.subr.mxu0 0.0
    %1521 = vmatpush1.msra.mxu0 0.0
    %1522 = vmatprep.subr.mxu0 0.0
    %1523 = vmatpush1.msra.mxu0 0.0
    %1524 = vmatprep.subr.mxu0 0.0
    %1525 = vmatpush1.msra.mxu0 0.0
    %1526 = vmatprep.subr.mxu0 0.0
    %1527 = vmatpush1.msra.mxu0 0.0
    %1528 = vmatprep.mubr.f32.mxu0 0.0
    %1529 = vmatmul.mubr.f32.gmra.mrb[0].mxu0 %v1462
    %v1530 = vpop.f32.mrb[0].mxu0
    %v1531 = vadd.f32 0.0, %v1530
    %v1532 = vpop.f32.mrb[0].mxu0
    %1533 = vdwg.mxu0
    %v1535 = vsel %vm480, %v1166, 0
    %1537 = vmatprep.subr.mxu0 0.0
    %1538 = vmatpush1.msra.mxu0 %v471
    %1539 = vmatprep.subr.mxu0 0.0
    %1540 = vmatpush1.msra.mxu0 0.0
    %1541 = vmatprep.subr.mxu0 0.0
    %1542 = vmatpush1.msra.mxu0 0.0
    %1543 = vmatprep.subr.mxu0 0.0
    %1544 = vmatpush1.msra.mxu0 0.0
    %1545 = vmatprep.subr.mxu0 0.0
    %1546 = vmatpush1.msra.mxu0 0.0
    %1547 = vmatprep.subr.mxu0 0.0
    %1548 = vmatpush1.msra.mxu0 0.0
    %1549 = vmatprep.subr.mxu0 0.0
    %1550 = vmatpush1.msra.mxu0 0.0
    %1551 = vmatprep.subr.mxu0 0.0
    %1552 = vmatpush1.msra.mxu0 0.0
    %1553 = vmatprep.subr.mxu0 0.0
    %1554 = vmatpush1.msra.mxu0 0.0
    %1555 = vmatprep.subr.mxu0 0.0
    %1556 = vmatpush1.msra.mxu0 0.0
    %1557 = vmatprep.subr.mxu0 0.0
    %1558 = vmatpush1.msra.mxu0 0.0
    %1559 = vmatprep.subr.mxu0 0.0
    %1560 = vmatpush1.msra.mxu0 0.0
    %1561 = vmatprep.subr.mxu0 0.0
    %1562 = vmatpush1.msra.mxu0 0.0
    %1563 = vmatprep.subr.mxu0 0.0
    %1564 = vmatpush1.msra.mxu0 0.0
    %1565 = vmatprep.subr.mxu0 0.0
    %1566 = vmatpush1.msra.mxu0 0.0
    %1567 = vmatprep.subr.mxu0 0.0
    %1568 = vmatpush1.msra.mxu0 0.0
    %1569 = vmatprep.subr.mxu0 0.0
    %1570 = vmatpush1.msra.mxu0 0.0
    %1571 = vmatprep.subr.mxu0 0.0
    %1572 = vmatpush1.msra.mxu0 0.0
    %1573 = vmatprep.subr.mxu0 0.0
    %1574 = vmatpush1.msra.mxu0 0.0
    %1575 = vmatprep.subr.mxu0 0.0
    %1576 = vmatpush1.msra.mxu0 0.0
    %1577 = vmatprep.subr.mxu0 0.0
    %1578 = vmatpush1.msra.mxu0 0.0
    %1579 = vmatprep.subr.mxu0 0.0
    %1580 = vmatpush1.msra.mxu0 0.0
    %1581 = vmatprep.subr.mxu0 0.0
    %1582 = vmatpush1.msra.mxu0 0.0
    %1583 = vmatprep.subr.mxu0 0.0
    %1584 = vmatpush1.msra.mxu0 0.0
    %1585 = vmatprep.subr.mxu0 0.0
    %1586 = vmatpush1.msra.mxu0 0.0
    %1587 = vmatprep.subr.mxu0 0.0
    %1588 = vmatpush1.msra.mxu0 0.0
    %1589 = vmatprep.subr.mxu0 0.0
    %1590 = vmatpush1.msra.mxu0 0.0
    %1591 = vmatprep.subr.mxu0 0.0
    %1592 = vmatpush1.msra.mxu0 0.0
    %1593 = vmatprep.subr.mxu0 0.0
    %1594 = vmatpush1.msra.mxu0 0.0
    %1595 = vmatprep.subr.mxu0 0.0
    %1596 = vmatpush1.msra.mxu0 0.0
    %1597 = vmatprep.subr.mxu0 0.0
    %1598 = vmatpush1.msra.mxu0 0.0
    %1599 = vmatprep.subr.mxu0 0.0
    %1600 = vmatpush1.msra.mxu0 0.0
    %1601 = vmatprep.mubr.f32.mxu0 0.0
    %1602 = vmatmul.mubr.f32.gmra.mrb[0].mxu0 %v1535
    %v1603 = vpop.f32.mrb[0].mxu0
    %v1604 = vadd.f32 0.0, %v1603
    %v1605 = vpop.f32.mrb[0].mxu0
    %1606 = vdwg.mxu0
    %v1608 = vsel %vm480, %v1167, 0
    %1610 = vmatprep.subr.mxu0 0.0
    %1611 = vmatpush1.msra.mxu0 %v475
    %1612 = vmatprep.subr.mxu0 0.0
    %1613 = vmatpush1.msra.mxu0 0.0
    %1614 = vmatprep.subr.mxu0 0.0
    %1615 = vmatpush1.msra.mxu0 0.0
    %1616 = vmatprep.subr.mxu0 0.0
    %1617 = vmatpush1.msra.mxu0 0.0
    %1618 = vmatprep.subr.mxu0 0.0
    %1619 = vmatpush1.msra.mxu0 0.0
    %1620 = vmatprep.subr.mxu0 0.0
    %1621 = vmatpush1.msra.mxu0 0.0
    %1622 = vmatprep.subr.mxu0 0.0
    %1623 = vmatpush1.msra.mxu0 0.0
    %1624 = vmatprep.subr.mxu0 0.0
    %1625 = vmatpush1.msra.mxu0 0.0
    %1626 = vmatprep.subr.mxu0 0.0
    %1627 = vmatpush1.msra.mxu0 0.0
    %1628 = vmatprep.subr.mxu0 0.0
    %1629 = vmatpush1.msra.mxu0 0.0
    %1630 = vmatprep.subr.mxu0 0.0
    %1631 = vmatpush1.msra.mxu0 0.0
    %1632 = vmatprep.subr.mxu0 0.0
    %1633 = vmatpush1.msra.mxu0 0.0
    %1634 = vmatprep.subr.mxu0 0.0
    %1635 = vmatpush1.msra.mxu0 0.0
    %1636 = vmatprep.subr.mxu0 0.0
    %1637 = vmatpush1.msra.mxu0 0.0
    %1638 = vmatprep.subr.mxu0 0.0
    %1639 = vmatpush1.msra.mxu0 0.0
    %1640 = vmatprep.subr.mxu0 0.0
    %1641 = vmatpush1.msra.mxu0 0.0
    %1642 = vmatprep.subr.mxu0 0.0
    %1643 = vmatpush1.msra.mxu0 0.0
    %1644 = vmatprep.subr.mxu0 0.0
    %1645 = vmatpush1.msra.mxu0 0.0
    %1646 = vmatprep.subr.mxu0 0.0
    %1647 = vmatpush1.msra.mxu0 0.0
    %1648 = vmatprep.subr.mxu0 0.0
    %1649 = vmatpush1.msra.mxu0 0.0
    %1650 = vmatprep.subr.mxu0 0.0
    %1651 = vmatpush1.msra.mxu0 0.0
    %1652 = vmatprep.subr.mxu0 0.0
    %1653 = vmatpush1.msra.mxu0 0.0
    %1654 = vmatprep.subr.mxu0 0.0
    %1655 = vmatpush1.msra.mxu0 0.0
    %1656 = vmatprep.subr.mxu0 0.0
    %1657 = vmatpush1.msra.mxu0 0.0
    %1658 = vmatprep.subr.mxu0 0.0
    %1659 = vmatpush1.msra.mxu0 0.0
    %1660 = vmatprep.subr.mxu0 0.0
    %1661 = vmatpush1.msra.mxu0 0.0
    %1662 = vmatprep.subr.mxu0 0.0
    %1663 = vmatpush1.msra.mxu0 0.0
    %1664 = vmatprep.subr.mxu0 0.0
    %1665 = vmatpush1.msra.mxu0 0.0
    %1666 = vmatprep.subr.mxu0 0.0
    %1667 = vmatpush1.msra.mxu0 0.0
    %1668 = vmatprep.subr.mxu0 0.0
    %1669 = vmatpush1.msra.mxu0 0.0
    %1670 = vmatprep.subr.mxu0 0.0
    %1671 = vmatpush1.msra.mxu0 0.0
    %1672 = vmatprep.subr.mxu0 0.0
    %1673 = vmatpush1.msra.mxu0 0.0
    %1674 = vmatprep.mubr.f32.mxu0 0.0
    %1675 = vmatmul.mubr.f32.gmra.mrb[0].mxu0 %v1608
    %v1676 = vpop.f32.mrb[0].mxu0
    %v1677 = vadd.f32 0.0, %v1676
    %v1678 = vpop.f32.mrb[0].mxu0
    %1679 = vdwg.mxu0
    %v1681 = vsel %vm480, %v1168, 0
    %1683 = vmatprep.subr.mxu0 0.0
    %1684 = vmatpush1.msra.mxu0 %v477
    %1685 = vmatprep.subr.mxu0 0.0
    %1686 = vmatpush1.msra.mxu0 0.0
    %1687 = vmatprep.subr.mxu0 0.0
    %1688 = vmatpush1.msra.mxu0 0.0
    %1689 = vmatprep.subr.mxu0 0.0
    %1690 = vmatpush1.msra.mxu0 0.0
    %1691 = vmatprep.subr.mxu0 0.0
    %1692 = vmatpush1.msra.mxu0 0.0
    %1693 = vmatprep.subr.mxu0 0.0
    %1694 = vmatpush1.msra.mxu0 0.0
    %1695 = vmatprep.subr.mxu0 0.0
    %1696 = vmatpush1.msra.mxu0 0.0
    %1697 = vmatprep.subr.mxu0 0.0
    %1698 = vmatpush1.msra.mxu0 0.0
    %1699 = vmatprep.subr.mxu0 0.0
    %1700 = vmatpush1.msra.mxu0 0.0
    %1701 = vmatprep.subr.mxu0 0.0
    %1702 = vmatpush1.msra.mxu0 0.0
    %1703 = vmatprep.subr.mxu0 0.0
    %1704 = vmatpush1.msra.mxu0 0.0
    %1705 = vmatprep.subr.mxu0 0.0
    %1706 = vmatpush1.msra.mxu0 0.0
    %1707 = vmatprep.subr.mxu0 0.0
    %1708 = vmatpush1.msra.mxu0 0.0
    %1709 = vmatprep.subr.mxu0 0.0
    %1710 = vmatpush1.msra.mxu0 0.0
    %1711 = vmatprep.subr.mxu0 0.0
    %1712 = vmatpush1.msra.mxu0 0.0
    %1713 = vmatprep.subr.mxu0 0.0
    %1714 = vmatpush1.msra.mxu0 0.0
    %1715 = vmatprep.subr.mxu0 0.0
    %1716 = vmatpush1.msra.mxu0 0.0
    %1717 = vmatprep.subr.mxu0 0.0
    %1718 = vmatpush1.msra.mxu0 0.0
    %1719 = vmatprep.subr.mxu0 0.0
    %1720 = vmatpush1.msra.mxu0 0.0
    %1721 = vmatprep.subr.mxu0 0.0
    %1722 = vmatpush1.msra.mxu0 0.0
    %1723 = vmatprep.subr.mxu0 0.0
    %1724 = vmatpush1.msra.mxu0 0.0
    %1725 = vmatprep.subr.mxu0 0.0
    %1726 = vmatpush1.msra.mxu0 0.0
    %1727 = vmatprep.subr.mxu0 0.0
    %1728 = vmatpush1.msra.mxu0 0.0
    %1729 = vmatprep.subr.mxu0 0.0
    %1730 = vmatpush1.msra.mxu0 0.0
    %1731 = vmatprep.subr.mxu0 0.0
    %1732 = vmatpush1.msra.mxu0 0.0
    %1733 = vmatprep.subr.mxu0 0.0
    %1734 = vmatpush1.msra.mxu0 0.0
    %1735 = vmatprep.subr.mxu0 0.0
    %1736 = vmatpush1.msra.mxu0 0.0
    %1737 = vmatprep.subr.mxu0 0.0
    %1738 = vmatpush1.msra.mxu0 0.0
    %1739 = vmatprep.subr.mxu0 0.0
    %1740 = vmatpush1.msra.mxu0 0.0
    %1741 = vmatprep.subr.mxu0 0.0
    %1742 = vmatpush1.msra.mxu0 0.0
    %1743 = vmatprep.subr.mxu0 0.0
    %1744 = vmatpush1.msra.mxu0 0.0
    %1745 = vmatprep.subr.mxu0 0.0
    %1746 = vmatpush1.msra.mxu0 0.0
    %1747 = vmatprep.mubr.f32.mxu0 0.0
    %1748 = vmatmul.mubr.f32.gmra.mrb[0].mxu0 %v1681
    %v1749 = vpop.f32.mrb[0].mxu0
    %v1750 = vadd.f32 0.0, %v1749
    %v1751 = vpop.f32.mrb[0].mxu0
    %1752 = vdwg.mxu0
    %1755 = vrot.lane.b32.xlu0 %v1385, 8
    %v1756 = vpop.permute.xlu0 %1755
    %1757 = vrot.lane.b32.xlu0 %v1458, 8
    %v1758 = vpop.permute.xlu0 %1757
    %1763 = vrot.lane.b32.xlu0 %v1531, 16
    %v1764 = vpop.permute.xlu0 %1763
    %1765 = vrot.lane.b32.xlu0 %v1604, 16
    %v1766 = vpop.permute.xlu0 %1765
    %1771 = vrot.lane.b32.xlu0 %v1677, 24
    %v1772 = vpop.permute.xlu0 %1771
    %1773 = vrot.lane.b32.xlu0 %v1750, 24
    %v1774 = vpop.permute.xlu0 %1773
    %v1777 = vsel %vm480, %v1239, %v1756
    %v1778 = vsel %vm480, %v1312, %v1758
    %v1779 = vsel %vm92, %v1777, %v1764
    %v1780 = vsel %vm92, %v1778, %v1766
    %vm1781 = vcmask 195584
    %v1782 = vsel %vm1781, %v1779, %v1772
    %v1783 = vsel %vm1781, %v1780, %v1774
    %v1784 = vld [vmem:[%s3] sm:$0xff]
    %v1785 = vld [vmem:[%s3 + $0x8] sm:$0xff]
    %v1786 = vld [vmem:[%s3 + $0x10] sm:$0xff]
    %v1787 = vld [vmem:[%s3 + $0x18] sm:$0xff]
    %v1788 = vlaneseq
    %v1789 = vshrl.u32 %v1788, 7
    %v1790 = vsub.s32 3, %v1789
    %v1791 = vrot.slane %v174, %v1790
    %v1793 = vsel %vm192, %v1782, 0
    %v1796 = vsel %vm192, %v1783, 0
    %1798 = vmatprep.subr.mxu0 0.0
    %1799 = vmatpush1.msra.mxu0 %v1784
    %1800 = vmatprep.subr.mxu0 0.0
    %1801 = vmatpush1.msra.mxu0 %v1785
    %1802 = vmatprep.subr.mxu0 0.0
    %1803 = vmatpush1.msra.mxu0 %v1786
    %1804 = vmatprep.subr.mxu0 0.0
    %1805 = vmatpush1.msra.mxu0 %v1787
    %1806 = vmatprep.subr.mxu0 0.0
    %1807 = vmatpush1.msra.mxu0 0.0
    %1808 = vmatprep.subr.mxu0 0.0
    %1809 = vmatpush1.msra.mxu0 0.0
    %1810 = vmatprep.subr.mxu0 0.0
    %1811 = vmatpush1.msra.mxu0 0.0
    %1812 = vmatprep.subr.mxu0 0.0
    %1813 = vmatpush1.msra.mxu0 0.0
    %1814 = vmatprep.subr.mxu0 0.0
    %1815 = vmatpush1.msra.mxu0 0.0
    %1816 = vmatprep.subr.mxu0 0.0
    %1817 = vmatpush1.msra.mxu0 0.0
    %1818 = vmatprep.subr.mxu0 0.0
    %1819 = vmatpush1.msra.mxu0 0.0
    %1820 = vmatprep.subr.mxu0 0.0
    %1821 = vmatpush1.msra.mxu0 0.0
    %1822 = vmatprep.subr.mxu0 0.0
    %1823 = vmatpush1.msra.mxu0 0.0
    %1824 = vmatprep.subr.mxu0 0.0
    %1825 = vmatpush1.msra.mxu0 0.0
    %1826 = vmatprep.subr.mxu0 0.0
    %1827 = vmatpush1.msra.mxu0 0.0
    %1828 = vmatprep.subr.mxu0 0.0
    %1829 = vmatpush1.msra.mxu0 0.0
    %1830 = vmatprep.subr.mxu0 0.0
    %1831 = vmatpush1.msra.mxu0 0.0
    %1832 = vmatprep.subr.mxu0 0.0
    %1833 = vmatpush1.msra.mxu0 0.0
    %1834 = vmatprep.subr.mxu0 0.0
    %1835 = vmatpush1.msra.mxu0 0.0
    %1836 = vmatprep.subr.mxu0 0.0
    %1837 = vmatpush1.msra.mxu0 0.0
    %1838 = vmatprep.subr.mxu0 0.0
    %1839 = vmatpush1.msra.mxu0 0.0
    %1840 = vmatprep.subr.mxu0 0.0
    %1841 = vmatpush1.msra.mxu0 0.0
    %1842 = vmatprep.subr.mxu0 0.0
    %1843 = vmatpush1.msra.mxu0 0.0
    %1844 = vmatprep.subr.mxu0 0.0
    %1845 = vmatpush1.msra.mxu0 0.0
    %1846 = vmatprep.subr.mxu0 0.0
    %1847 = vmatpush1.msra.mxu0 0.0
    %1848 = vmatprep.subr.mxu0 0.0
    %1849 = vmatpush1.msra.mxu0 0.0
    %1850 = vmatprep.subr.mxu0 0.0
    %1851 = vmatpush1.msra.mxu0 0.0
    %1852 = vmatprep.subr.mxu0 0.0
    %1853 = vmatpush1.msra.mxu0 0.0
    %1854 = vmatprep.subr.mxu0 0.0
    %1855 = vmatpush1.msra.mxu0 0.0
    %1856 = vmatprep.subr.mxu0 0.0
    %1857 = vmatpush1.msra.mxu0 0.0
    %1858 = vmatprep.subr.mxu0 0.0
    %1859 = vmatpush1.msra.mxu0 0.0
    %1860 = vmatprep.subr.mxu0 0.0
    %1861 = vmatpush1.msra.mxu0 0.0
    %1862 = vmatprep.mubr.f32.mxu0 0.0
    %1863 = vmatmul.mubr.f32.gmra.mrb[0].mxu0 %v1793
    %v1864 = vpop.f32.mrb[0].mxu0
    %v1865 = vadd.f32 %v1791, %v1864
    %v1866 = vpop.f32.mrb[0].mxu0
    %1867 = vmatprep.mubr.f32.mxu0 0.0
    %1868 = vmatmul.mubr.f32.gmra.mrb[0].mxu0 %v1796
    %v1869 = vpop.f32.mrb[0].mxu0
    %v1870 = vadd.f32 %v1791, %v1869
    %v1871 = vpop.f32.mrb[0].mxu0
    %1872 = vdwg.mxu0
    %v1873 = vadd.f32 %v166, %v1865
    %v1874 = vadd.f32 %v171, %v1870
    %v1875 = vsel %vm192, %v1873, 0.0
    %1876 = vadd.xlane.f32.xlu0 %v1875
    %v1877 = vpop.xlane.xlu0 %1876
    %v1878 = vsel %vm192, %v1874, 0.0
    %1879 = vadd.xlane.f32.xlu0 %v1878
    %v1880 = vpop.xlane.xlu0 %1879
    %v1881 = vrcp.pop 32.0
    %v1882 = vmul.f32 %v1877, %v1881
    %v1883 = vmul.f32 %v1880, %v1881
    %v1884 = vsub.f32 %v1873, %v1882
    %v1885 = vsub.f32 %v1874, %v1883
    %v1886 = vmul.f32 %v1884, %v1884
    %v1887 = vmul.f32 %v1885, %v1885
    %v1888 = vsel %vm192, %v1886, 0.0
    %1889 = vadd.xlane.f32.xlu0 %v1888
    %v1890 = vpop.xlane.xlu0 %1889
    %v1891 = vsel %vm192, %v1887, 0.0
    %1892 = vadd.xlane.f32.xlu0 %v1891
    %v1893 = vpop.xlane.xlu0 %1892
    %v1894 = vmul.f32 %v1890, %v1881
    %v1895 = vmul.f32 %v1893, %v1881
    %v1896 = vadd.f32 %v1894, 1e-05
    %v1897 = vadd.f32 %v1895, 1e-05
    %v1898 = vrsqrt.pop %v1896
    %v1899 = vrsqrt.pop %v1897
    %v1900 = vmul.f32 %v1884, %v1898
    %v1901 = vmul.f32 %v1885, %v1899
    %v1902 = vlaneseq
    %v1903 = vshrl.u32 %v1902, 7
    %v1904 = vsub.s32 6, %v1903
    %v1905 = vrot.slane %v174, %v1904
    %v1906 = vmul.f32 %v1900, %v1905
    %v1907 = vmul.f32 %v1901, %v1905
    %v1908 = vlaneseq
    %v1909 = vshrl.u32 %v1908, 7
    %v1910 = vsub.s32 7, %v1909
    %v1911 = vrot.slane %v174, %v1910
    %v1912 = vadd.f32 %v1906, %v1911
    %v1913 = vadd.f32 %v1907, %v1911
    %v1914 = vld [vmem:[%s4] sm:$0xff]
    %v1915 = vld [vmem:[%s4 + $0x8] sm:$0xff]
    %v1916 = vld [vmem:[%s4 + $0x10] sm:$0xff]
    %v1917 = vld [vmem:[%s4 + $0x18] sm:$0xff]
    %v1918 = vlaneseq
    %v1919 = vshrl.u32 %v1918, 7
    %v1920 = vsub.s32 4, %v1919
    %v1921 = vrot.slane %v174, %v1920
    %v1923 = vsel %vm192, %v1912, 0
    %v1926 = vsel %vm192, %v1913, 0
    %1928 = vmatprep.subr.mxu0 0.0
    %1929 = vmatpush1.msra.mxu0 %v1914
    %1930 = vmatprep.subr.mxu0 0.0
    %1931 = vmatpush1.msra.mxu0 %v1915
    %1932 = vmatprep.subr.mxu0 0.0
    %1933 = vmatpush1.msra.mxu0 %v1916
    %1934 = vmatprep.subr.mxu0 0.0
    %1935 = vmatpush1.msra.mxu0 %v1917
    %1936 = vmatprep.subr.mxu0 0.0
    %1937 = vmatpush1.msra.mxu0 0.0
    %1938 = vmatprep.subr.mxu0 0.0
    %1939 = vmatpush1.msra.mxu0 0.0
    %1940 = vmatprep.subr.mxu0 0.0
    %1941 = vmatpush1.msra.mxu0 0.0
    %1942 = vmatprep.subr.mxu0 0.0
    %1943 = vmatpush1.msra.mxu0 0.0
    %1944 = vmatprep.subr.mxu0 0.0
    %1945 = vmatpush1.msra.mxu0 0.0
    %1946 = vmatprep.subr.mxu0 0.0
    %1947 = vmatpush1.msra.mxu0 0.0
    %1948 = vmatprep.subr.mxu0 0.0
    %1949 = vmatpush1.msra.mxu0 0.0
    %1950 = vmatprep.subr.mxu0 0.0
    %1951 = vmatpush1.msra.mxu0 0.0
    %1952 = vmatprep.subr.mxu0 0.0
    %1953 = vmatpush1.msra.mxu0 0.0
    %1954 = vmatprep.subr.mxu0 0.0
    %1955 = vmatpush1.msra.mxu0 0.0
    %1956 = vmatprep.subr.mxu0 0.0
    %1957 = vmatpush1.msra.mxu0 0.0
    %1958 = vmatprep.subr.mxu0 0.0
    %1959 = vmatpush1.msra.mxu0 0.0
    %1960 = vmatprep.subr.mxu0 0.0
    %1961 = vmatpush1.msra.mxu0 0.0
    %1962 = vmatprep.subr.mxu0 0.0
    %1963 = vmatpush1.msra.mxu0 0.0
    %1964 = vmatprep.subr.mxu0 0.0
    %1965 = vmatpush1.msra.mxu0 0.0
    %1966 = vmatprep.subr.mxu0 0.0
    %1967 = vmatpush1.msra.mxu0 0.0
    %1968 = vmatprep.subr.mxu0 0.0
    %1969 = vmatpush1.msra.mxu0 0.0
    %1970 = vmatprep.subr.mxu0 0.0
    %1971 = vmatpush1.msra.mxu0 0.0
    %1972 = vmatprep.subr.mxu0 0.0
    %1973 = vmatpush1.msra.mxu0 0.0
    %1974 = vmatprep.subr.mxu0 0.0
    %1975 = vmatpush1.msra.mxu0 0.0
    %1976 = vmatprep.subr.mxu0 0.0
    %1977 = vmatpush1.msra.mxu0 0.0
    %1978 = vmatprep.subr.mxu0 0.0
    %1979 = vmatpush1.msra.mxu0 0.0
    %1980 = vmatprep.subr.mxu0 0.0
    %1981 = vmatpush1.msra.mxu0 0.0
    %1982 = vmatprep.subr.mxu0 0.0
    %1983 = vmatpush1.msra.mxu0 0.0
    %1984 = vmatprep.subr.mxu0 0.0
    %1985 = vmatpush1.msra.mxu0 0.0
    %1986 = vmatprep.subr.mxu0 0.0
    %1987 = vmatpush1.msra.mxu0 0.0
    %1988 = vmatprep.subr.mxu0 0.0
    %1989 = vmatpush1.msra.mxu0 0.0
    %1990 = vmatprep.subr.mxu0 0.0
    %1991 = vmatpush1.msra.mxu0 0.0
    %1992 = vmatprep.mubr.f32.mxu0 0.0
    %1993 = vmatmul.mubr.f32.gmra.mrb[0].mxu0 %v1923
    %v1994 = vpop.f32.mrb[0].mxu0
    %v1995 = vadd.f32 %v1921, %v1994
    %v1996 = vpop.f32.mrb[0].mxu0
    %1997 = vmatprep.mubr.f32.mxu0 0.0
    %1998 = vmatmul.mubr.f32.gmra.mrb[0].mxu0 %v1926
    %v1999 = vpop.f32.mrb[0].mxu0
    %v2000 = vadd.f32 %v1921, %v1999
    %v2001 = vpop.f32.mrb[0].mxu0
    %2002 = vdwg.mxu0
    %v2003 = vmax.f32 %v1995, 0.0
    %v2004 = vmax.f32 %v2000, 0.0
    %v2005 = vld [vmem:[#allocation7] sm:$0xff]
    %v2006 = vld [vmem:[#allocation7 + $0x8] sm:$0xff]
    %v2007 = vld [vmem:[#allocation7 + $0x10] sm:$0xff]
    %v2008 = vld [vmem:[#allocation7 + $0x18] sm:$0xff]
    %v2009 = vlaneseq
    %v2010 = vshrl.u32 %v2009, 7
    %v2011 = vsub.s32 5, %v2010
    %v2012 = vrot.slane %v174, %v2011
    %v2014 = vsel %vm192, %v2003, 0
    %v2017 = vsel %vm192, %v2004, 0
    %2019 = vmatprep.subr.mxu0 0.0
    %2020 = vmatpush1.msra.mxu0 %v2005
    %2021 = vmatprep.subr.mxu0 0.0
    %2022 = vmatpush1.msra.mxu0 %v2006
    %2023 = vmatprep.subr.mxu0 0.0
    %2024 = vmatpush1.msra.mxu0 %v2007
    %2025 = vmatprep.subr.mxu0 0.0
    %2026 = vmatpush1.msra.mxu0 %v2008
    %2027 = vmatprep.subr.mxu0 0.0
    %2028 = vmatpush1.msra.mxu0 0.0
    %2029 = vmatprep.subr.mxu0 0.0
    %2030 = vmatpush1.msra.mxu0 0.0
    %2031 = vmatprep.subr.mxu0 0.0
    %2032 = vmatpush1.msra.mxu0 0.0
    %2033 = vmatprep.subr.mxu0 0.0
    %2034 = vmatpush1.msra.mxu0 0.0
    %2035 = vmatprep.subr.mxu0 0.0
    %2036 = vmatpush1.msra.mxu0 0.0
    %2037 = vmatprep.subr.mxu0 0.0
    %2038 = vmatpush1.msra.mxu0 0.0
    %2039 = vmatprep.subr.mxu0 0.0
    %2040 = vmatpush1.msra.mxu0 0.0
    %2041 = vmatprep.subr.mxu0 0.0
    %2042 = vmatpush1.msra.mxu0 0.0
    %2043 = vmatprep.subr.mxu0 0.0
    %2044 = vmatpush1.msra.mxu0 0.0
    %2045 = vmatprep.subr.mxu0 0.0
    %2046 = vmatpush1.msra.mxu0 0.0
    %2047 = vmatprep.subr.mxu0 0.0
    %2048 = vmatpush1.msra.mxu0 0.0
    %2049 = vmatprep.subr.mxu0 0.0
    %2050 = vmatpush1.msra.mxu0 0.0
    %2051 = vmatprep.subr.mxu0 0.0
    %2052 = vmatpush1.msra.mxu0 0.0
    %2053 = vmatprep.subr.mxu0 0.0
    %2054 = vmatpush1.msra.mxu0 0.0
    %2055 = vmatprep.subr.mxu0 0.0
    %2056 = vmatpush1.msra.mxu0 0.0
    %2057 = vmatprep.subr.mxu0 0.0
    %2058 = vmatpush1.msra.mxu0 0.0
    %2059 = vmatprep.subr.mxu0 0.0
    %2060 = vmatpush1.msra.mxu0 0.0
    %2061 = vmatprep.subr.mxu0 0.0
    %2062 = vmatpush1.msra.mxu0 0.0
    %2063 = vmatprep.subr.mxu0 0.0
    %2064 = vmatpush1.msra.mxu0 0.0
    %2065 = vmatprep.subr.mxu0 0.0
    %2066 = vmatpush1.msra.mxu0 0.0
    %2067 = vmatprep.subr.mxu0 0.0
    %2068 = vmatpush1.msra.mxu0 0.0
    %2069 = vmatprep.subr.mxu0 0.0
    %2070 = vmatpush1.msra.mxu0 0.0
    %2071 = vmatprep.subr.mxu0 0.0
    %2072 = vmatpush1.msra.mxu0 0.0
    %2073 = vmatprep.subr.mxu0 0.0
    %2074 = vmatpush1.msra.mxu0 0.0
    %2075 = vmatprep.subr.mxu0 0.0
    %2076 = vmatpush1.msra.mxu0 0.0
    %2077 = vmatprep.subr.mxu0 0.0
    %2078 = vmatpush1.msra.mxu0 0.0
    %2079 = vmatprep.subr.mxu0 0.0
    %2080 = vmatpush1.msra.mxu0 0.0
    %2081 = vmatprep.subr.mxu0 0.0
    %2082 = vmatpush1.msra.mxu0 0.0
    %2083 = vmatprep.mubr.f32.mxu0 0.0
    %2084 = vmatmul.mubr.f32.gmra.mrb[0].mxu0 %v2014
    %v2085 = vpop.f32.mrb[0].mxu0
    %v2086 = vadd.f32 %v2012, %v2085
    %v2087 = vpop.f32.mrb[0].mxu0
    %2088 = vmatprep.mubr.f32.mxu0 0.0
    %2089 = vmatmul.mubr.f32.gmra.mrb[0].mxu0 %v2017
    %v2090 = vpop.f32.mrb[0].mxu0
    %v2091 = vadd.f32 %v2012, %v2090
    %v2092 = vpop.f32.mrb[0].mxu0
    %2093 = vdwg.mxu0
    %v2094 = vadd.f32 %v1912, %v2086
    %v2095 = vadd.f32 %v1913, %v2091
    %v2096 = vsel %vm192, %v2094, 0.0
    %2097 = vadd.xlane.f32.xlu0 %v2096
    %v2098 = vpop.xlane.xlu0 %2097
    %v2099 = vsel %vm192, %v2095, 0.0
    %2100 = vadd.xlane.f32.xlu0 %v2099
    %v2101 = vpop.xlane.xlu0 %2100
    %v2102 = vmul.f32 %v2098, %v1881
    %v2103 = vmul.f32 %v2101, %v1881
    %v2104 = vsub.f32 %v2094, %v2102
    %v2105 = vsub.f32 %v2095, %v2103
    %v2106 = vmul.f32 %v2104, %v2104
    %v2107 = vmul.f32 %v2105, %v2105
    %v2108 = vsel %vm192, %v2106, 0.0
    %2109 = vadd.xlane.f32.xlu0 %v2108
    %v2110 = vpop.xlane.xlu0 %2109
    %v2111 = vsel %vm192, %v2107, 0.0
    %2112 = vadd.xlane.f32.xlu0 %v2111
    %v2113 = vpop.xlane.xlu0 %2112
    %v2114 = vmul.f32 %v2110, %v1881
    %v2115 = vmul.f32 %v2113, %v1881
    %v2116 = vadd.f32 %v2114, 1e-05
    %v2117 = vadd.f32 %v2115, 1e-05
    %v2118 = vrsqrt.pop %v2116
    %v2119 = vrsqrt.pop %v2117
    %v2120 = vmul.f32 %v2104, %v2118
    %v2121 = vmul.f32 %v2105, %v2119
    %v2122 = vlaneseq
    %v2123 = vshrl.u32 %v2122, 7
    %v2124 = vsub.s32 0, %v2123
    %v2125 = vrot.slane %v175, %v2124
    %v2126 = vmul.f32 %v2120, %v2125
    %v2127 = vmul.f32 %v2121, %v2125
    %v2128 = vlaneseq
    %v2129 = vshrl.u32 %v2128, 7
    %v2130 = vsub.s32 1, %v2129
    %v2131 = vrot.slane %v175, %v2130
    %v2132 = vadd.f32 %v2126, %v2131
    %v2133 = vadd.f32 %v2127, %v2131
    %s2134 = scalar_lea.vmem %s6, 16
    %v2135 = vld [vmem:[%s2134] sm:$0xff]
    %v2136 = vld [vmem:[%s2134 + $0x8] sm:$0x3]
    %s2137 = scalar_lea.vmem [#allocation5], 96
    %v2138 = vld [vmem:[%s2137] sm:$0xff]
    %v2139 = vld [vmem:[%s2137 + $0x8] sm:$0xff]
    %v2140 = vld [vmem:[%s2137 + $0x10] sm:$0xff]
    %v2141 = vld [vmem:[%s2137 + $0x18] sm:$0xff]
    %v2142 = vld [vmem:[%s2137 + $0x20] sm:$0xff]
    %v2143 = vld [vmem:[%s2137 + $0x28] sm:$0xff]
    %v2144 = vld [vmem:[%s2137 + $0x30] sm:$0xff]
    %v2145 = vld [vmem:[%s2137 + $0x38] sm:$0xff]
    %v2146 = vld [vmem:[%s2137 + $0x40] sm:$0xff]
    %v2147 = vld [vmem:[%s2137 + $0x48] sm:$0xff]
    %v2148 = vld [vmem:[%s2137 + $0x50] sm:$0xff]
    %v2149 = vld [vmem:[%s2137 + $0x58] sm:$0xff]
    %v2150 = vlaneseq
    %v2151 = vshrl.u32 %v2150, 7
    %v2152 = vsub.s32 0, %v2151
    %v2153 = vrot.slane %v2135, %v2152
    %v2155 = vsel %vm192, %v2132, 0
    %v2158 = vsel %vm192, %v2133, 0
    %2160 = vmatprep.subr.mxu0 0.0
    %2161 = vmatpush1.msra.mxu0 %v2138
    %2162 = vmatprep.subr.mxu0 0.0
    %2163 = vmatpush1.msra.mxu0 %v2139
    %2164 = vmatprep.subr.mxu0 0.0
    %2165 = vmatpush1.msra.mxu0 %v2140
    %2166 = vmatprep.subr.mxu0 0.0
    %2167 = vmatpush1.msra.mxu0 %v2141
    %2168 = vmatprep.subr.mxu0 0.0
    %2169 = vmatpush1.msra.mxu0 0.0
    %2170 = vmatprep.subr.mxu0 0.0
    %2171 = vmatpush1.msra.mxu0 0.0
    %2172 = vmatprep.subr.mxu0 0.0
    %2173 = vmatpush1.msra.mxu0 0.0
    %2174 = vmatprep.subr.mxu0 0.0
    %2175 = vmatpush1.msra.mxu0 0.0
    %2176 = vmatprep.subr.mxu0 0.0
    %2177 = vmatpush1.msra.mxu0 0.0
    %2178 = vmatprep.subr.mxu0 0.0
    %2179 = vmatpush1.msra.mxu0 0.0
    %2180 = vmatprep.subr.mxu0 0.0
    %2181 = vmatpush1.msra.mxu0 0.0
    %2182 = vmatprep.subr.mxu0 0.0
    %2183 = vmatpush1.msra.mxu0 0.0
    %2184 = vmatprep.subr.mxu0 0.0
    %2185 = vmatpush1.msra.mxu0 0.0
    %2186 = vmatprep.subr.mxu0 0.0
    %2187 = vmatpush1.msra.mxu0 0.0
    %2188 = vmatprep.subr.mxu0 0.0
    %2189 = vmatpush1.msra.mxu0 0.0
    %2190 = vmatprep.subr.mxu0 0.0
    %2191 = vmatpush1.msra.mxu0 0.0
    %2192 = vmatprep.subr.mxu0 0.0
    %2193 = vmatpush1.msra.mxu0 0.0
    %2194 = vmatprep.subr.mxu0 0.0
    %2195 = vmatpush1.msra.mxu0 0.0
    %2196 = vmatprep.subr.mxu0 0.0
    %2197 = vmatpush1.msra.mxu0 0.0
    %2198 = vmatprep.subr.mxu0 0.0
    %2199 = vmatpush1.msra.mxu0 0.0
    %2200 = vmatprep.subr.mxu0 0.0
    %2201 = vmatpush1.msra.mxu0 0.0
    %2202 = vmatprep.subr.mxu0 0.0
    %2203 = vmatpush1.msra.mxu0 0.0
    %2204 = vmatprep.subr.mxu0 0.0
    %2205 = vmatpush1.msra.mxu0 0.0
    %2206 = vmatprep.subr.mxu0 0.0
    %2207 = vmatpush1.msra.mxu0 0.0
    %2208 = vmatprep.subr.mxu0 0.0
    %2209 = vmatpush1.msra.mxu0 0.0
    %2210 = vmatprep.subr.mxu0 0.0
    %2211 = vmatpush1.msra.mxu0 0.0
    %2212 = vmatprep.subr.mxu0 0.0
    %2213 = vmatpush1.msra.mxu0 0.0
    %2214 = vmatprep.subr.mxu0 0.0
    %2215 = vmatpush1.msra.mxu0 0.0
    %2216 = vmatprep.subr.mxu0 0.0
    %2217 = vmatpush1.msra.mxu0 0.0
    %2218 = vmatprep.subr.mxu0 0.0
    %2219 = vmatpush1.msra.mxu0 0.0
    %2220 = vmatprep.subr.mxu0 0.0
    %2221 = vmatpush1.msra.mxu0 0.0
    %2222 = vmatprep.subr.mxu0 0.0
    %2223 = vmatpush1.msra.mxu0 0.0
    %2224 = vmatprep.mubr.f32.mxu0 0.0
    %2225 = vmatmul.mubr.f32.gmra.mrb[0].mxu0 %v2155
    %v2226 = vpop.f32.mrb[0].mxu0
    %v2227 = vadd.f32 %v2153, %v2226
    %v2228 = vpop.f32.mrb[0].mxu0
    %2229 = vmatprep.mubr.f32.mxu0 0.0
    %2230 = vmatmul.mubr.f32.gmra.mrb[0].mxu0 %v2158
    %v2231 = vpop.f32.mrb[0].mxu0
    %v2232 = vadd.f32 %v2153, %v2231
    %v2233 = vpop.f32.mrb[0].mxu0
    %2234 = vdwg.mxu0
    %v2235 = vlaneseq
    %v2236 = vshrl.u32 %v2235, 7
    %v2237 = vsub.s32 1, %v2236
    %v2238 = vrot.slane %v2135, %v2237
    %2239 = vmatprep.subr.mxu0 0.0
    %2240 = vmatpush1.msra.mxu0 %v2142
    %2241 = vmatprep.subr.mxu0 0.0
    %2242 = vmatpush1.msra.mxu0 %v2143
    %2243 = vmatprep.subr.mxu0 0.0
    %2244 = vmatpush1.msra.mxu0 %v2144
    %2245 = vmatprep.subr.mxu0 0.0
    %2246 = vmatpush1.msra.mxu0 %v2145
    %2247 = vmatprep.subr.mxu0 0.0
    %2248 = vmatpush1.msra.mxu0 0.0
    %2249 = vmatprep.subr.mxu0 0.0
    %2250 = vmatpush1.msra.mxu0 0.0
    %2251 = vmatprep.subr.mxu0 0.0
    %2252 = vmatpush1.msra.mxu0 0.0
    %2253 = vmatprep.subr.mxu0 0.0
    %2254 = vmatpush1.msra.mxu0 0.0
    %2255 = vmatprep.subr.mxu0 0.0
    %2256 = vmatpush1.msra.mxu0 0.0
    %2257 = vmatprep.subr.mxu0 0.0
    %2258 = vmatpush1.msra.mxu0 0.0
    %2259 = vmatprep.subr.mxu0 0.0
    %2260 = vmatpush1.msra.mxu0 0.0
    %2261 = vmatprep.subr.mxu0 0.0
    %2262 = vmatpush1.msra.mxu0 0.0
    %2263 = vmatprep.subr.mxu0 0.0
    %2264 = vmatpush1.msra.mxu0 0.0
    %2265 = vmatprep.subr.mxu0 0.0
    %2266 = vmatpush1.msra.mxu0 0.0
    %2267 = vmatprep.subr.mxu0 0.0
    %2268 = vmatpush1.msra.mxu0 0.0
    %2269 = vmatprep.subr.mxu0 0.0
    %2270 = vmatpush1.msra.mxu0 0.0
    %2271 = vmatprep.subr.mxu0 0.0
    %2272 = vmatpush1.msra.mxu0 0.0
    %2273 = vmatprep.subr.mxu0 0.0
    %2274 = vmatpush1.msra.mxu0 0.0
    %2275 = vmatprep.subr.mxu0 0.0
    %2276 = vmatpush1.msra.mxu0 0.0
    %2277 = vmatprep.subr.mxu0 0.0
    %2278 = vmatpush1.msra.mxu0 0.0
    %2279 = vmatprep.subr.mxu0 0.0
    %2280 = vmatpush1.msra.mxu0 0.0
    %2281 = vmatprep.subr.mxu0 0.0
    %2282 = vmatpush1.msra.mxu0 0.0
    %2283 = vmatprep.subr.mxu0 0.0
    %2284 = vmatpush1.msra.mxu0 0.0
    %2285 = vmatprep.subr.mxu0 0.0
    %2286 = vmatpush1.msra.mxu0 0.0
    %2287 = vmatprep.subr.mxu0 0.0
    %2288 = vmatpush1.msra.mxu0 0.0
    %2289 = vmatprep.subr.mxu0 0.0
    %2290 = vmatpush1.msra.mxu0 0.0
    %2291 = vmatprep.subr.mxu0 0.0
    %2292 = vmatpush1.msra.mxu0 0.0
    %2293 = vmatprep.subr.mxu0 0.0
    %2294 = vmatpush1.msra.mxu0 0.0
    %2295 = vmatprep.subr.mxu0 0.0
    %2296 = vmatpush1.msra.mxu0 0.0
    %2297 = vmatprep.subr.mxu0 0.0
    %2298 = vmatpush1.msra.mxu0 0.0
    %2299 = vmatprep.subr.mxu0 0.0
    %2300 = vmatpush1.msra.mxu0 0.0
    %2301 = vmatprep.subr.mxu0 0.0
    %2302 = vmatpush1.msra.mxu0 0.0
    %2303 = vmatprep.mubr.f32.mxu0 0.0
    %2304 = vmatmul.mubr.f32.gmra.mrb[0].mxu0 %v2155
    %v2305 = vpop.f32.mrb[0].mxu0
    %v2306 = vadd.f32 %v2238, %v2305
    %v2307 = vpop.f32.mrb[0].mxu0
    %2308 = vmatprep.mubr.f32.mxu0 0.0
    %2309 = vmatmul.mubr.f32.gmra.mrb[0].mxu0 %v2158
    %v2310 = vpop.f32.mrb[0].mxu0
    %v2311 = vadd.f32 %v2238, %v2310
    %v2312 = vpop.f32.mrb[0].mxu0
    %2313 = vdwg.mxu0
    %v2314 = vlaneseq
    %v2315 = vshrl.u32 %v2314, 7
    %v2316 = vsub.s32 2, %v2315
    %v2317 = vrot.slane %v2135, %v2316
    %2318 = vmatprep.subr.mxu0 0.0
    %2319 = vmatpush1.msra.mxu0 %v2146
    %2320 = vmatprep.subr.mxu0 0.0
    %2321 = vmatpush1.msra.mxu0 %v2147
    %2322 = vmatprep.subr.mxu0 0.0
    %2323 = vmatpush1.msra.mxu0 %v2148
    %2324 = vmatprep.subr.mxu0 0.0
    %2325 = vmatpush1.msra.mxu0 %v2149
    %2326 = vmatprep.subr.mxu0 0.0
    %2327 = vmatpush1.msra.mxu0 0.0
    %2328 = vmatprep.subr.mxu0 0.0
    %2329 = vmatpush1.msra.mxu0 0.0
    %2330 = vmatprep.subr.mxu0 0.0
    %2331 = vmatpush1.msra.mxu0 0.0
    %2332 = vmatprep.subr.mxu0 0.0
    %2333 = vmatpush1.msra.mxu0 0.0
    %2334 = vmatprep.subr.mxu0 0.0
    %2335 = vmatpush1.msra.mxu0 0.0
    %2336 = vmatprep.subr.mxu0 0.0
    %2337 = vmatpush1.msra.mxu0 0.0
    %2338 = vmatprep.subr.mxu0 0.0
    %2339 = vmatpush1.msra.mxu0 0.0
    %2340 = vmatprep.subr.mxu0 0.0
    %2341 = vmatpush1.msra.mxu0 0.0
    %2342 = vmatprep.subr.mxu0 0.0
    %2343 = vmatpush1.msra.mxu0 0.0
    %2344 = vmatprep.subr.mxu0 0.0
    %2345 = vmatpush1.msra.mxu0 0.0
    %2346 = vmatprep.subr.mxu0 0.0
    %2347 = vmatpush1.msra.mxu0 0.0
    %2348 = vmatprep.subr.mxu0 0.0
    %2349 = vmatpush1.msra.mxu0 0.0
    %2350 = vmatprep.subr.mxu0 0.0
    %2351 = vmatpush1.msra.mxu0 0.0
    %2352 = vmatprep.subr.mxu0 0.0
    %2353 = vmatpush1.msra.mxu0 0.0
    %2354 = vmatprep.subr.mxu0 0.0
    %2355 = vmatpush1.msra.mxu0 0.0
    %2356 = vmatprep.subr.mxu0 0.0
    %2357 = vmatpush1.msra.mxu0 0.0
    %2358 = vmatprep.subr.mxu0 0.0
    %2359 = vmatpush1.msra.mxu0 0.0
    %2360 = vmatprep.subr.mxu0 0.0
    %2361 = vmatpush1.msra.mxu0 0.0
    %2362 = vmatprep.subr.mxu0 0.0
    %2363 = vmatpush1.msra.mxu0 0.0
    %2364 = vmatprep.subr.mxu0 0.0
    %2365 = vmatpush1.msra.mxu0 0.0
    %2366 = vmatprep.subr.mxu0 0.0
    %2367 = vmatpush1.msra.mxu0 0.0
    %2368 = vmatprep.subr.mxu0 0.0
    %2369 = vmatpush1.msra.mxu0 0.0
    %2370 = vmatprep.subr.mxu0 0.0
    %2371 = vmatpush1.msra.mxu0 0.0
    %2372 = vmatprep.subr.mxu0 0.0
    %2373 = vmatpush1.msra.mxu0 0.0
    %2374 = vmatprep.subr.mxu0 0.0
    %2375 = vmatpush1.msra.mxu0 0.0
    %2376 = vmatprep.subr.mxu0 0.0
    %2377 = vmatpush1.msra.mxu0 0.0
    %2378 = vmatprep.subr.mxu0 0.0
    %2379 = vmatpush1.msra.mxu0 0.0
    %2380 = vmatprep.subr.mxu0 0.0
    %2381 = vmatpush1.msra.mxu0 0.0
    %2382 = vmatprep.mubr.f32.mxu0 0.0
    %2383 = vmatmul.mubr.f32.gmra.mrb[0].mxu0 %v2155
    %v2384 = vpop.f32.mrb[0].mxu0
    %v2385 = vadd.f32 %v2317, %v2384
    %v2386 = vpop.f32.mrb[0].mxu0
    %2387 = vmatprep.mubr.f32.mxu0 0.0
    %2388 = vmatmul.mubr.f32.gmra.mrb[0].mxu0 %v2158
    %v2389 = vpop.f32.mrb[0].mxu0
    %v2390 = vadd.f32 %v2317, %v2389
    %v2391 = vpop.f32.mrb[0].mxu0
    %2392 = vdwg.mxu0
    %2395 = vrot.lane.b32.xlu0 %v2227, 120
    %v2396 = vpop.permute.xlu0 %2395
    %2397 = vrot.lane.b32.xlu0 %v2232, 120
    %v2398 = vpop.permute.xlu0 %2397
    %2399 = vrot.lane.b32.xlu0 %v2227, 112
    %v2400 = vpop.permute.xlu0 %2399
    %2401 = vrot.lane.b32.xlu0 %v2232, 112
    %v2402 = vpop.permute.xlu0 %2401
    %2403 = vrot.lane.b32.xlu0 %v2227, 104
    %v2404 = vpop.permute.xlu0 %2403
    %2405 = vrot.lane.b32.xlu0 %v2232, 104
    %v2406 = vpop.permute.xlu0 %2405
    %2409 = vrot.lane.b32.xlu0 %v2306, 120
    %v2410 = vpop.permute.xlu0 %2409
    %2411 = vrot.lane.b32.xlu0 %v2311, 120
    %v2412 = vpop.permute.xlu0 %2411
    %2413 = vrot.lane.b32.xlu0 %v2306, 112
    %v2414 = vpop.permute.xlu0 %2413
    %2415 = vrot.lane.b32.xlu0 %v2311, 112
    %v2416 = vpop.permute.xlu0 %2415
    %2417 = vrot.lane.b32.xlu0 %v2306, 104
    %v2418 = vpop.permute.xlu0 %2417
    %2419 = vrot.lane.b32.xlu0 %v2311, 104
    %v2420 = vpop.permute.xlu0 %2419
    %2423 = vrot.lane.b32.xlu0 %v2385, 120
    %v2424 = vpop.permute.xlu0 %2423
    %2425 = vrot.lane.b32.xlu0 %v2390, 120
    %v2426 = vpop.permute.xlu0 %2425
    %2429 = vrot.lane.b32.xlu0 %v2385, 112
    %v2430 = vpop.permute.xlu0 %2429
    %2431 = vrot.lane.b32.xlu0 %v2390, 112
    %v2432 = vpop.permute.xlu0 %2431
    %2435 = vrot.lane.b32.xlu0 %v2385, 104
    %v2436 = vpop.permute.xlu0 %2435
    %2437 = vrot.lane.b32.xlu0 %v2390, 104
    %v2438 = vpop.permute.xlu0 %2437
    %v2441 = vsel %vm480, %v2227, 0
    %v2443 = vsel %vm480, %v2306, 0
    %2445 = vmatprep.subr.mxu0 0.0
    %2446 = vmatpush1.xpose.msra.mxu0 %v2443
    %2447 = vmatprep.subr.mxu0 0.0
    %2448 = vmatpush1.xpose.msra.mxu0 0.0
    %2449 = vmatprep.subr.mxu0 0.0
    %2450 = vmatpush1.xpose.msra.mxu0 0.0
    %2451 = vmatprep.subr.mxu0 0.0
    %2452 = vmatpush1.xpose.msra.mxu0 0.0
    %2453 = vmatprep.subr.mxu0 0.0
    %2454 = vmatpush1.xpose.msra.mxu0 0.0
    %2455 = vmatprep.subr.mxu0 0.0
    %2456 = vmatpush1.xpose.msra.mxu0 0.0
    %2457 = vmatprep.subr.mxu0 0.0
    %2458 = vmatpush1.xpose.msra.mxu0 0.0
    %2459 = vmatprep.subr.mxu0 0.0
    %2460 = vmatpush1.xpose.msra.mxu0 0.0
    %2461 = vmatprep.subr.mxu0 0.0
    %2462 = vmatpush1.xpose.msra.mxu0 0.0
    %2463 = vmatprep.subr.mxu0 0.0
    %2464 = vmatpush1.xpose.msra.mxu0 0.0
    %2465 = vmatprep.subr.mxu0 0.0
    %2466 = vmatpush1.xpose.msra.mxu0 0.0
    %2467 = vmatprep.subr.mxu0 0.0
    %2468 = vmatpush1.xpose.msra.mxu0 0.0
    %2469 = vmatprep.subr.mxu0 0.0
    %2470 = vmatpush1.xpose.msra.mxu0 0.0
    %2471 = vmatprep.subr.mxu0 0.0
    %2472 = vmatpush1.xpose.msra.mxu0 0.0
    %2473 = vmatprep.subr.mxu0 0.0
    %2474 = vmatpush1.xpose.msra.mxu0 0.0
    %2475 = vmatprep.subr.mxu0 0.0
    %2476 = vmatpush1.xpose.msra.mxu0 0.0
    %2477 = vmatprep.subr.mxu0 0.0
    %2478 = vmatpush1.xpose.msra.mxu0 0.0
    %2479 = vmatprep.subr.mxu0 0.0
    %2480 = vmatpush1.xpose.msra.mxu0 0.0
    %2481 = vmatprep.subr.mxu0 0.0
    %2482 = vmatpush1.xpose.msra.mxu0 0.0
    %2483 = vmatprep.subr.mxu0 0.0
    %2484 = vmatpush1.xpose.msra.mxu0 0.0
    %2485 = vmatprep.subr.mxu0 0.0
    %2486 = vmatpush1.xpose.msra.mxu0 0.0
    %2487 = vmatprep.subr.mxu0 0.0
    %2488 = vmatpush1.xpose.msra.mxu0 0.0
    %2489 = vmatprep.subr.mxu0 0.0
    %2490 = vmatpush1.xpose.msra.mxu0 0.0
    %2491 = vmatprep.subr.mxu0 0.0
    %2492 = vmatpush1.xpose.msra.mxu0 0.0
    %2493 = vmatprep.subr.mxu0 0.0
    %2494 = vmatpush1.xpose.msra.mxu0 0.0
    %2495 = vmatprep.subr.mxu0 0.0
    %2496 = vmatpush1.xpose.msra.mxu0 0.0
    %2497 = vmatprep.subr.mxu0 0.0
    %2498 = vmatpush1.xpose.msra.mxu0 0.0
    %2499 = vmatprep.subr.mxu0 0.0
    %2500 = vmatpush1.xpose.msra.mxu0 0.0
    %2501 = vmatprep.subr.mxu0 0.0
    %2502 = vmatpush1.xpose.msra.mxu0 0.0
    %2503 = vmatprep.subr.mxu0 0.0
    %2504 = vmatpush1.xpose.msra.mxu0 0.0
    %2505 = vmatprep.subr.mxu0 0.0
    %2506 = vmatpush1.xpose.msra.mxu0 0.0
    %2507 = vmatprep.subr.mxu0 0.0
    %2508 = vmatpush1.xpose.msra.mxu0 0.0
    %2509 = vmatprep.mubr.f32.mxu0 0.0
    %2510 = vmatmul.mubr.f32.gmra.mrb[0].mxu0 %v2441
    %v2511 = vpop.f32.mrb[0].mxu0
    %v2512 = vadd.f32 0.0, %v2511
    %v2513 = vpop.f32.mrb[0].mxu0
    %2514 = vdwg.mxu0
    %v2515 = vsel %vm480, %v2232, 0
    %v2517 = vsel %vm480, %v2311, 0
    %2519 = vmatprep.subr.mxu0 0.0
    %2520 = vmatpush1.xpose.msra.mxu0 %v2517
    %2521 = vmatprep.subr.mxu0 0.0
    %2522 = vmatpush1.xpose.msra.mxu0 0.0
    %2523 = vmatprep.subr.mxu0 0.0
    %2524 = vmatpush1.xpose.msra.mxu0 0.0
    %2525 = vmatprep.subr.mxu0 0.0
    %2526 = vmatpush1.xpose.msra.mxu0 0.0
    %2527 = vmatprep.subr.mxu0 0.0
    %2528 = vmatpush1.xpose.msra.mxu0 0.0
    %2529 = vmatprep.subr.mxu0 0.0
    %2530 = vmatpush1.xpose.msra.mxu0 0.0
    %2531 = vmatprep.subr.mxu0 0.0
    %2532 = vmatpush1.xpose.msra.mxu0 0.0
    %2533 = vmatprep.subr.mxu0 0.0
    %2534 = vmatpush1.xpose.msra.mxu0 0.0
    %2535 = vmatprep.subr.mxu0 0.0
    %2536 = vmatpush1.xpose.msra.mxu0 0.0
    %2537 = vmatprep.subr.mxu0 0.0
    %2538 = vmatpush1.xpose.msra.mxu0 0.0
    %2539 = vmatprep.subr.mxu0 0.0
    %2540 = vmatpush1.xpose.msra.mxu0 0.0
    %2541 = vmatprep.subr.mxu0 0.0
    %2542 = vmatpush1.xpose.msra.mxu0 0.0
    %2543 = vmatprep.subr.mxu0 0.0
    %2544 = vmatpush1.xpose.msra.mxu0 0.0
    %2545 = vmatprep.subr.mxu0 0.0
    %2546 = vmatpush1.xpose.msra.mxu0 0.0
    %2547 = vmatprep.subr.mxu0 0.0
    %2548 = vmatpush1.xpose.msra.mxu0 0.0
    %2549 = vmatprep.subr.mxu0 0.0
    %2550 = vmatpush1.xpose.msra.mxu0 0.0
    %2551 = vmatprep.subr.mxu0 0.0
    %2552 = vmatpush1.xpose.msra.mxu0 0.0
    %2553 = vmatprep.subr.mxu0 0.0
    %2554 = vmatpush1.xpose.msra.mxu0 0.0
    %2555 = vmatprep.subr.mxu0 0.0
    %2556 = vmatpush1.xpose.msra.mxu0 0.0
    %2557 = vmatprep.subr.mxu0 0.0
    %2558 = vmatpush1.xpose.msra.mxu0 0.0
    %2559 = vmatprep.subr.mxu0 0.0
    %2560 = vmatpush1.xpose.msra.mxu0 0.0
    %2561 = vmatprep.subr.mxu0 0.0
    %2562 = vmatpush1.xpose.msra.mxu0 0.0
    %2563 = vmatprep.subr.mxu0 0.0
    %2564 = vmatpush1.xpose.msra.mxu0 0.0
    %2565 = vmatprep.subr.mxu0 0.0
    %2566 = vmatpush1.xpose.msra.mxu0 0.0
    %2567 = vmatprep.subr.mxu0 0.0
    %2568 = vmatpush1.xpose.msra.mxu0 0.0
    %2569 = vmatprep.subr.mxu0 0.0
    %2570 = vmatpush1.xpose.msra.mxu0 0.0
    %2571 = vmatprep.subr.mxu0 0.0
    %2572 = vmatpush1.xpose.msra.mxu0 0.0
    %2573 = vmatprep.subr.mxu0 0.0
    %2574 = vmatpush1.xpose.msra.mxu0 0.0
    %2575 = vmatprep.subr.mxu0 0.0
    %2576 = vmatpush1.xpose.msra.mxu0 0.0
    %2577 = vmatprep.subr.mxu0 0.0
    %2578 = vmatpush1.xpose.msra.mxu0 0.0
    %2579 = vmatprep.subr.mxu0 0.0
    %2580 = vmatpush1.xpose.msra.mxu0 0.0
    %2581 = vmatprep.subr.mxu0 0.0
    %2582 = vmatpush1.xpose.msra.mxu0 0.0
    %2583 = vmatprep.mubr.f32.mxu0 0.0
    %2584 = vmatmul.mubr.f32.gmra.mrb[0].mxu0 %v2515
    %v2585 = vpop.f32.mrb[0].mxu0
    %v2586 = vadd.f32 0.0, %v2585
    %v2587 = vpop.f32.mrb[0].mxu0
    %2588 = vdwg.mxu0
    %v2589 = vsel %vm480, %v2396, 0
    %v2591 = vsel %vm480, %v2410, 0
    %2593 = vmatprep.subr.mxu0 0.0
    %2594 = vmatpush1.xpose.msra.mxu0 %v2591
    %2595 = vmatprep.subr.mxu0 0.0
    %2596 = vmatpush1.xpose.msra.mxu0 0.0
    %2597 = vmatprep.subr.mxu0 0.0
    %2598 = vmatpush1.xpose.msra.mxu0 0.0
    %2599 = vmatprep.subr.mxu0 0.0
    %2600 = vmatpush1.xpose.msra.mxu0 0.0
    %2601 = vmatprep.subr.mxu0 0.0
    %2602 = vmatpush1.xpose.msra.mxu0 0.0
    %2603 = vmatprep.subr.mxu0 0.0
    %2604 = vmatpush1.xpose.msra.mxu0 0.0
    %2605 = vmatprep.subr.mxu0 0.0
    %2606 = vmatpush1.xpose.msra.mxu0 0.0
    %2607 = vmatprep.subr.mxu0 0.0
    %2608 = vmatpush1.xpose.msra.mxu0 0.0
    %2609 = vmatprep.subr.mxu0 0.0
    %2610 = vmatpush1.xpose.msra.mxu0 0.0
    %2611 = vmatprep.subr.mxu0 0.0
    %2612 = vmatpush1.xpose.msra.mxu0 0.0
    %2613 = vmatprep.subr.mxu0 0.0
    %2614 = vmatpush1.xpose.msra.mxu0 0.0
    %2615 = vmatprep.subr.mxu0 0.0
    %2616 = vmatpush1.xpose.msra.mxu0 0.0
    %2617 = vmatprep.subr.mxu0 0.0
    %2618 = vmatpush1.xpose.msra.mxu0 0.0
    %2619 = vmatprep.subr.mxu0 0.0
    %2620 = vmatpush1.xpose.msra.mxu0 0.0
    %2621 = vmatprep.subr.mxu0 0.0
    %2622 = vmatpush1.xpose.msra.mxu0 0.0
    %2623 = vmatprep.subr.mxu0 0.0
    %2624 = vmatpush1.xpose.msra.mxu0 0.0
    %2625 = vmatprep.subr.mxu0 0.0
    %2626 = vmatpush1.xpose.msra.mxu0 0.0
    %2627 = vmatprep.subr.mxu0 0.0
    %2628 = vmatpush1.xpose.msra.mxu0 0.0
    %2629 = vmatprep.subr.mxu0 0.0
    %2630 = vmatpush1.xpose.msra.mxu0 0.0
    %2631 = vmatprep.subr.mxu0 0.0
    %2632 = vmatpush1.xpose.msra.mxu0 0.0
    %2633 = vmatprep.subr.mxu0 0.0
    %2634 = vmatpush1.xpose.msra.mxu0 0.0
    %2635 = vmatprep.subr.mxu0 0.0
    %2636 = vmatpush1.xpose.msra.mxu0 0.0
    %2637 = vmatprep.subr.mxu0 0.0
    %2638 = vmatpush1.xpose.msra.mxu0 0.0
    %2639 = vmatprep.subr.mxu0 0.0
    %2640 = vmatpush1.xpose.msra.mxu0 0.0
    %2641 = vmatprep.subr.mxu0 0.0
    %2642 = vmatpush1.xpose.msra.mxu0 0.0
    %2643 = vmatprep.subr.mxu0 0.0
    %2644 = vmatpush1.xpose.msra.mxu0 0.0
    %2645 = vmatprep.subr.mxu0 0.0
    %2646 = vmatpush1.xpose.msra.mxu0 0.0
    %2647 = vmatprep.subr.mxu0 0.0
    %2648 = vmatpush1.xpose.msra.mxu0 0.0
    %2649 = vmatprep.subr.mxu0 0.0
    %2650 = vmatpush1.xpose.msra.mxu0 0.0
    %2651 = vmatprep.subr.mxu0 0.0
    %2652 = vmatpush1.xpose.msra.mxu0 0.0
    %2653 = vmatprep.subr.mxu0 0.0
    %2654 = vmatpush1.xpose.msra.mxu0 0.0
    %2655 = vmatprep.subr.mxu0 0.0
    %2656 = vmatpush1.xpose.msra.mxu0 0.0
    %2657 = vmatprep.mubr.f32.mxu0 0.0
    %2658 = vmatmul.mubr.f32.gmra.mrb[0].mxu0 %v2589
    %v2659 = vpop.f32.mrb[0].mxu0
    %v2660 = vadd.f32 0.0, %v2659
    %v2661 = vpop.f32.mrb[0].mxu0
    %2662 = vdwg.mxu0
    %v2663 = vsel %vm480, %v2398, 0
    %v2665 = vsel %vm480, %v2412, 0
    %2667 = vmatprep.subr.mxu0 0.0
    %2668 = vmatpush1.xpose.msra.mxu0 %v2665
    %2669 = vmatprep.subr.mxu0 0.0
    %2670 = vmatpush1.xpose.msra.mxu0 0.0
    %2671 = vmatprep.subr.mxu0 0.0
    %2672 = vmatpush1.xpose.msra.mxu0 0.0
    %2673 = vmatprep.subr.mxu0 0.0
    %2674 = vmatpush1.xpose.msra.mxu0 0.0
    %2675 = vmatprep.subr.mxu0 0.0
    %2676 = vmatpush1.xpose.msra.mxu0 0.0
    %2677 = vmatprep.subr.mxu0 0.0
    %2678 = vmatpush1.xpose.msra.mxu0 0.0
    %2679 = vmatprep.subr.mxu0 0.0
    %2680 = vmatpush1.xpose.msra.mxu0 0.0
    %2681 = vmatprep.subr.mxu0 0.0
    %2682 = vmatpush1.xpose.msra.mxu0 0.0
    %2683 = vmatprep.subr.mxu0 0.0
    %2684 = vmatpush1.xpose.msra.mxu0 0.0
    %2685 = vmatprep.subr.mxu0 0.0
    %2686 = vmatpush1.xpose.msra.mxu0 0.0
    %2687 = vmatprep.subr.mxu0 0.0
    %2688 = vmatpush1.xpose.msra.mxu0 0.0
    %2689 = vmatprep.subr.mxu0 0.0
    %2690 = vmatpush1.xpose.msra.mxu0 0.0
    %2691 = vmatprep.subr.mxu0 0.0
    %2692 = vmatpush1.xpose.msra.mxu0 0.0
    %2693 = vmatprep.subr.mxu0 0.0
    %2694 = vmatpush1.xpose.msra.mxu0 0.0
    %2695 = vmatprep.subr.mxu0 0.0
    %2696 = vmatpush1.xpose.msra.mxu0 0.0
    %2697 = vmatprep.subr.mxu0 0.0
    %2698 = vmatpush1.xpose.msra.mxu0 0.0
    %2699 = vmatprep.subr.mxu0 0.0
    %2700 = vmatpush1.xpose.msra.mxu0 0.0
    %2701 = vmatprep.subr.mxu0 0.0
    %2702 = vmatpush1.xpose.msra.mxu0 0.0
    %2703 = vmatprep.subr.mxu0 0.0
    %2704 = vmatpush1.xpose.msra.mxu0 0.0
    %2705 = vmatprep.subr.mxu0 0.0
    %2706 = vmatpush1.xpose.msra.mxu0 0.0
    %2707 = vmatprep.subr.mxu0 0.0
    %2708 = vmatpush1.xpose.msra.mxu0 0.0
    %2709 = vmatprep.subr.mxu0 0.0
    %2710 = vmatpush1.xpose.msra.mxu0 0.0
    %2711 = vmatprep.subr.mxu0 0.0
    %2712 = vmatpush1.xpose.msra.mxu0 0.0
    %2713 = vmatprep.subr.mxu0 0.0
    %2714 = vmatpush1.xpose.msra.mxu0 0.0
    %2715 = vmatprep.subr.mxu0 0.0
    %2716 = vmatpush1.xpose.msra.mxu0 0.0
    %2717 = vmatprep.subr.mxu0 0.0
    %2718 = vmatpush1.xpose.msra.mxu0 0.0
    %2719 = vmatprep.subr.mxu0 0.0
    %2720 = vmatpush1.xpose.msra.mxu0 0.0
    %2721 = vmatprep.subr.mxu0 0.0
    %2722 = vmatpush1.xpose.msra.mxu0 0.0
    %2723 = vmatprep.subr.mxu0 0.0
    %2724 = vmatpush1.xpose.msra.mxu0 0.0
    %2725 = vmatprep.subr.mxu0 0.0
    %2726 = vmatpush1.xpose.msra.mxu0 0.0
    %2727 = vmatprep.subr.mxu0 0.0
    %2728 = vmatpush1.xpose.msra.mxu0 0.0
    %2729 = vmatprep.subr.mxu0 0.0
    %2730 = vmatpush1.xpose.msra.mxu0 0.0
    %2731 = vmatprep.mubr.f32.mxu0 0.0
    %2732 = vmatmul.mubr.f32.gmra.mrb[0].mxu0 %v2663
    %v2733 = vpop.f32.mrb[0].mxu0
    %v2734 = vadd.f32 0.0, %v2733
    %v2735 = vpop.f32.mrb[0].mxu0
    %2736 = vdwg.mxu0
    %v2737 = vsel %vm480, %v2400, 0
    %v2739 = vsel %vm480, %v2414, 0
    %2741 = vmatprep.subr.mxu0 0.0
    %2742 = vmatpush1.xpose.msra.mxu0 %v2739
    %2743 = vmatprep.subr.mxu0 0.0
    %2744 = vmatpush1.xpose.msra.mxu0 0.0
    %2745 = vmatprep.subr.mxu0 0.0
    %2746 = vmatpush1.xpose.msra.mxu0 0.0
    %2747 = vmatprep.subr.mxu0 0.0
    %2748 = vmatpush1.xpose.msra.mxu0 0.0
    %2749 = vmatprep.subr.mxu0 0.0
    %2750 = vmatpush1.xpose.msra.mxu0 0.0
    %2751 = vmatprep.subr.mxu0 0.0
    %2752 = vmatpush1.xpose.msra.mxu0 0.0
    %2753 = vmatprep.subr.mxu0 0.0
    %2754 = vmatpush1.xpose.msra.mxu0 0.0
    %2755 = vmatprep.subr.mxu0 0.0
    %2756 = vmatpush1.xpose.msra.mxu0 0.0
    %2757 = vmatprep.subr.mxu0 0.0
    %2758 = vmatpush1.xpose.msra.mxu0 0.0
    %2759 = vmatprep.subr.mxu0 0.0
    %2760 = vmatpush1.xpose.msra.mxu0 0.0
    %2761 = vmatprep.subr.mxu0 0.0
    %2762 = vmatpush1.xpose.msra.mxu0 0.0
    %2763 = vmatprep.subr.mxu0 0.0
    %2764 = vmatpush1.xpose.msra.mxu0 0.0
    %2765 = vmatprep.subr.mxu0 0.0
    %2766 = vmatpush1.xpose.msra.mxu0 0.0
    %2767 = vmatprep.subr.mxu0 0.0
    %2768 = vmatpush1.xpose.msra.mxu0 0.0
    %2769 = vmatprep.subr.mxu0 0.0
    %2770 = vmatpush1.xpose.msra.mxu0 0.0
    %2771 = vmatprep.subr.mxu0 0.0
    %2772 = vmatpush1.xpose.msra.mxu0 0.0
    %2773 = vmatprep.subr.mxu0 0.0
    %2774 = vmatpush1.xpose.msra.mxu0 0.0
    %2775 = vmatprep.subr.mxu0 0.0
    %2776 = vmatpush1.xpose.msra.mxu0 0.0
    %2777 = vmatprep.subr.mxu0 0.0
    %2778 = vmatpush1.xpose.msra.mxu0 0.0
    %2779 = vmatprep.subr.mxu0 0.0
    %2780 = vmatpush1.xpose.msra.mxu0 0.0
    %2781 = vmatprep.subr.mxu0 0.0
    %2782 = vmatpush1.xpose.msra.mxu0 0.0
    %2783 = vmatprep.subr.mxu0 0.0
    %2784 = vmatpush1.xpose.msra.mxu0 0.0
    %2785 = vmatprep.subr.mxu0 0.0
    %2786 = vmatpush1.xpose.msra.mxu0 0.0
    %2787 = vmatprep.subr.mxu0 0.0
    %2788 = vmatpush1.xpose.msra.mxu0 0.0
    %2789 = vmatprep.subr.mxu0 0.0
    %2790 = vmatpush1.xpose.msra.mxu0 0.0
    %2791 = vmatprep.subr.mxu0 0.0
    %2792 = vmatpush1.xpose.msra.mxu0 0.0
    %2793 = vmatprep.subr.mxu0 0.0
    %2794 = vmatpush1.xpose.msra.mxu0 0.0
    %2795 = vmatprep.subr.mxu0 0.0
    %2796 = vmatpush1.xpose.msra.mxu0 0.0
    %2797 = vmatprep.subr.mxu0 0.0
    %2798 = vmatpush1.xpose.msra.mxu0 0.0
    %2799 = vmatprep.subr.mxu0 0.0
    %2800 = vmatpush1.xpose.msra.mxu0 0.0
    %2801 = vmatprep.subr.mxu0 0.0
    %2802 = vmatpush1.xpose.msra.mxu0 0.0
    %2803 = vmatprep.subr.mxu0 0.0
    %2804 = vmatpush1.xpose.msra.mxu0 0.0
    %2805 = vmatprep.mubr.f32.mxu0 0.0
    %2806 = vmatmul.mubr.f32.gmra.mrb[0].mxu0 %v2737
    %v2807 = vpop.f32.mrb[0].mxu0
    %v2808 = vadd.f32 0.0, %v2807
    %v2809 = vpop.f32.mrb[0].mxu0
    %2810 = vdwg.mxu0
    %v2811 = vsel %vm480, %v2402, 0
    %v2813 = vsel %vm480, %v2416, 0
    %2815 = vmatprep.subr.mxu0 0.0
    %2816 = vmatpush1.xpose.msra.mxu0 %v2813
    %2817 = vmatprep.subr.mxu0 0.0
    %2818 = vmatpush1.xpose.msra.mxu0 0.0
    %2819 = vmatprep.subr.mxu0 0.0
    %2820 = vmatpush1.xpose.msra.mxu0 0.0
    %2821 = vmatprep.subr.mxu0 0.0
    %2822 = vmatpush1.xpose.msra.mxu0 0.0
    %2823 = vmatprep.subr.mxu0 0.0
    %2824 = vmatpush1.xpose.msra.mxu0 0.0
    %2825 = vmatprep.subr.mxu0 0.0
    %2826 = vmatpush1.xpose.msra.mxu0 0.0
    %2827 = vmatprep.subr.mxu0 0.0
    %2828 = vmatpush1.xpose.msra.mxu0 0.0
    %2829 = vmatprep.subr.mxu0 0.0
    %2830 = vmatpush1.xpose.msra.mxu0 0.0
    %2831 = vmatprep.subr.mxu0 0.0
    %2832 = vmatpush1.xpose.msra.mxu0 0.0
    %2833 = vmatprep.subr.mxu0 0.0
    %2834 = vmatpush1.xpose.msra.mxu0 0.0
    %2835 = vmatprep.subr.mxu0 0.0
    %2836 = vmatpush1.xpose.msra.mxu0 0.0
    %2837 = vmatprep.subr.mxu0 0.0
    %2838 = vmatpush1.xpose.msra.mxu0 0.0
    %2839 = vmatprep.subr.mxu0 0.0
    %2840 = vmatpush1.xpose.msra.mxu0 0.0
    %2841 = vmatprep.subr.mxu0 0.0
    %2842 = vmatpush1.xpose.msra.mxu0 0.0
    %2843 = vmatprep.subr.mxu0 0.0
    %2844 = vmatpush1.xpose.msra.mxu0 0.0
    %2845 = vmatprep.subr.mxu0 0.0
    %2846 = vmatpush1.xpose.msra.mxu0 0.0
    %2847 = vmatprep.subr.mxu0 0.0
    %2848 = vmatpush1.xpose.msra.mxu0 0.0
    %2849 = vmatprep.subr.mxu0 0.0
    %2850 = vmatpush1.xpose.msra.mxu0 0.0
    %2851 = vmatprep.subr.mxu0 0.0
    %2852 = vmatpush1.xpose.msra.mxu0 0.0
    %2853 = vmatprep.subr.mxu0 0.0
    %2854 = vmatpush1.xpose.msra.mxu0 0.0
    %2855 = vmatprep.subr.mxu0 0.0
    %2856 = vmatpush1.xpose.msra.mxu0 0.0
    %2857 = vmatprep.subr.mxu0 0.0
    %2858 = vmatpush1.xpose.msra.mxu0 0.0
    %2859 = vmatprep.subr.mxu0 0.0
    %2860 = vmatpush1.xpose.msra.mxu0 0.0
    %2861 = vmatprep.subr.mxu0 0.0
    %2862 = vmatpush1.xpose.msra.mxu0 0.0
    %2863 = vmatprep.subr.mxu0 0.0
    %2864 = vmatpush1.xpose.msra.mxu0 0.0
    %2865 = vmatprep.subr.mxu0 0.0
    %2866 = vmatpush1.xpose.msra.mxu0 0.0
    %2867 = vmatprep.subr.mxu0 0.0
    %2868 = vmatpush1.xpose.msra.mxu0 0.0
    %2869 = vmatprep.subr.mxu0 0.0
    %2870 = vmatpush1.xpose.msra.mxu0 0.0
    %2871 = vmatprep.subr.mxu0 0.0
    %2872 = vmatpush1.xpose.msra.mxu0 0.0
    %2873 = vmatprep.subr.mxu0 0.0
    %2874 = vmatpush1.xpose.msra.mxu0 0.0
    %2875 = vmatprep.subr.mxu0 0.0
    %2876 = vmatpush1.xpose.msra.mxu0 0.0
    %2877 = vmatprep.subr.mxu0 0.0
    %2878 = vmatpush1.xpose.msra.mxu0 0.0
    %2879 = vmatprep.mubr.f32.mxu0 0.0
    %2880 = vmatmul.mubr.f32.gmra.mrb[0].mxu0 %v2811
    %v2881 = vpop.f32.mrb[0].mxu0
    %v2882 = vadd.f32 0.0, %v2881
    %v2883 = vpop.f32.mrb[0].mxu0
    %2884 = vdwg.mxu0
    %v2885 = vsel %vm480, %v2404, 0
    %v2887 = vsel %vm480, %v2418, 0
    %2889 = vmatprep.subr.mxu0 0.0
    %2890 = vmatpush1.xpose.msra.mxu0 %v2887
    %2891 = vmatprep.subr.mxu0 0.0
    %2892 = vmatpush1.xpose.msra.mxu0 0.0
    %2893 = vmatprep.subr.mxu0 0.0
    %2894 = vmatpush1.xpose.msra.mxu0 0.0
    %2895 = vmatprep.subr.mxu0 0.0
    %2896 = vmatpush1.xpose.msra.mxu0 0.0
    %2897 = vmatprep.subr.mxu0 0.0
    %2898 = vmatpush1.xpose.msra.mxu0 0.0
    %2899 = vmatprep.subr.mxu0 0.0
    %2900 = vmatpush1.xpose.msra.mxu0 0.0
    %2901 = vmatprep.subr.mxu0 0.0
    %2902 = vmatpush1.xpose.msra.mxu0 0.0
    %2903 = vmatprep.subr.mxu0 0.0
    %2904 = vmatpush1.xpose.msra.mxu0 0.0
    %2905 = vmatprep.subr.mxu0 0.0
    %2906 = vmatpush1.xpose.msra.mxu0 0.0
    %2907 = vmatprep.subr.mxu0 0.0
    %2908 = vmatpush1.xpose.msra.mxu0 0.0
    %2909 = vmatprep.subr.mxu0 0.0
    %2910 = vmatpush1.xpose.msra.mxu0 0.0
    %2911 = vmatprep.subr.mxu0 0.0
    %2912 = vmatpush1.xpose.msra.mxu0 0.0
    %2913 = vmatprep.subr.mxu0 0.0
    %2914 = vmatpush1.xpose.msra.mxu0 0.0
    %2915 = vmatprep.subr.mxu0 0.0
    %2916 = vmatpush1.xpose.msra.mxu0 0.0
    %2917 = vmatprep.subr.mxu0 0.0
    %2918 = vmatpush1.xpose.msra.mxu0 0.0
    %2919 = vmatprep.subr.mxu0 0.0
    %2920 = vmatpush1.xpose.msra.mxu0 0.0
    %2921 = vmatprep.subr.mxu0 0.0
    %2922 = vmatpush1.xpose.msra.mxu0 0.0
    %2923 = vmatprep.subr.mxu0 0.0
    %2924 = vmatpush1.xpose.msra.mxu0 0.0
    %2925 = vmatprep.subr.mxu0 0.0
    %2926 = vmatpush1.xpose.msra.mxu0 0.0
    %2927 = vmatprep.subr.mxu0 0.0
    %2928 = vmatpush1.xpose.msra.mxu0 0.0
    %2929 = vmatprep.subr.mxu0 0.0
    %2930 = vmatpush1.xpose.msra.mxu0 0.0
    %2931 = vmatprep.subr.mxu0 0.0
    %2932 = vmatpush1.xpose.msra.mxu0 0.0
    %2933 = vmatprep.subr.mxu0 0.0
    %2934 = vmatpush1.xpose.msra.mxu0 0.0
    %2935 = vmatprep.subr.mxu0 0.0
    %2936 = vmatpush1.xpose.msra.mxu0 0.0
    %2937 = vmatprep.subr.mxu0 0.0
    %2938 = vmatpush1.xpose.msra.mxu0 0.0
    %2939 = vmatprep.subr.mxu0 0.0
    %2940 = vmatpush1.xpose.msra.mxu0 0.0
    %2941 = vmatprep.subr.mxu0 0.0
    %2942 = vmatpush1.xpose.msra.mxu0 0.0
    %2943 = vmatprep.subr.mxu0 0.0
    %2944 = vmatpush1.xpose.msra.mxu0 0.0
    %2945 = vmatprep.subr.mxu0 0.0
    %2946 = vmatpush1.xpose.msra.mxu0 0.0
    %2947 = vmatprep.subr.mxu0 0.0
    %2948 = vmatpush1.xpose.msra.mxu0 0.0
    %2949 = vmatprep.subr.mxu0 0.0
    %2950 = vmatpush1.xpose.msra.mxu0 0.0
    %2951 = vmatprep.subr.mxu0 0.0
    %2952 = vmatpush1.xpose.msra.mxu0 0.0
    %2953 = vmatprep.mubr.f32.mxu0 0.0
    %2954 = vmatmul.mubr.f32.gmra.mrb[0].mxu0 %v2885
    %v2955 = vpop.f32.mrb[0].mxu0
    %v2956 = vadd.f32 0.0, %v2955
    %v2957 = vpop.f32.mrb[0].mxu0
    %2958 = vdwg.mxu0
    %v2959 = vsel %vm480, %v2406, 0
    %v2961 = vsel %vm480, %v2420, 0
    %2963 = vmatprep.subr.mxu0 0.0
    %2964 = vmatpush1.xpose.msra.mxu0 %v2961
    %2965 = vmatprep.subr.mxu0 0.0
    %2966 = vmatpush1.xpose.msra.mxu0 0.0
    %2967 = vmatprep.subr.mxu0 0.0
    %2968 = vmatpush1.xpose.msra.mxu0 0.0
    %2969 = vmatprep.subr.mxu0 0.0
    %2970 = vmatpush1.xpose.msra.mxu0 0.0
    %2971 = vmatprep.subr.mxu0 0.0
    %2972 = vmatpush1.xpose.msra.mxu0 0.0
    %2973 = vmatprep.subr.mxu0 0.0
    %2974 = vmatpush1.xpose.msra.mxu0 0.0
    %2975 = vmatprep.subr.mxu0 0.0
    %2976 = vmatpush1.xpose.msra.mxu0 0.0
    %2977 = vmatprep.subr.mxu0 0.0
    %2978 = vmatpush1.xpose.msra.mxu0 0.0
    %2979 = vmatprep.subr.mxu0 0.0
    %2980 = vmatpush1.xpose.msra.mxu0 0.0
    %2981 = vmatprep.subr.mxu0 0.0
    %2982 = vmatpush1.xpose.msra.mxu0 0.0
    %2983 = vmatprep.subr.mxu0 0.0
    %2984 = vmatpush1.xpose.msra.mxu0 0.0
    %2985 = vmatprep.subr.mxu0 0.0
    %2986 = vmatpush1.xpose.msra.mxu0 0.0
    %2987 = vmatprep.subr.mxu0 0.0
    %2988 = vmatpush1.xpose.msra.mxu0 0.0
    %2989 = vmatprep.subr.mxu0 0.0
    %2990 = vmatpush1.xpose.msra.mxu0 0.0
    %2991 = vmatprep.subr.mxu0 0.0
    %2992 = vmatpush1.xpose.msra.mxu0 0.0
    %2993 = vmatprep.subr.mxu0 0.0
    %2994 = vmatpush1.xpose.msra.mxu0 0.0
    %2995 = vmatprep.subr.mxu0 0.0
    %2996 = vmatpush1.xpose.msra.mxu0 0.0
    %2997 = vmatprep.subr.mxu0 0.0
    %2998 = vmatpush1.xpose.msra.mxu0 0.0
    %2999 = vmatprep.subr.mxu0 0.0
    %3000 = vmatpush1.xpose.msra.mxu0 0.0
    %3001 = vmatprep.subr.mxu0 0.0
    %3002 = vmatpush1.xpose.msra.mxu0 0.0
    %3003 = vmatprep.subr.mxu0 0.0
    %3004 = vmatpush1.xpose.msra.mxu0 0.0
    %3005 = vmatprep.subr.mxu0 0.0
    %3006 = vmatpush1.xpose.msra.mxu0 0.0
    %3007 = vmatprep.subr.mxu0 0.0
    %3008 = vmatpush1.xpose.msra.mxu0 0.0
    %3009 = vmatprep.subr.mxu0 0.0
    %3010 = vmatpush1.xpose.msra.mxu0 0.0
    %3011 = vmatprep.subr.mxu0 0.0
    %3012 = vmatpush1.xpose.msra.mxu0 0.0
    %3013 = vmatprep.subr.mxu0 0.0
    %3014 = vmatpush1.xpose.msra.mxu0 0.0
    %3015 = vmatprep.subr.mxu0 0.0
    %3016 = vmatpush1.xpose.msra.mxu0 0.0
    %3017 = vmatprep.subr.mxu0 0.0
    %3018 = vmatpush1.xpose.msra.mxu0 0.0
    %3019 = vmatprep.subr.mxu0 0.0
    %3020 = vmatpush1.xpose.msra.mxu0 0.0
    %3021 = vmatprep.subr.mxu0 0.0
    %3022 = vmatpush1.xpose.msra.mxu0 0.0
    %3023 = vmatprep.subr.mxu0 0.0
    %3024 = vmatpush1.xpose.msra.mxu0 0.0
    %3025 = vmatprep.subr.mxu0 0.0
    %3026 = vmatpush1.xpose.msra.mxu0 0.0
    %3027 = vmatprep.mubr.f32.mxu0 0.0
    %3028 = vmatmul.mubr.f32.gmra.mrb[0].mxu0 %v2959
    %v3029 = vpop.f32.mrb[0].mxu0
    %v3030 = vadd.f32 0.0, %v3029
    %v3031 = vpop.f32.mrb[0].mxu0
    %3032 = vdwg.mxu0
    %v3033 = vmul.f32 %v2512, 0.35355338
    %v3034 = vmul.f32 %v2586, 0.35355338
    %v3035 = vmul.f32 %v2660, 0.35355338
    %v3036 = vmul.f32 %v2734, 0.35355338
    %v3037 = vmul.f32 %v2808, 0.35355338
    %v3038 = vmul.f32 %v2882, 0.35355338
    %v3039 = vmul.f32 %v2956, 0.35355338
    %v3040 = vmul.f32 %v3030, 0.35355338
    %v3041 = vsel %vm480, %v3033, -inf
    %3042 = vmax.xlane.f32.xlu0 %v3041
    %v3043 = vpop.xlane.xlu0 %3042
    %v3044 = vsel %vm480, %v3034, -inf
    %3045 = vmax.xlane.f32.xlu0 %v3044
    %v3046 = vpop.xlane.xlu0 %3045
    %v3047 = vsel %vm480, %v3035, -inf
    %3048 = vmax.xlane.f32.xlu0 %v3047
    %v3049 = vpop.xlane.xlu0 %3048
    %v3050 = vsel %vm480, %v3036, -inf
    %3051 = vmax.xlane.f32.xlu0 %v3050
    %v3052 = vpop.xlane.xlu0 %3051
    %v3053 = vsel %vm480, %v3037, -inf
    %3054 = vmax.xlane.f32.xlu0 %v3053
    %v3055 = vpop.xlane.xlu0 %3054
    %v3056 = vsel %vm480, %v3038, -inf
    %3057 = vmax.xlane.f32.xlu0 %v3056
    %v3058 = vpop.xlane.xlu0 %3057
    %v3059 = vsel %vm480, %v3039, -inf
    %3060 = vmax.xlane.f32.xlu0 %v3059
    %v3061 = vpop.xlane.xlu0 %3060
    %v3062 = vsel %vm480, %v3040, -inf
    %3063 = vmax.xlane.f32.xlu0 %v3062
    %v3064 = vpop.xlane.xlu0 %3063
    %v3065 = vsub.f32 %v3033, %v3043
    %v3066 = vsub.f32 %v3034, %v3046
    %v3067 = vsub.f32 %v3035, %v3049
    %v3068 = vsub.f32 %v3036, %v3052
    %v3069 = vsub.f32 %v3037, %v3055
    %v3070 = vsub.f32 %v3038, %v3058
    %v3071 = vsub.f32 %v3039, %v3061
    %v3072 = vsub.f32 %v3040, %v3064
    %v3073 = vmul.f32 %v3065, 1.442695
    %v3074 = vpow.pop %v3073
    %v3075 = vmul.f32 %v3066, 1.442695
    %v3076 = vpow.pop %v3075
    %v3077 = vmul.f32 %v3067, 1.442695
    %v3078 = vpow.pop %v3077
    %v3079 = vmul.f32 %v3068, 1.442695
    %v3080 = vpow.pop %v3079
    %v3081 = vmul.f32 %v3069, 1.442695
    %v3082 = vpow.pop %v3081
    %v3083 = vmul.f32 %v3070, 1.442695
    %v3084 = vpow.pop %v3083
    %v3085 = vmul.f32 %v3071, 1.442695
    %v3086 = vpow.pop %v3085
    %v3087 = vmul.f32 %v3072, 1.442695
    %v3088 = vpow.pop %v3087
    %v3089 = vsel %vm480, %v3074, 0.0
    %3090 = vadd.xlane.f32.xlu0 %v3089
    %v3091 = vpop.xlane.xlu0 %3090
    %v3092 = vsel %vm480, %v3076, 0.0
    %3093 = vadd.xlane.f32.xlu0 %v3092
    %v3094 = vpop.xlane.xlu0 %3093
    %v3095 = vsel %vm480, %v3078, 0.0
    %3096 = vadd.xlane.f32.xlu0 %v3095
    %v3097 = vpop.xlane.xlu0 %3096
    %v3098 = vsel %vm480, %v3080, 0.0
    %3099 = vadd.xlane.f32.xlu0 %v3098
    %v3100 = vpop.xlane.xlu0 %3099
    %v3101 = vsel %vm480, %v3082, 0.0
    %3102 = vadd.xlane.f32.xlu0 %v3101
    %v3103 = vpop.xlane.xlu0 %3102
    %v3104 = vsel %vm480, %v3084, 0.0
    %3105 = vadd.xlane.f32.xlu0 %v3104
    %v3106 = vpop.xlane.xlu0 %3105
    %v3107 = vsel %vm480, %v3086, 0.0
    %3108 = vadd.xlane.f32.xlu0 %v3107
    %v3109 = vpop.xlane.xlu0 %3108
    %v3110 = vsel %vm480, %v3088, 0.0
    %3111 = vadd.xlane.f32.xlu0 %v3110
    %v3112 = vpop.xlane.xlu0 %3111
    %v3113 = vrcp.pop %v3091
    %v3114 = vrcp.pop %v3094
    %v3115 = vrcp.pop %v3097
    %v3116 = vrcp.pop %v3100
    %v3117 = vrcp.pop %v3103
    %v3118 = vrcp.pop %v3106
    %v3119 = vrcp.pop %v3109
    %v3120 = vrcp.pop %v3112
    %v3121 = vmul.f32 %v3074, %v3113
    %v3122 = vmul.f32 %v3076, %v3114
    %v3123 = vmul.f32 %v3078, %v3115
    %v3124 = vmul.f32 %v3080, %v3116
    %v3125 = vmul.f32 %v3082, %v3117
    %v3126 = vmul.f32 %v3084, %v3118
    %v3127 = vmul.f32 %v3086, %v3119
    %v3128 = vmul.f32 %v3088, %v3120
    %v3130 = vsel %vm480, %v3121, 0
    %3132 = vmatprep.subr.mxu0 0.0
    %3133 = vmatpush1.msra.mxu0 %v2385
    %3134 = vmatprep.subr.mxu0 0.0
    %3135 = vmatpush1.msra.mxu0 0.0
    %3136 = vmatprep.subr.mxu0 0.0
    %3137 = vmatpush1.msra.mxu0 0.0
    %3138 = vmatprep.subr.mxu0 0.0
    %3139 = vmatpush1.msra.mxu0 0.0
    %3140 = vmatprep.subr.mxu0 0.0
    %3141 = vmatpush1.msra.mxu0 0.0
    %3142 = vmatprep.subr.mxu0 0.0
    %3143 = vmatpush1.msra.mxu0 0.0
    %3144 = vmatprep.subr.mxu0 0.0
    %3145 = vmatpush1.msra.mxu0 0.0
    %3146 = vmatprep.subr.mxu0 0.0
    %3147 = vmatpush1.msra.mxu0 0.0
    %3148 = vmatprep.subr.mxu0 0.0
    %3149 = vmatpush1.msra.mxu0 0.0
    %3150 = vmatprep.subr.mxu0 0.0
    %3151 = vmatpush1.msra.mxu0 0.0
    %3152 = vmatprep.subr.mxu0 0.0
    %3153 = vmatpush1.msra.mxu0 0.0
    %3154 = vmatprep.subr.mxu0 0.0
    %3155 = vmatpush1.msra.mxu0 0.0
    %3156 = vmatprep.subr.mxu0 0.0
    %3157 = vmatpush1.msra.mxu0 0.0
    %3158 = vmatprep.subr.mxu0 0.0
    %3159 = vmatpush1.msra.mxu0 0.0
    %3160 = vmatprep.subr.mxu0 0.0
    %3161 = vmatpush1.msra.mxu0 0.0
    %3162 = vmatprep.subr.mxu0 0.0
    %3163 = vmatpush1.msra.mxu0 0.0
    %3164 = vmatprep.subr.mxu0 0.0
    %3165 = vmatpush1.msra.mxu0 0.0
    %3166 = vmatprep.subr.mxu0 0.0
    %3167 = vmatpush1.msra.mxu0 0.0
    %3168 = vmatprep.subr.mxu0 0.0
    %3169 = vmatpush1.msra.mxu0 0.0
    %3170 = vmatprep.subr.mxu0 0.0
    %3171 = vmatpush1.msra.mxu0 0.0
    %3172 = vmatprep.subr.mxu0 0.0
    %3173 = vmatpush1.msra.mxu0 0.0
    %3174 = vmatprep.subr.mxu0 0.0
    %3175 = vmatpush1.msra.mxu0 0.0
    %3176 = vmatprep.subr.mxu0 0.0
    %3177 = vmatpush1.msra.mxu0 0.0
    %3178 = vmatprep.subr.mxu0 0.0
    %3179 = vmatpush1.msra.mxu0 0.0
    %3180 = vmatprep.subr.mxu0 0.0
    %3181 = vmatpush1.msra.mxu0 0.0
    %3182 = vmatprep.subr.mxu0 0.0
    %3183 = vmatpush1.msra.mxu0 0.0
    %3184 = vmatprep.subr.mxu0 0.0
    %3185 = vmatpush1.msra.mxu0 0.0
    %3186 = vmatprep.subr.mxu0 0.0
    %3187 = vmatpush1.msra.mxu0 0.0
    %3188 = vmatprep.subr.mxu0 0.0
    %3189 = vmatpush1.msra.mxu0 0.0
    %3190 = vmatprep.subr.mxu0 0.0
    %3191 = vmatpush1.msra.mxu0 0.0
    %3192 = vmatprep.subr.mxu0 0.0
    %3193 = vmatpush1.msra.mxu0 0.0
    %3194 = vmatprep.subr.mxu0 0.0
    %3195 = vmatpush1.msra.mxu0 0.0
    %3196 = vmatprep.mubr.f32.mxu0 0.0
    %3197 = vmatmul.mubr.f32.gmra.mrb[0].mxu0 %v3130
    %v3198 = vpop.f32.mrb[0].mxu0
    %v3199 = vadd.f32 0.0, %v3198
    %v3200 = vpop.f32.mrb[0].mxu0
    %3201 = vdwg.mxu0
    %v3203 = vsel %vm480, %v3122, 0
    %3205 = vmatprep.subr.mxu0 0.0
    %3206 = vmatpush1.msra.mxu0 %v2390
    %3207 = vmatprep.subr.mxu0 0.0
    %3208 = vmatpush1.msra.mxu0 0.0
    %3209 = vmatprep.subr.mxu0 0.0
    %3210 = vmatpush1.msra.mxu0 0.0
    %3211 = vmatprep.subr.mxu0 0.0
    %3212 = vmatpush1.msra.mxu0 0.0
    %3213 = vmatprep.subr.mxu0 0.0
    %3214 = vmatpush1.msra.mxu0 0.0
    %3215 = vmatprep.subr.mxu0 0.0
    %3216 = vmatpush1.msra.mxu0 0.0
    %3217 = vmatprep.subr.mxu0 0.0
    %3218 = vmatpush1.msra.mxu0 0.0
    %3219 = vmatprep.subr.mxu0 0.0
    %3220 = vmatpush1.msra.mxu0 0.0
    %3221 = vmatprep.subr.mxu0 0.0
    %3222 = vmatpush1.msra.mxu0 0.0
    %3223 = vmatprep.subr.mxu0 0.0
    %3224 = vmatpush1.msra.mxu0 0.0
    %3225 = vmatprep.subr.mxu0 0.0
    %3226 = vmatpush1.msra.mxu0 0.0
    %3227 = vmatprep.subr.mxu0 0.0
    %3228 = vmatpush1.msra.mxu0 0.0
    %3229 = vmatprep.subr.mxu0 0.0
    %3230 = vmatpush1.msra.mxu0 0.0
    %3231 = vmatprep.subr.mxu0 0.0
    %3232 = vmatpush1.msra.mxu0 0.0
    %3233 = vmatprep.subr.mxu0 0.0
    %3234 = vmatpush1.msra.mxu0 0.0
    %3235 = vmatprep.subr.mxu0 0.0
    %3236 = vmatpush1.msra.mxu0 0.0
    %3237 = vmatprep.subr.mxu0 0.0
    %3238 = vmatpush1.msra.mxu0 0.0
    %3239 = vmatprep.subr.mxu0 0.0
    %3240 = vmatpush1.msra.mxu0 0.0
    %3241 = vmatprep.subr.mxu0 0.0
    %3242 = vmatpush1.msra.mxu0 0.0
    %3243 = vmatprep.subr.mxu0 0.0
    %3244 = vmatpush1.msra.mxu0 0.0
    %3245 = vmatprep.subr.mxu0 0.0
    %3246 = vmatpush1.msra.mxu0 0.0
    %3247 = vmatprep.subr.mxu0 0.0
    %3248 = vmatpush1.msra.mxu0 0.0
    %3249 = vmatprep.subr.mxu0 0.0
    %3250 = vmatpush1.msra.mxu0 0.0
    %3251 = vmatprep.subr.mxu0 0.0
    %3252 = vmatpush1.msra.mxu0 0.0
    %3253 = vmatprep.subr.mxu0 0.0
    %3254 = vmatpush1.msra.mxu0 0.0
    %3255 = vmatprep.subr.mxu0 0.0
    %3256 = vmatpush1.msra.mxu0 0.0
    %3257 = vmatprep.subr.mxu0 0.0
    %3258 = vmatpush1.msra.mxu0 0.0
    %3259 = vmatprep.subr.mxu0 0.0
    %3260 = vmatpush1.msra.mxu0 0.0
    %3261 = vmatprep.subr.mxu0 0.0
    %3262 = vmatpush1.msra.mxu0 0.0
    %3263 = vmatprep.subr.mxu0 0.0
    %3264 = vmatpush1.msra.mxu0 0.0
    %3265 = vmatprep.subr.mxu0 0.0
    %3266 = vmatpush1.msra.mxu0 0.0
    %3267 = vmatprep.subr.mxu0 0.0
    %3268 = vmatpush1.msra.mxu0 0.0
    %3269 = vmatprep.mubr.f32.mxu0 0.0
    %3270 = vmatmul.mubr.f32.gmra.mrb[0].mxu0 %v3203
    %v3271 = vpop.f32.mrb[0].mxu0
    %v3272 = vadd.f32 0.0, %v3271
    %v3273 = vpop.f32.mrb[0].mxu0
    %3274 = vdwg.mxu0
    %v3276 = vsel %vm480, %v3123, 0
    %3278 = vmatprep.subr.mxu0 0.0
    %3279 = vmatpush1.msra.mxu0 %v2424
    %3280 = vmatprep.subr.mxu0 0.0
    %3281 = vmatpush1.msra.mxu0 0.0
    %3282 = vmatprep.subr.mxu0 0.0
    %3283 = vmatpush1.msra.mxu0 0.0
    %3284 = vmatprep.subr.mxu0 0.0
    %3285 = vmatpush1.msra.mxu0 0.0
    %3286 = vmatprep.subr.mxu0 0.0
    %3287 = vmatpush1.msra.mxu0 0.0
    %3288 = vmatprep.subr.mxu0 0.0
    %3289 = vmatpush1.msra.mxu0 0.0
    %3290 = vmatprep.subr.mxu0 0.0
    %3291 = vmatpush1.msra.mxu0 0.0
    %3292 = vmatprep.subr.mxu0 0.0
    %3293 = vmatpush1.msra.mxu0 0.0
    %3294 = vmatprep.subr.mxu0 0.0
    %3295 = vmatpush1.msra.mxu0 0.0
    %3296 = vmatprep.subr.mxu0 0.0
    %3297 = vmatpush1.msra.mxu0 0.0
    %3298 = vmatprep.subr.mxu0 0.0
    %3299 = vmatpush1.msra.mxu0 0.0
    %3300 = vmatprep.subr.mxu0 0.0
    %3301 = vmatpush1.msra.mxu0 0.0
    %3302 = vmatprep.subr.mxu0 0.0
    %3303 = vmatpush1.msra.mxu0 0.0
    %3304 = vmatprep.subr.mxu0 0.0
    %3305 = vmatpush1.msra.mxu0 0.0
    %3306 = vmatprep.subr.mxu0 0.0
    %3307 = vmatpush1.msra.mxu0 0.0
    %3308 = vmatprep.subr.mxu0 0.0
    %3309 = vmatpush1.msra.mxu0 0.0
    %3310 = vmatprep.subr.mxu0 0.0
    %3311 = vmatpush1.msra.mxu0 0.0
    %3312 = vmatprep.subr.mxu0 0.0
    %3313 = vmatpush1.msra.mxu0 0.0
    %3314 = vmatprep.subr.mxu0 0.0
    %3315 = vmatpush1.msra.mxu0 0.0
    %3316 = vmatprep.subr.mxu0 0.0
    %3317 = vmatpush1.msra.mxu0 0.0
    %3318 = vmatprep.subr.mxu0 0.0
    %3319 = vmatpush1.msra.mxu0 0.0
    %3320 = vmatprep.subr.mxu0 0.0
    %3321 = vmatpush1.msra.mxu0 0.0
    %3322 = vmatprep.subr.mxu0 0.0
    %3323 = vmatpush1.msra.mxu0 0.0
    %3324 = vmatprep.subr.mxu0 0.0
    %3325 = vmatpush1.msra.mxu0 0.0
    %3326 = vmatprep.subr.mxu0 0.0
    %3327 = vmatpush1.msra.mxu0 0.0
    %3328 = vmatprep.subr.mxu0 0.0
    %3329 = vmatpush1.msra.mxu0 0.0
    %3330 = vmatprep.subr.mxu0 0.0
    %3331 = vmatpush1.msra.mxu0 0.0
    %3332 = vmatprep.subr.mxu0 0.0
    %3333 = vmatpush1.msra.mxu0 0.0
    %3334 = vmatprep.subr.mxu0 0.0
    %3335 = vmatpush1.msra.mxu0 0.0
    %3336 = vmatprep.subr.mxu0 0.0
    %3337 = vmatpush1.msra.mxu0 0.0
    %3338 = vmatprep.subr.mxu0 0.0
    %3339 = vmatpush1.msra.mxu0 0.0
    %3340 = vmatprep.subr.mxu0 0.0
    %3341 = vmatpush1.msra.mxu0 0.0
    %3342 = vmatprep.mubr.f32.mxu0 0.0
    %3343 = vmatmul.mubr.f32.gmra.mrb[0].mxu0 %v3276
    %v3344 = vpop.f32.mrb[0].mxu0
    %v3345 = vadd.f32 0.0, %v3344
    %v3346 = vpop.f32.mrb[0].mxu0
    %3347 = vdwg.mxu0
    %v3349 = vsel %vm480, %v3124, 0
    %3351 = vmatprep.subr.mxu0 0.0
    %3352 = vmatpush1.msra.mxu0 %v2426
    %3353 = vmatprep.subr.mxu0 0.0
    %3354 = vmatpush1.msra.mxu0 0.0
    %3355 = vmatprep.subr.mxu0 0.0
    %3356 = vmatpush1.msra.mxu0 0.0
    %3357 = vmatprep.subr.mxu0 0.0
    %3358 = vmatpush1.msra.mxu0 0.0
    %3359 = vmatprep.subr.mxu0 0.0
    %3360 = vmatpush1.msra.mxu0 0.0
    %3361 = vmatprep.subr.mxu0 0.0
    %3362 = vmatpush1.msra.mxu0 0.0
    %3363 = vmatprep.subr.mxu0 0.0
    %3364 = vmatpush1.msra.mxu0 0.0
    %3365 = vmatprep.subr.mxu0 0.0
    %3366 = vmatpush1.msra.mxu0 0.0
    %3367 = vmatprep.subr.mxu0 0.0
    %3368 = vmatpush1.msra.mxu0 0.0
    %3369 = vmatprep.subr.mxu0 0.0
    %3370 = vmatpush1.msra.mxu0 0.0
    %3371 = vmatprep.subr.mxu0 0.0
    %3372 = vmatpush1.msra.mxu0 0.0
    %3373 = vmatprep.subr.mxu0 0.0
    %3374 = vmatpush1.msra.mxu0 0.0
    %3375 = vmatprep.subr.mxu0 0.0
    %3376 = vmatpush1.msra.mxu0 0.0
    %3377 = vmatprep.subr.mxu0 0.0
    %3378 = vmatpush1.msra.mxu0 0.0
    %3379 = vmatprep.subr.mxu0 0.0
    %3380 = vmatpush1.msra.mxu0 0.0
    %3381 = vmatprep.subr.mxu0 0.0
    %3382 = vmatpush1.msra.mxu0 0.0
    %3383 = vmatprep.subr.mxu0 0.0
    %3384 = vmatpush1.msra.mxu0 0.0
    %3385 = vmatprep.subr.mxu0 0.0
    %3386 = vmatpush1.msra.mxu0 0.0
    %3387 = vmatprep.subr.mxu0 0.0
    %3388 = vmatpush1.msra.mxu0 0.0
    %3389 = vmatprep.subr.mxu0 0.0
    %3390 = vmatpush1.msra.mxu0 0.0
    %3391 = vmatprep.subr.mxu0 0.0
    %3392 = vmatpush1.msra.mxu0 0.0
    %3393 = vmatprep.subr.mxu0 0.0
    %3394 = vmatpush1.msra.mxu0 0.0
    %3395 = vmatprep.subr.mxu0 0.0
    %3396 = vmatpush1.msra.mxu0 0.0
    %3397 = vmatprep.subr.mxu0 0.0
    %3398 = vmatpush1.msra.mxu0 0.0
    %3399 = vmatprep.subr.mxu0 0.0
    %3400 = vmatpush1.msra.mxu0 0.0
    %3401 = vmatprep.subr.mxu0 0.0
    %3402 = vmatpush1.msra.mxu0 0.0
    %3403 = vmatprep.subr.mxu0 0.0
    %3404 = vmatpush1.msra.mxu0 0.0
    %3405 = vmatprep.subr.mxu0 0.0
    %3406 = vmatpush1.msra.mxu0 0.0
    %3407 = vmatprep.subr.mxu0 0.0
    %3408 = vmatpush1.msra.mxu0 0.0
    %3409 = vmatprep.subr.mxu0 0.0
    %3410 = vmatpush1.msra.mxu0 0.0
    %3411 = vmatprep.subr.mxu0 0.0
    %3412 = vmatpush1.msra.mxu0 0.0
    %3413 = vmatprep.subr.mxu0 0.0
    %3414 = vmatpush1.msra.mxu0 0.0
    %3415 = vmatprep.mubr.f32.mxu0 0.0
    %3416 = vmatmul.mubr.f32.gmra.mrb[0].mxu0 %v3349
    %v3417 = vpop.f32.mrb[0].mxu0
    %v3418 = vadd.f32 0.0, %v3417
    %v3419 = vpop.f32.mrb[0].mxu0
    %3420 = vdwg.mxu0
    %v3422 = vsel %vm480, %v3125, 0
    %3424 = vmatprep.subr.mxu0 0.0
    %3425 = vmatpush1.msra.mxu0 %v2430
    %3426 = vmatprep.subr.mxu0 0.0
    %3427 = vmatpush1.msra.mxu0 0.0
    %3428 = vmatprep.subr.mxu0 0.0
    %3429 = vmatpush1.msra.mxu0 0.0
    %3430 = vmatprep.subr.mxu0 0.0
    %3431 = vmatpush1.msra.mxu0 0.0
    %3432 = vmatprep.subr.mxu0 0.0
    %3433 = vmatpush1.msra.mxu0 0.0
    %3434 = vmatprep.subr.mxu0 0.0
    %3435 = vmatpush1.msra.mxu0 0.0
    %3436 = vmatprep.subr.mxu0 0.0
    %3437 = vmatpush1.msra.mxu0 0.0
    %3438 = vmatprep.subr.mxu0 0.0
    %3439 = vmatpush1.msra.mxu0 0.0
    %3440 = vmatprep.subr.mxu0 0.0
    %3441 = vmatpush1.msra.mxu0 0.0
    %3442 = vmatprep.subr.mxu0 0.0
    %3443 = vmatpush1.msra.mxu0 0.0
    %3444 = vmatprep.subr.mxu0 0.0
    %3445 = vmatpush1.msra.mxu0 0.0
    %3446 = vmatprep.subr.mxu0 0.0
    %3447 = vmatpush1.msra.mxu0 0.0
    %3448 = vmatprep.subr.mxu0 0.0
    %3449 = vmatpush1.msra.mxu0 0.0
    %3450 = vmatprep.subr.mxu0 0.0
    %3451 = vmatpush1.msra.mxu0 0.0
    %3452 = vmatprep.subr.mxu0 0.0
    %3453 = vmatpush1.msra.mxu0 0.0
    %3454 = vmatprep.subr.mxu0 0.0
    %3455 = vmatpush1.msra.mxu0 0.0
    %3456 = vmatprep.subr.mxu0 0.0
    %3457 = vmatpush1.msra.mxu0 0.0
    %3458 = vmatprep.subr.mxu0 0.0
    %3459 = vmatpush1.msra.mxu0 0.0
    %3460 = vmatprep.subr.mxu0 0.0
    %3461 = vmatpush1.msra.mxu0 0.0
    %3462 = vmatprep.subr.mxu0 0.0
    %3463 = vmatpush1.msra.mxu0 0.0
    %3464 = vmatprep.subr.mxu0 0.0
    %3465 = vmatpush1.msra.mxu0 0.0
    %3466 = vmatprep.subr.mxu0 0.0
    %3467 = vmatpush1.msra.mxu0 0.0
    %3468 = vmatprep.subr.mxu0 0.0
    %3469 = vmatpush1.msra.mxu0 0.0
    %3470 = vmatprep.subr.mxu0 0.0
    %3471 = vmatpush1.msra.mxu0 0.0
    %3472 = vmatprep.subr.mxu0 0.0
    %3473 = vmatpush1.msra.mxu0 0.0
    %3474 = vmatprep.subr.mxu0 0.0
    %3475 = vmatpush1.msra.mxu0 0.0
    %3476 = vmatprep.subr.mxu0 0.0
    %3477 = vmatpush1.msra.mxu0 0.0
    %3478 = vmatprep.subr.mxu0 0.0
    %3479 = vmatpush1.msra.mxu0 0.0
    %3480 = vmatprep.subr.mxu0 0.0
    %3481 = vmatpush1.msra.mxu0 0.0
    %3482 = vmatprep.subr.mxu0 0.0
    %3483 = vmatpush1.msra.mxu0 0.0
    %3484 = vmatprep.subr.mxu0 0.0
    %3485 = vmatpush1.msra.mxu0 0.0
    %3486 = vmatprep.subr.mxu0 0.0
    %3487 = vmatpush1.msra.mxu0 0.0
    %3488 = vmatprep.mubr.f32.mxu0 0.0
    %3489 = vmatmul.mubr.f32.gmra.mrb[0].mxu0 %v3422
    %v3490 = vpop.f32.mrb[0].mxu0
    %v3491 = vadd.f32 0.0, %v3490
    %v3492 = vpop.f32.mrb[0].mxu0
    %3493 = vdwg.mxu0
    %v3495 = vsel %vm480, %v3126, 0
    %3497 = vmatprep.subr.mxu0 0.0
    %3498 = vmatpush1.msra.mxu0 %v2432
    %3499 = vmatprep.subr.mxu0 0.0
    %3500 = vmatpush1.msra.mxu0 0.0
    %3501 = vmatprep.subr.mxu0 0.0
    %3502 = vmatpush1.msra.mxu0 0.0
    %3503 = vmatprep.subr.mxu0 0.0
    %3504 = vmatpush1.msra.mxu0 0.0
    %3505 = vmatprep.subr.mxu0 0.0
    %3506 = vmatpush1.msra.mxu0 0.0
    %3507 = vmatprep.subr.mxu0 0.0
    %3508 = vmatpush1.msra.mxu0 0.0
    %3509 = vmatprep.subr.mxu0 0.0
    %3510 = vmatpush1.msra.mxu0 0.0
    %3511 = vmatprep.subr.mxu0 0.0
    %3512 = vmatpush1.msra.mxu0 0.0
    %3513 = vmatprep.subr.mxu0 0.0
    %3514 = vmatpush1.msra.mxu0 0.0
    %3515 = vmatprep.subr.mxu0 0.0
    %3516 = vmatpush1.msra.mxu0 0.0
    %3517 = vmatprep.subr.mxu0 0.0
    %3518 = vmatpush1.msra.mxu0 0.0
    %3519 = vmatprep.subr.mxu0 0.0
    %3520 = vmatpush1.msra.mxu0 0.0
    %3521 = vmatprep.subr.mxu0 0.0
    %3522 = vmatpush1.msra.mxu0 0.0
    %3523 = vmatprep.subr.mxu0 0.0
    %3524 = vmatpush1.msra.mxu0 0.0
    %3525 = vmatprep.subr.mxu0 0.0
    %3526 = vmatpush1.msra.mxu0 0.0
    %3527 = vmatprep.subr.mxu0 0.0
    %3528 = vmatpush1.msra.mxu0 0.0
    %3529 = vmatprep.subr.mxu0 0.0
    %3530 = vmatpush1.msra.mxu0 0.0
    %3531 = vmatprep.subr.mxu0 0.0
    %3532 = vmatpush1.msra.mxu0 0.0
    %3533 = vmatprep.subr.mxu0 0.0
    %3534 = vmatpush1.msra.mxu0 0.0
    %3535 = vmatprep.subr.mxu0 0.0
    %3536 = vmatpush1.msra.mxu0 0.0
    %3537 = vmatprep.subr.mxu0 0.0
    %3538 = vmatpush1.msra.mxu0 0.0
    %3539 = vmatprep.subr.mxu0 0.0
    %3540 = vmatpush1.msra.mxu0 0.0
    %3541 = vmatprep.subr.mxu0 0.0
    %3542 = vmatpush1.msra.mxu0 0.0
    %3543 = vmatprep.subr.mxu0 0.0
    %3544 = vmatpush1.msra.mxu0 0.0
    %3545 = vmatprep.subr.mxu0 0.0
    %3546 = vmatpush1.msra.mxu0 0.0
    %3547 = vmatprep.subr.mxu0 0.0
    %3548 = vmatpush1.msra.mxu0 0.0
    %3549 = vmatprep.subr.mxu0 0.0
    %3550 = vmatpush1.msra.mxu0 0.0
    %3551 = vmatprep.subr.mxu0 0.0
    %3552 = vmatpush1.msra.mxu0 0.0
    %3553 = vmatprep.subr.mxu0 0.0
    %3554 = vmatpush1.msra.mxu0 0.0
    %3555 = vmatprep.subr.mxu0 0.0
    %3556 = vmatpush1.msra.mxu0 0.0
    %3557 = vmatprep.subr.mxu0 0.0
    %3558 = vmatpush1.msra.mxu0 0.0
    %3559 = vmatprep.subr.mxu0 0.0
    %3560 = vmatpush1.msra.mxu0 0.0
    %3561 = vmatprep.mubr.f32.mxu0 0.0
    %3562 = vmatmul.mubr.f32.gmra.mrb[0].mxu0 %v3495
    %v3563 = vpop.f32.mrb[0].mxu0
    %v3564 = vadd.f32 0.0, %v3563
    %v3565 = vpop.f32.mrb[0].mxu0
    %3566 = vdwg.mxu0
    %v3568 = vsel %vm480, %v3127, 0
    %3570 = vmatprep.subr.mxu0 0.0
    %3571 = vmatpush1.msra.mxu0 %v2436
    %3572 = vmatprep.subr.mxu0 0.0
    %3573 = vmatpush1.msra.mxu0 0.0
    %3574 = vmatprep.subr.mxu0 0.0
    %3575 = vmatpush1.msra.mxu0 0.0
    %3576 = vmatprep.subr.mxu0 0.0
    %3577 = vmatpush1.msra.mxu0 0.0
    %3578 = vmatprep.subr.mxu0 0.0
    %3579 = vmatpush1.msra.mxu0 0.0
    %3580 = vmatprep.subr.mxu0 0.0
    %3581 = vmatpush1.msra.mxu0 0.0
    %3582 = vmatprep.subr.mxu0 0.0
    %3583 = vmatpush1.msra.mxu0 0.0
    %3584 = vmatprep.subr.mxu0 0.0
    %3585 = vmatpush1.msra.mxu0 0.0
    %3586 = vmatprep.subr.mxu0 0.0
    %3587 = vmatpush1.msra.mxu0 0.0
    %3588 = vmatprep.subr.mxu0 0.0
    %3589 = vmatpush1.msra.mxu0 0.0
    %3590 = vmatprep.subr.mxu0 0.0
    %3591 = vmatpush1.msra.mxu0 0.0
    %3592 = vmatprep.subr.mxu0 0.0
    %3593 = vmatpush1.msra.mxu0 0.0
    %3594 = vmatprep.subr.mxu0 0.0
    %3595 = vmatpush1.msra.mxu0 0.0
    %3596 = vmatprep.subr.mxu0 0.0
    %3597 = vmatpush1.msra.mxu0 0.0
    %3598 = vmatprep.subr.mxu0 0.0
    %3599 = vmatpush1.msra.mxu0 0.0
    %3600 = vmatprep.subr.mxu0 0.0
    %3601 = vmatpush1.msra.mxu0 0.0
    %3602 = vmatprep.subr.mxu0 0.0
    %3603 = vmatpush1.msra.mxu0 0.0
    %3604 = vmatprep.subr.mxu0 0.0
    %3605 = vmatpush1.msra.mxu0 0.0
    %3606 = vmatprep.subr.mxu0 0.0
    %3607 = vmatpush1.msra.mxu0 0.0
    %3608 = vmatprep.subr.mxu0 0.0
    %3609 = vmatpush1.msra.mxu0 0.0
    %3610 = vmatprep.subr.mxu0 0.0
    %3611 = vmatpush1.msra.mxu0 0.0
    %3612 = vmatprep.subr.mxu0 0.0
    %3613 = vmatpush1.msra.mxu0 0.0
    %3614 = vmatprep.subr.mxu0 0.0
    %3615 = vmatpush1.msra.mxu0 0.0
    %3616 = vmatprep.subr.mxu0 0.0
    %3617 = vmatpush1.msra.mxu0 0.0
    %3618 = vmatprep.subr.mxu0 0.0
    %3619 = vmatpush1.msra.mxu0 0.0
    %3620 = vmatprep.subr.mxu0 0.0
    %3621 = vmatpush1.msra.mxu0 0.0
    %3622 = vmatprep.subr.mxu0 0.0
    %3623 = vmatpush1.msra.mxu0 0.0
    %3624 = vmatprep.subr.mxu0 0.0
    %3625 = vmatpush1.msra.mxu0 0.0
    %3626 = vmatprep.subr.mxu0 0.0
    %3627 = vmatpush1.msra.mxu0 0.0
    %3628 = vmatprep.subr.mxu0 0.0
    %3629 = vmatpush1.msra.mxu0 0.0
    %3630 = vmatprep.subr.mxu0 0.0
    %3631 = vmatpush1.msra.mxu0 0.0
    %3632 = vmatprep.subr.mxu0 0.0
    %3633 = vmatpush1.msra.mxu0 0.0
    %3634 = vmatprep.mubr.f32.mxu0 0.0
    %3635 = vmatmul.mubr.f32.gmra.mrb[0].mxu0 %v3568
    %v3636 = vpop.f32.mrb[0].mxu0
    %v3637 = vadd.f32 0.0, %v3636
    %v3638 = vpop.f32.mrb[0].mxu0
    %3639 = vdwg.mxu0
    %v3641 = vsel %vm480, %v3128, 0
    %3643 = vmatprep.subr.mxu0 0.0
    %3644 = vmatpush1.msra.mxu0 %v2438
    %3645 = vmatprep.subr.mxu0 0.0
    %3646 = vmatpush1.msra.mxu0 0.0
    %3647 = vmatprep.subr.mxu0 0.0
    %3648 = vmatpush1.msra.mxu0 0.0
    %3649 = vmatprep.subr.mxu0 0.0
    %3650 = vmatpush1.msra.mxu0 0.0
    %3651 = vmatprep.subr.mxu0 0.0
    %3652 = vmatpush1.msra.mxu0 0.0
    %3653 = vmatprep.subr.mxu0 0.0
    %3654 = vmatpush1.msra.mxu0 0.0
    %3655 = vmatprep.subr.mxu0 0.0
    %3656 = vmatpush1.msra.mxu0 0.0
    %3657 = vmatprep.subr.mxu0 0.0
    %3658 = vmatpush1.msra.mxu0 0.0
    %3659 = vmatprep.subr.mxu0 0.0
    %3660 = vmatpush1.msra.mxu0 0.0
    %3661 = vmatprep.subr.mxu0 0.0
    %3662 = vmatpush1.msra.mxu0 0.0
    %3663 = vmatprep.subr.mxu0 0.0
    %3664 = vmatpush1.msra.mxu0 0.0
    %3665 = vmatprep.subr.mxu0 0.0
    %3666 = vmatpush1.msra.mxu0 0.0
    %3667 = vmatprep.subr.mxu0 0.0
    %3668 = vmatpush1.msra.mxu0 0.0
    %3669 = vmatprep.subr.mxu0 0.0
    %3670 = vmatpush1.msra.mxu0 0.0
    %3671 = vmatprep.subr.mxu0 0.0
    %3672 = vmatpush1.msra.mxu0 0.0
    %3673 = vmatprep.subr.mxu0 0.0
    %3674 = vmatpush1.msra.mxu0 0.0
    %3675 = vmatprep.subr.mxu0 0.0
    %3676 = vmatpush1.msra.mxu0 0.0
    %3677 = vmatprep.subr.mxu0 0.0
    %3678 = vmatpush1.msra.mxu0 0.0
    %3679 = vmatprep.subr.mxu0 0.0
    %3680 = vmatpush1.msra.mxu0 0.0
    %3681 = vmatprep.subr.mxu0 0.0
    %3682 = vmatpush1.msra.mxu0 0.0
    %3683 = vmatprep.subr.mxu0 0.0
    %3684 = vmatpush1.msra.mxu0 0.0
    %3685 = vmatprep.subr.mxu0 0.0
    %3686 = vmatpush1.msra.mxu0 0.0
    %3687 = vmatprep.subr.mxu0 0.0
    %3688 = vmatpush1.msra.mxu0 0.0
    %3689 = vmatprep.subr.mxu0 0.0
    %3690 = vmatpush1.msra.mxu0 0.0
    %3691 = vmatprep.subr.mxu0 0.0
    %3692 = vmatpush1.msra.mxu0 0.0
    %3693 = vmatprep.subr.mxu0 0.0
    %3694 = vmatpush1.msra.mxu0 0.0
    %3695 = vmatprep.subr.mxu0 0.0
    %3696 = vmatpush1.msra.mxu0 0.0
    %3697 = vmatprep.subr.mxu0 0.0
    %3698 = vmatpush1.msra.mxu0 0.0
    %3699 = vmatprep.subr.mxu0 0.0
    %3700 = vmatpush1.msra.mxu0 0.0
    %3701 = vmatprep.subr.mxu0 0.0
    %3702 = vmatpush1.msra.mxu0 0.0
    %3703 = vmatprep.subr.mxu0 0.0
    %3704 = vmatpush1.msra.mxu0 0.0
    %3705 = vmatprep.subr.mxu0 0.0
    %3706 = vmatpush1.msra.mxu0 0.0
    %3707 = vmatprep.mubr.f32.mxu0 0.0
    %3708 = vmatmul.mubr.f32.gmra.mrb[0].mxu0 %v3641
    %v3709 = vpop.f32.mrb[0].mxu0
    %v3710 = vadd.f32 0.0, %v3709
    %v3711 = vpop.f32.mrb[0].mxu0
    %3712 = vdwg.mxu0
    %3715 = vrot.lane.b32.xlu0 %v3345, 8
    %v3716 = vpop.permute.xlu0 %3715
    %3717 = vrot.lane.b32.xlu0 %v3418, 8
    %v3718 = vpop.permute.xlu0 %3717
    %3723 = vrot.lane.b32.xlu0 %v3491, 16
    %v3724 = vpop.permute.xlu0 %3723
    %3725 = vrot.lane.b32.xlu0 %v3564, 16
    %v3726 = vpop.permute.xlu0 %3725
    %3731 = vrot.lane.b32.xlu0 %v3637, 24
    %v3732 = vpop.permute.xlu0 %3731
    %3733 = vrot.lane.b32.xlu0 %v3710, 24
    %v3734 = vpop.permute.xlu0 %3733
    %v3737 = vsel %vm480, %v3199, %v3716
    %v3738 = vsel %vm480, %v3272, %v3718
    %v3739 = vsel %vm92, %v3737, %v3724
    %v3740 = vsel %vm92, %v3738, %v3726
    %v3741 = vsel %vm1781, %v3739, %v3732
    %v3742 = vsel %vm1781, %v3740, %v3734
    %s3743 = scalar_lea.vmem %s3, 32
    %v3744 = vld [vmem:[%s3743] sm:$0xff]
    %v3745 = vld [vmem:[%s3743 + $0x8] sm:$0xff]
    %v3746 = vld [vmem:[%s3743 + $0x10] sm:$0xff]
    %v3747 = vld [vmem:[%s3743 + $0x18] sm:$0xff]
    %v3748 = vlaneseq
    %v3749 = vshrl.u32 %v3748, 7
    %v3750 = vsub.s32 3, %v3749
    %v3751 = vrot.slane %v2135, %v3750
    %v3753 = vsel %vm192, %v3741, 0
    %v3756 = vsel %vm192, %v3742, 0
    %3758 = vmatprep.subr.mxu0 0.0
    %3759 = vmatpush1.msra.mxu0 %v3744
    %3760 = vmatprep.subr.mxu0 0.0
    %3761 = vmatpush1.msra.mxu0 %v3745
    %3762 = vmatprep.subr.mxu0 0.0
    %3763 = vmatpush1.msra.mxu0 %v3746
    %3764 = vmatprep.subr.mxu0 0.0
    %3765 = vmatpush1.msra.mxu0 %v3747
    %3766 = vmatprep.subr.mxu0 0.0
    %3767 = vmatpush1.msra.mxu0 0.0
    %3768 = vmatprep.subr.mxu0 0.0
    %3769 = vmatpush1.msra.mxu0 0.0
    %3770 = vmatprep.subr.mxu0 0.0
    %3771 = vmatpush1.msra.mxu0 0.0
    %3772 = vmatprep.subr.mxu0 0.0
    %3773 = vmatpush1.msra.mxu0 0.0
    %3774 = vmatprep.subr.mxu0 0.0
    %3775 = vmatpush1.msra.mxu0 0.0
    %3776 = vmatprep.subr.mxu0 0.0
    %3777 = vmatpush1.msra.mxu0 0.0
    %3778 = vmatprep.subr.mxu0 0.0
    %3779 = vmatpush1.msra.mxu0 0.0
    %3780 = vmatprep.subr.mxu0 0.0
    %3781 = vmatpush1.msra.mxu0 0.0
    %3782 = vmatprep.subr.mxu0 0.0
    %3783 = vmatpush1.msra.mxu0 0.0
    %3784 = vmatprep.subr.mxu0 0.0
    %3785 = vmatpush1.msra.mxu0 0.0
    %3786 = vmatprep.subr.mxu0 0.0
    %3787 = vmatpush1.msra.mxu0 0.0
    %3788 = vmatprep.subr.mxu0 0.0
    %3789 = vmatpush1.msra.mxu0 0.0
    %3790 = vmatprep.subr.mxu0 0.0
    %3791 = vmatpush1.msra.mxu0 0.0
    %3792 = vmatprep.subr.mxu0 0.0
    %3793 = vmatpush1.msra.mxu0 0.0
    %3794 = vmatprep.subr.mxu0 0.0
    %3795 = vmatpush1.msra.mxu0 0.0
    %3796 = vmatprep.subr.mxu0 0.0
    %3797 = vmatpush1.msra.mxu0 0.0
    %3798 = vmatprep.subr.mxu0 0.0
    %3799 = vmatpush1.msra.mxu0 0.0
    %3800 = vmatprep.subr.mxu0 0.0
    %3801 = vmatpush1.msra.mxu0 0.0
    %3802 = vmatprep.subr.mxu0 0.0
    %3803 = vmatpush1.msra.mxu0 0.0
    %3804 = vmatprep.subr.mxu0 0.0
    %3805 = vmatpush1.msra.mxu0 0.0
    %3806 = vmatprep.subr.mxu0 0.0
    %3807 = vmatpush1.msra.mxu0 0.0
    %3808 = vmatprep.subr.mxu0 0.0
    %3809 = vmatpush1.msra.mxu0 0.0
    %3810 = vmatprep.subr.mxu0 0.0
    %3811 = vmatpush1.msra.mxu0 0.0
    %3812 = vmatprep.subr.mxu0 0.0
    %3813 = vmatpush1.msra.mxu0 0.0
    %3814 = vmatprep.subr.mxu0 0.0
    %3815 = vmatpush1.msra.mxu0 0.0
    %3816 = vmatprep.subr.mxu0 0.0
    %3817 = vmatpush1.msra.mxu0 0.0
    %3818 = vmatprep.subr.mxu0 0.0
    %3819 = vmatpush1.msra.mxu0 0.0
    %3820 = vmatprep.subr.mxu0 0.0
    %3821 = vmatpush1.msra.mxu0 0.0
    %3822 = vmatprep.mubr.f32.mxu0 0.0
    %3823 = vmatmul.mubr.f32.gmra.mrb[0].mxu0 %v3753
    %v3824 = vpop.f32.mrb[0].mxu0
    %v3825 = vadd.f32 %v3751, %v3824
    %v3826 = vpop.f32.mrb[0].mxu0
    %3827 = vmatprep.mubr.f32.mxu0 0.0
    %3828 = vmatmul.mubr.f32.gmra.mrb[0].mxu0 %v3756
    %v3829 = vpop.f32.mrb[0].mxu0
    %v3830 = vadd.f32 %v3751, %v3829
    %v3831 = vpop.f32.mrb[0].mxu0
    %3832 = vdwg.mxu0
    %v3833 = vadd.f32 %v2132, %v3825
    %v3834 = vadd.f32 %v2133, %v3830
    %v3835 = vsel %vm192, %v3833, 0.0
    %3836 = vadd.xlane.f32.xlu0 %v3835
    %v3837 = vpop.xlane.xlu0 %3836
    %v3838 = vsel %vm192, %v3834, 0.0
    %3839 = vadd.xlane.f32.xlu0 %v3838
    %v3840 = vpop.xlane.xlu0 %3839
    %v3841 = vmul.f32 %v3837, %v1881
    %v3842 = vmul.f32 %v3840, %v1881
    %v3843 = vsub.f32 %v3833, %v3841
    %v3844 = vsub.f32 %v3834, %v3842
    %v3845 = vmul.f32 %v3843, %v3843
    %v3846 = vmul.f32 %v3844, %v3844
    %v3847 = vsel %vm192, %v3845, 0.0
    %3848 = vadd.xlane.f32.xlu0 %v3847
    %v3849 = vpop.xlane.xlu0 %3848
    %v3850 = vsel %vm192, %v3846, 0.0
    %3851 = vadd.xlane.f32.xlu0 %v3850
    %v3852 = vpop.xlane.xlu0 %3851
    %v3853 = vmul.f32 %v3849, %v1881
    %v3854 = vmul.f32 %v3852, %v1881
    %v3855 = vadd.f32 %v3853, 1e-05
    %v3856 = vadd.f32 %v3854, 1e-05
    %v3857 = vrsqrt.pop %v3855
    %v3858 = vrsqrt.pop %v3856
    %v3859 = vmul.f32 %v3843, %v3857
    %v3860 = vmul.f32 %v3844, %v3858
    %v3861 = vlaneseq
    %v3862 = vshrl.u32 %v3861, 7
    %v3863 = vsub.s32 6, %v3862
    %v3864 = vrot.slane %v2135, %v3863
    %v3865 = vmul.f32 %v3859, %v3864
    %v3866 = vmul.f32 %v3860, %v3864
    %v3867 = vlaneseq
    %v3868 = vshrl.u32 %v3867, 7
    %v3869 = vsub.s32 7, %v3868
    %v3870 = vrot.slane %v2135, %v3869
    %v3871 = vadd.f32 %v3865, %v3870
    %v3872 = vadd.f32 %v3866, %v3870
    %s3873 = scalar_lea.vmem %s4, 32
    %v3874 = vld [vmem:[%s3873] sm:$0xff]
    %v3875 = vld [vmem:[%s3873 + $0x8] sm:$0xff]
    %v3876 = vld [vmem:[%s3873 + $0x10] sm:$0xff]
    %v3877 = vld [vmem:[%s3873 + $0x18] sm:$0xff]
    %v3878 = vlaneseq
    %v3879 = vshrl.u32 %v3878, 7
    %v3880 = vsub.s32 4, %v3879
    %v3881 = vrot.slane %v2135, %v3880
    %v3883 = vsel %vm192, %v3871, 0
    %v3886 = vsel %vm192, %v3872, 0
    %3888 = vmatprep.subr.mxu0 0.0
    %3889 = vmatpush1.msra.mxu0 %v3874
    %3890 = vmatprep.subr.mxu0 0.0
    %3891 = vmatpush1.msra.mxu0 %v3875
    %3892 = vmatprep.subr.mxu0 0.0
    %3893 = vmatpush1.msra.mxu0 %v3876
    %3894 = vmatprep.subr.mxu0 0.0
    %3895 = vmatpush1.msra.mxu0 %v3877
    %3896 = vmatprep.subr.mxu0 0.0
    %3897 = vmatpush1.msra.mxu0 0.0
    %3898 = vmatprep.subr.mxu0 0.0
    %3899 = vmatpush1.msra.mxu0 0.0
    %3900 = vmatprep.subr.mxu0 0.0
    %3901 = vmatpush1.msra.mxu0 0.0
    %3902 = vmatprep.subr.mxu0 0.0
    %3903 = vmatpush1.msra.mxu0 0.0
    %3904 = vmatprep.subr.mxu0 0.0
    %3905 = vmatpush1.msra.mxu0 0.0
    %3906 = vmatprep.subr.mxu0 0.0
    %3907 = vmatpush1.msra.mxu0 0.0
    %3908 = vmatprep.subr.mxu0 0.0
    %3909 = vmatpush1.msra.mxu0 0.0
    %3910 = vmatprep.subr.mxu0 0.0
    %3911 = vmatpush1.msra.mxu0 0.0
    %3912 = vmatprep.subr.mxu0 0.0
    %3913 = vmatpush1.msra.mxu0 0.0
    %3914 = vmatprep.subr.mxu0 0.0
    %3915 = vmatpush1.msra.mxu0 0.0
    %3916 = vmatprep.subr.mxu0 0.0
    %3917 = vmatpush1.msra.mxu0 0.0
    %3918 = vmatprep.subr.mxu0 0.0
    %3919 = vmatpush1.msra.mxu0 0.0
    %3920 = vmatprep.subr.mxu0 0.0
    %3921 = vmatpush1.msra.mxu0 0.0
    %3922 = vmatprep.subr.mxu0 0.0
    %3923 = vmatpush1.msra.mxu0 0.0
    %3924 = vmatprep.subr.mxu0 0.0
    %3925 = vmatpush1.msra.mxu0 0.0
    %3926 = vmatprep.subr.mxu0 0.0
    %3927 = vmatpush1.msra.mxu0 0.0
    %3928 = vmatprep.subr.mxu0 0.0
    %3929 = vmatpush1.msra.mxu0 0.0
    %3930 = vmatprep.subr.mxu0 0.0
    %3931 = vmatpush1.msra.mxu0 0.0
    %3932 = vmatprep.subr.mxu0 0.0
    %3933 = vmatpush1.msra.mxu0 0.0
    %3934 = vmatprep.subr.mxu0 0.0
    %3935 = vmatpush1.msra.mxu0 0.0
    %3936 = vmatprep.subr.mxu0 0.0
    %3937 = vmatpush1.msra.mxu0 0.0
    %3938 = vmatprep.subr.mxu0 0.0
    %3939 = vmatpush1.msra.mxu0 0.0
    %3940 = vmatprep.subr.mxu0 0.0
    %3941 = vmatpush1.msra.mxu0 0.0
    %3942 = vmatprep.subr.mxu0 0.0
    %3943 = vmatpush1.msra.mxu0 0.0
    %3944 = vmatprep.subr.mxu0 0.0
    %3945 = vmatpush1.msra.mxu0 0.0
    %3946 = vmatprep.subr.mxu0 0.0
    %3947 = vmatpush1.msra.mxu0 0.0
    %3948 = vmatprep.subr.mxu0 0.0
    %3949 = vmatpush1.msra.mxu0 0.0
    %3950 = vmatprep.subr.mxu0 0.0
    %3951 = vmatpush1.msra.mxu0 0.0
    %3952 = vmatprep.mubr.f32.mxu0 0.0
    %3953 = vmatmul.mubr.f32.gmra.mrb[0].mxu0 %v3883
    %v3954 = vpop.f32.mrb[0].mxu0
    %v3955 = vadd.f32 %v3881, %v3954
    %v3956 = vpop.f32.mrb[0].mxu0
    %3957 = vmatprep.mubr.f32.mxu0 0.0
    %3958 = vmatmul.mubr.f32.gmra.mrb[0].mxu0 %v3886
    %v3959 = vpop.f32.mrb[0].mxu0
    %v3960 = vadd.f32 %v3881, %v3959
    %v3961 = vpop.f32.mrb[0].mxu0
    %3962 = vdwg.mxu0
    %v3963 = vmax.f32 %v3955, 0.0
    %v3964 = vmax.f32 %v3960, 0.0
    %s3965 = scalar_lea.vmem [#allocation7], 32
    %v3966 = vld [vmem:[%s3965] sm:$0xff]
    %v3967 = vld [vmem:[%s3965 + $0x8] sm:$0xff]
    %v3968 = vld [vmem:[%s3965 + $0x10] sm:$0xff]
    %v3969 = vld [vmem:[%s3965 + $0x18] sm:$0xff]
    %v3970 = vlaneseq
    %v3971 = vshrl.u32 %v3970, 7
    %v3972 = vsub.s32 5, %v3971
    %v3973 = vrot.slane %v2135, %v3972
    %v3975 = vsel %vm192, %v3963, 0
    %v3978 = vsel %vm192, %v3964, 0
    %3980 = vmatprep.subr.mxu0 0.0
    %3981 = vmatpush1.msra.mxu0 %v3966
    %3982 = vmatprep.subr.mxu0 0.0
    %3983 = vmatpush1.msra.mxu0 %v3967
    %3984 = vmatprep.subr.mxu0 0.0
    %3985 = vmatpush1.msra.mxu0 %v3968
    %3986 = vmatprep.subr.mxu0 0.0
    %3987 = vmatpush1.msra.mxu0 %v3969
    %3988 = vmatprep.subr.mxu0 0.0
    %3989 = vmatpush1.msra.mxu0 0.0
    %3990 = vmatprep.subr.mxu0 0.0
    %3991 = vmatpush1.msra.mxu0 0.0
    %3992 = vmatprep.subr.mxu0 0.0
    %3993 = vmatpush1.msra.mxu0 0.0
    %3994 = vmatprep.subr.mxu0 0.0
    %3995 = vmatpush1.msra.mxu0 0.0
    %3996 = vmatprep.subr.mxu0 0.0
    %3997 = vmatpush1.msra.mxu0 0.0
    %3998 = vmatprep.subr.mxu0 0.0
    %3999 = vmatpush1.msra.mxu0 0.0
    %4000 = vmatprep.subr.mxu0 0.0
    %4001 = vmatpush1.msra.mxu0 0.0
    %4002 = vmatprep.subr.mxu0 0.0
    %4003 = vmatpush1.msra.mxu0 0.0
    %4004 = vmatprep.subr.mxu0 0.0
    %4005 = vmatpush1.msra.mxu0 0.0
    %4006 = vmatprep.subr.mxu0 0.0
    %4007 = vmatpush1.msra.mxu0 0.0
    %4008 = vmatprep.subr.mxu0 0.0
    %4009 = vmatpush1.msra.mxu0 0.0
    %4010 = vmatprep.subr.mxu0 0.0
    %4011 = vmatpush1.msra.mxu0 0.0
    %4012 = vmatprep.subr.mxu0 0.0
    %4013 = vmatpush1.msra.mxu0 0.0
    %4014 = vmatprep.subr.mxu0 0.0
    %4015 = vmatpush1.msra.mxu0 0.0
    %4016 = vmatprep.subr.mxu0 0.0
    %4017 = vmatpush1.msra.mxu0 0.0
    %4018 = vmatprep.subr.mxu0 0.0
    %4019 = vmatpush1.msra.mxu0 0.0
    %4020 = vmatprep.subr.mxu0 0.0
    %4021 = vmatpush1.msra.mxu0 0.0
    %4022 = vmatprep.subr.mxu0 0.0
    %4023 = vmatpush1.msra.mxu0 0.0
    %4024 = vmatprep.subr.mxu0 0.0
    %4025 = vmatpush1.msra.mxu0 0.0
    %4026 = vmatprep.subr.mxu0 0.0
    %4027 = vmatpush1.msra.mxu0 0.0
    %4028 = vmatprep.subr.mxu0 0.0
    %4029 = vmatpush1.msra.mxu0 0.0
    %4030 = vmatprep.subr.mxu0 0.0
    %4031 = vmatpush1.msra.mxu0 0.0
    %4032 = vmatprep.subr.mxu0 0.0
    %4033 = vmatpush1.msra.mxu0 0.0
    %4034 = vmatprep.subr.mxu0 0.0
    %4035 = vmatpush1.msra.mxu0 0.0
    %4036 = vmatprep.subr.mxu0 0.0
    %4037 = vmatpush1.msra.mxu0 0.0
    %4038 = vmatprep.subr.mxu0 0.0
    %4039 = vmatpush1.msra.mxu0 0.0
    %4040 = vmatprep.subr.mxu0 0.0
    %4041 = vmatpush1.msra.mxu0 0.0
    %4042 = vmatprep.subr.mxu0 0.0
    %4043 = vmatpush1.msra.mxu0 0.0
    %4044 = vmatprep.mubr.f32.mxu0 0.0
    %4045 = vmatmul.mubr.f32.gmra.mrb[0].mxu0 %v3975
    %v4046 = vpop.f32.mrb[0].mxu0
    %v4047 = vadd.f32 %v3973, %v4046
    %v4048 = vpop.f32.mrb[0].mxu0
    %4049 = vmatprep.mubr.f32.mxu0 0.0
    %4050 = vmatmul.mubr.f32.gmra.mrb[0].mxu0 %v3978
    %v4051 = vpop.f32.mrb[0].mxu0
    %v4052 = vadd.f32 %v3973, %v4051
    %v4053 = vpop.f32.mrb[0].mxu0
    %4054 = vdwg.mxu0
    %v4055 = vadd.f32 %v3871, %v4047
    %v4056 = vadd.f32 %v3872, %v4052
    %v4057 = vsel %vm192, %v4055, 0.0
    %4058 = vadd.xlane.f32.xlu0 %v4057
    %v4059 = vpop.xlane.xlu0 %4058
    %v4060 = vsel %vm192, %v4056, 0.0
    %4061 = vadd.xlane.f32.xlu0 %v4060
    %v4062 = vpop.xlane.xlu0 %4061
    %v4063 = vmul.f32 %v4059, %v1881
    %v4064 = vmul.f32 %v4062, %v1881
    %v4065 = vsub.f32 %v4055, %v4063
    %v4066 = vsub.f32 %v4056, %v4064
    %v4067 = vmul.f32 %v4065, %v4065
    %v4068 = vmul.f32 %v4066, %v4066
    %v4069 = vsel %vm192, %v4067, 0.0
    %4070 = vadd.xlane.f32.xlu0 %v4069
    %v4071 = vpop.xlane.xlu0 %4070
    %v4072 = vsel %vm192, %v4068, 0.0
    %4073 = vadd.xlane.f32.xlu0 %v4072
    %v4074 = vpop.xlane.xlu0 %4073
    %v4075 = vmul.f32 %v4071, %v1881
    %v4076 = vmul.f32 %v4074, %v1881
    %v4077 = vadd.f32 %v4075, 1e-05
    %v4078 = vadd.f32 %v4076, 1e-05
    %v4079 = vrsqrt.pop %v4077
    %v4080 = vrsqrt.pop %v4078
    %v4081 = vmul.f32 %v4065, %v4079
    %v4082 = vmul.f32 %v4066, %v4080
    %v4083 = vlaneseq
    %v4084 = vshrl.u32 %v4083, 7
    %v4085 = vsub.s32 0, %v4084
    %v4086 = vrot.slane %v2136, %v4085
    %v4087 = vmul.f32 %v4081, %v4086
    %v4088 = vmul.f32 %v4082, %v4086
    %v4089 = vlaneseq
    %v4090 = vshrl.u32 %v4089, 7
    %v4091 = vsub.s32 1, %v4090
    %v4092 = vrot.slane %v2136, %v4091
    %v4093 = vadd.f32 %v4087, %v4092
    %v4094 = vadd.f32 %v4088, %v4092
    %v4095 = vld [vmem:[%s7] sm:$0xff]
    %v4096 = vld [vmem:[%s7 + $0x8] sm:$0xff]
    %v4097 = vld [vmem:[%s7 + $0x10] sm:$0xff]
    %v4098 = vld [vmem:[%s7 + $0x18] sm:$0xff]
    %v4099 = vld [vmem:[%s8] sm:$0x1]
    %v4101 = vlaneseq
    %v4102 = vshrl.u32 %v4101, 7
    %v4103 = vsub.s32 0, %v4102
    %v4104 = vrot.slane %v4099, %v4103
    %v4108 = vrot.slane %v4093, 7
    %v4109 = vrot.slane %v4094, 6
    %vm4110 = vcmask 1041409
    %v4111 = vsel %vm4110, %v4109, %v4108
    %v4112 = vsel %vm192, %v4111, 0
    %4114 = vmatprep.subr.mxu0 0.0
    %4115 = vmatpush1.msra.mxu0 %v4095
    %4116 = vmatprep.subr.mxu0 0.0
    %4117 = vmatpush1.msra.mxu0 %v4096
    %4118 = vmatprep.subr.mxu0 0.0
    %4119 = vmatpush1.msra.mxu0 %v4097
    %4120 = vmatprep.subr.mxu0 0.0
    %4121 = vmatpush1.msra.mxu0 %v4098
    %4122 = vmatprep.subr.mxu0 0.0
    %4123 = vmatpush1.msra.mxu0 0.0
    %4124 = vmatprep.subr.mxu0 0.0
    %4125 = vmatpush1.msra.mxu0 0.0
    %4126 = vmatprep.subr.mxu0 0.0
    %4127 = vmatpush1.msra.mxu0 0.0
    %4128 = vmatprep.subr.mxu0 0.0
    %4129 = vmatpush1.msra.mxu0 0.0
    %4130 = vmatprep.subr.mxu0 0.0
    %4131 = vmatpush1.msra.mxu0 0.0
    %4132 = vmatprep.subr.mxu0 0.0
    %4133 = vmatpush1.msra.mxu0 0.0
    %4134 = vmatprep.subr.mxu0 0.0
    %4135 = vmatpush1.msra.mxu0 0.0
    %4136 = vmatprep.subr.mxu0 0.0
    %4137 = vmatpush1.msra.mxu0 0.0
    %4138 = vmatprep.subr.mxu0 0.0
    %4139 = vmatpush1.msra.mxu0 0.0
    %4140 = vmatprep.subr.mxu0 0.0
    %4141 = vmatpush1.msra.mxu0 0.0
    %4142 = vmatprep.subr.mxu0 0.0
    %4143 = vmatpush1.msra.mxu0 0.0
    %4144 = vmatprep.subr.mxu0 0.0
    %4145 = vmatpush1.msra.mxu0 0.0
    %4146 = vmatprep.subr.mxu0 0.0
    %4147 = vmatpush1.msra.mxu0 0.0
    %4148 = vmatprep.subr.mxu0 0.0
    %4149 = vmatpush1.msra.mxu0 0.0
    %4150 = vmatprep.subr.mxu0 0.0
    %4151 = vmatpush1.msra.mxu0 0.0
    %4152 = vmatprep.subr.mxu0 0.0
    %4153 = vmatpush1.msra.mxu0 0.0
    %4154 = vmatprep.subr.mxu0 0.0
    %4155 = vmatpush1.msra.mxu0 0.0
    %4156 = vmatprep.subr.mxu0 0.0
    %4157 = vmatpush1.msra.mxu0 0.0
    %4158 = vmatprep.subr.mxu0 0.0
    %4159 = vmatpush1.msra.mxu0 0.0
    %4160 = vmatprep.subr.mxu0 0.0
    %4161 = vmatpush1.msra.mxu0 0.0
    %4162 = vmatprep.subr.mxu0 0.0
    %4163 = vmatpush1.msra.mxu0 0.0
    %4164 = vmatprep.subr.mxu0 0.0
    %4165 = vmatpush1.msra.mxu0 0.0
    %4166 = vmatprep.subr.mxu0 0.0
    %4167 = vmatpush1.msra.mxu0 0.0
    %4168 = vmatprep.subr.mxu0 0.0
    %4169 = vmatpush1.msra.mxu0 0.0
    %4170 = vmatprep.subr.mxu0 0.0
    %4171 = vmatpush1.msra.mxu0 0.0
    %4172 = vmatprep.subr.mxu0 0.0
    %4173 = vmatpush1.msra.mxu0 0.0
    %4174 = vmatprep.subr.mxu0 0.0
    %4175 = vmatpush1.msra.mxu0 0.0
    %4176 = vmatprep.subr.mxu0 0.0
    %4177 = vmatpush1.msra.mxu0 0.0
    %4178 = vmatprep.mubr.f32.mxu0 0.0
    %4179 = vmatmul.mubr.f32.gmra.mrb[0].mxu0 %v4112
    %v4180 = vpop.f32.mrb[0].mxu0
    %v4181 = vadd.f32 %v4104, %v4180
    %v4182 = vpop.f32.mrb[0].mxu0
    %4183 = vdwg.mxu0
    %vm4184 = vcmask 123904
    %v4185 = vsel %vm4184, %v4181, -inf
    %4186 = vmax.xlane.f32.xlu0 %v4185
    %v4187 = vpop.xlane.xlu0 %4186
    %v4188 = vsub.f32 %v4181, %v4187
    %v4189 = vmul.f32 %v4188, 1.442695
    %v4190 = vpow.pop %v4189
    %v4191 = vsel %vm4184, %v4190, 0.0
    %4192 = vadd.xlane.f32.xlu0 %v4191
    %v4193 = vpop.xlane.xlu0 %4192
    %v4194 = vlog2.pop %v4193
    %v4195 = vmul.f32 %v4194, 0.6931472
    %v4196 = vadd.f32 %v4187, %v4195
    %v4197 = vsub.f32 %v4181, %v4196
    %4198 = vst.msk [vmem:[#allocation8] sm:$0x3] %vm4184, %v4197
    // Predicated region
    $region50: #{tpu_custom_call.1} parent=1 // pred_check
      _
    $region51: #{tpu_custom_call.1} parent=1 // pred_check_branch
      %4200 = sbr.rel (0) target = $region53
    $region52: #{tpu_custom_call.1} parent=1 // pred_region
      %s4202 = ssub.s32 32, 32
      %4203 = vsyncadd [#allocation4], %s4202
      %s4205 = sshll.u32 [#allocation8], 4
      %s4206 = int_to_ptr.vmem [resolvable:$true] %s4205
      %4208 = dma.vmem_to_hbm [thread:$0]  %s4206, 32, %s9, [#allocation4]
    $region53: #{tpu_custom_call.1} parent=1 // pred_fallthru
      _
    // Predicated region
    $region54: #{tpu_custom_call.1} parent=1 // pred_check
      _
    $region55: #{tpu_custom_call.1} parent=1 // pred_check_branch
      %4210 = sbr.rel (0) target = $region57
    $region56: #{tpu_custom_call.1} parent=1 // pred_region
      %4211 = dma.done [#allocation4], 32
    $region57: #{tpu_custom_call.1} parent=1 // pred_fallthru
      _
    %4212 = vsyncpa [#allocation3], 1
    %4213 = vsyncpa [#allocation6], 1
    %4214 = vsyncpa [#allocation4], 1

</llo_original>
